<compile_context>
chip_gen: v7x
topology: tpu7x:2x2x1
jax: 0.10.0
libtpu: 0.0.40
codegen_flags: <defaults>
</compile_context>

<pallas_src>
import jax
import jax.numpy as jnp
from jax.experimental import pallas as pl
from jax.experimental.pallas import tpu as pltpu

EPS = 1e-5


def gnap_stage1_kernel(x_ref, prm_ref, p_ref, s_ref):
    # x_ref:   (B, C, HW) activation block (C on sublanes, HW on lanes), native dtype.
    # prm_ref: (8, C)     packed BN1 constants, lane-dense, resident across the grid.
    # p_ref:   (B, C)     per-sample weighted pool WITHOUT the global norm-mean factor.
    # s_ref:   (B, 1)     per-sample sum of per-pixel channel norms.
    B = x_ref.shape[0]
    C = x_ref.shape[1]

    x = x_ref[...].astype(jnp.float32)     # DMA at native width; upcast in registers
    prm = prm_ref[...]                     # (8, C) f32
    a_row    = prm[0:1, :]                 # 1 / (rv1 + eps)
    am_row   = prm[1:2, :]                 # rm1 / (rv1 + eps)
    inv1_row = prm[2:3, :]                 # rsqrt(rv1 + eps)
    m1_row   = prm[3:4, :]                 # rm1
    k0       = prm[4:5, 0:1]               # sum_c rm1^2/(rv1+eps), host-precomputed

    hp = jax.lax.Precision.HIGHEST

    # sumsq[b,p] = sum_c ((x[b,c,p] - rm1[c]) * inv1[c])^2 = t1 - 2*t2 + k0
    # Batched skinny (1,C)@(C,HW) MXU contractions keep all per-channel constants
    # lane-dense (no sublane-layout constants, no NHWC relayout).
    a_b  = jnp.broadcast_to(a_row[None], (B, 1, C))    # tiny, once per grid step
    am_b = jnp.broadcast_to(am_row[None], (B, 1, C))
    xx = x * x
    # HIGHEST only on t1 (cancellation-prone combination); default precision elsewhere.
    t1 = jnp.einsum('bkc,bcp->bkp', a_b, xx, precision=hp,
                    preferred_element_type=jnp.float32)            # (B, 1, HW)
    t2 = jnp.einsum('bkc,bcp->bkp', am_b, x,
                    preferred_element_type=jnp.float32)            # (B, 1, HW)
    sumsq = t1 - 2.0 * t2 + k0                                     # (B, 1, HW)

    inv_norm = jax.lax.rsqrt(sumsq)        # EUP; matches the reference's divide-by-norm
    norms = sumsq * inv_norm               # == sqrt(sumsq), no extra sqrt
    s_ref[...] = jnp.sum(norms, axis=2).astype(s_ref.dtype)        # (B, 1)

    # P[b,c] = sum_p ((x - rm1) * inv1)[b,c,p] * inv_norm[b,p]
    #        = inv1[c] * (sum_p x[b,c,p]*inv_norm[b,p] - rm1[c]*sum_p inv_norm[b,p])
    # Batched contraction over HW on the MXU, output (B, C) lane-dense.
    r = jnp.einsum('bqp,bcp->bqc', inv_norm, x,
                   preferred_element_type=jnp.float32)             # (B, 1, C)
    wsum = jnp.sum(inv_norm, axis=2, keepdims=True)                # (B, 1, 1)
    p_row = inv1_row * (r - m1_row * wsum)                         # (B, 1, C)
    p_ref[...] = p_row[:, 0, :].astype(p_ref.dtype)                # (B, C)


def gnap_forward(x_nchw, rm1, rv1, rm2, rv2, eps=EPS, block_batch=8):
    """x_nchw: (N, 512, H, W). BN buffers: (512,) running stats. Returns (N, 512) f32."""
    N, C, H, W = x_nchw.shape
    assert C == 512
    HW = H * W
    f32 = jnp.float32

    # ---- Tiling: B samples per grid step. ----
    if N <= block_batch:
        B = N                                   # single step, block == full batch
    else:
        B = max(8, (block_batch // 8) * 8)      # multiple of 8 -> aligned multi-step stores
    Np = pl.cdiv(N, B) * B

    # Free reshape (layout-preserving view): activations touch HBM exactly once.
    x = x_nchw.reshape(N, C, HW)
    if Np != N:
        # Pad trailing samples; their partial results are sliced off before any reduction.
        x = jnp.pad(x, ((0, Np - N), (0, 0), (0, 0)))

    # Fused BN1 constants (model-load-time precompute) packed into one tiny DMA.
    a = 1.0 / (rv1.astype(f32) + eps)           # 1 / (rv1 + eps)
    m1 = rm1.astype(f32)
    k0 = jnp.sum(a * m1 * m1)                   # hoisted constant reduction (review item 3)
    prm = jnp.stack([a, a * m1, jnp.sqrt(a), m1, jnp.broadcast_to(k0, (C,))], axis=0)
    prm = jnp.pad(prm, ((0, 3), (0, 0)))        # (8, C): sublane-aligned

    grid_spec = pltpu.PrefetchScalarGridSpec(
        num_scalar_prefetch=0,
        grid=(Np // B,),
        in_specs=[
            pl.BlockSpec((B, C, HW), lambda i: (i, 0, 0)),   # B samples per step
            pl.BlockSpec((8, C), lambda i: (0, 0)),          # constants, resident
        ],
        out_specs=[
            pl.BlockSpec((B, C), lambda i: (i, 0)),          # partial pools
            pl.BlockSpec((B, 1), lambda i: (i, 0)),          # per-sample norm sums
        ],
    )
    p_part, s_part = pl.pallas_call(
        gnap_stage1_kernel,
        out_shape=(jax.ShapeDtypeStruct((Np, C), f32),
                   jax.ShapeDtypeStruct((Np, 1), f32)),
        grid_spec=grid_spec,
        compiler_params=pltpu.CompilerParams(
            dimension_semantics=("parallel",)),              # batch steps fully independent
    )(x, prm)

    # ---- Stage 2: global norm-mean rescale + BN1d. Trivial (N,C) elementwise; done in
    # plain XLA (per review) so the Pallas grid axis can stay "parallel".
    p_valid = p_part[:N]
    norm_mean = jnp.sum(s_part[:N]) / (N * HW)               # mean of per-pixel norms
    pooled = p_valid * (norm_mean / HW)                      # avg-pool 1/HW folded in
    inv2 = jax.lax.rsqrt(rv2.astype(f32) + eps)
    return (pooled - rm2.astype(f32)[None, :]) * inv2[None, :]


def gnap_reference(x_nchw, rm1, rv1, rm2, rv2, eps=EPS):
    """Pure-JAX reference mirroring the PyTorch forward (eval-mode BN)."""
    x = (x_nchw - rm1[None, :, None, None]) / jnp.sqrt(rv1[None, :, None, None] + eps)
    x_norm = jnp.sqrt(jnp.sum(x * x, axis=1, keepdims=True))    # (N,1,H,W)
    x_norm_mean = jnp.mean(x_norm)
    x = x * (x_norm_mean / x_norm)
    pooled = jnp.mean(x, axis=(2, 3))                            # (N, C)
    return (pooled - rm2[None, :]) / jnp.sqrt(rv2[None, :] + eps)


if __name__ == "__main__":
    C = 512   # embedding_size == 512 required by the module

    key = jax.random.PRNGKey(0)
    k1, k2, k3, k4, kx1, kx2 = jax.random.split(key, 6)

    # Non-trivial (deterministic) eval-mode BN running stats.
    rm1 = 0.1 * jax.random.normal(k1, (C,), dtype=jnp.float32)
    rv1 = jax.random.uniform(k2, (C,), dtype=jnp.float32, minval=0.5, maxval=1.5)
    rm2 = 0.05 * jax.random.normal(k3, (C,), dtype=jnp.float32)
    rv2 = jax.random.uniform(k4, (C,), dtype=jnp.float32, minval=0.5, maxval=1.5)

    gnap = jax.jit(gnap_forward)

    # Test 1: small batch, single grid step (B == N).
    N1, H1, W1 = 2, 8, 8
    x1 = jax.random.normal(kx1, (N1, C, H1, W1), dtype=jnp.float32)
    out1 = jax.block_until_ready(gnap(x1, rm1, rv1, rm2, rv2))
    ref1 = gnap_reference(x1, rm1, rv1, rm2, rv2)
    assert out1.shape == (N1, C)
    assert jnp.allclose(out1, ref1, atol=5e-3, rtol=5e-3), \
        float(jnp.max(jnp.abs(out1 - ref1)))

    # Test 2: multi-step grid with batch padding (N=12 -> B=8, two steps) at the
    # real-model 7x7 spatial size.
    N2, H2, W2 = 12, 7, 7
    x2 = jax.random.normal(kx2, (N2, C, H2, W2), dtype=jnp.float32)
    out2 = jax.block_until_ready(gnap(x2, rm1, rv1, rm2, rv2))
    ref2 = gnap_reference(x2, rm1, rv1, rm2, rv2)
    assert out2.shape == (N2, C)
    assert jnp.allclose(out2, ref2, atol=5e-3, rtol=5e-3), \
        float(jnp.max(jnp.abs(out2 - ref2)))

    print("KERNEL_OK")
</pallas_src>

<mosaic_0001>
module attributes {stable_mosaic.version = 11 : i64} {
  func.func @gnap_stage1_kernel(%arg0: i32, %arg1: memref<2x512x64xf32, #tpu.memory_space<vmem>>, %arg2: memref<8x512xf32, #tpu.memory_space<vmem>>, %arg3: memref<2x512xf32, #tpu.memory_space<vmem>>, %arg4: memref<2x1xf32, #tpu.memory_space<vmem>>) attributes {dimension_semantics = [#tpu.dimension_semantics<parallel>], iteration_bounds = array<i64: 1>, scalar_prefetch = 0 : i64, scratch_operands = 0 : i64, tpu.core_type = #tpu.core_type<tc>, window_params = [{transform_indices = @transform_0, window_bounds = array<i64: 2, 512, 64>}, {pipeline_mode = #tpu.pipeline_mode<synchronous>, transform_indices = @transform_1, window_bounds = array<i64: 8, 512>}, {transform_indices = @transform_2, window_bounds = array<i64: 2, 512>}, {transform_indices = @transform_3, window_bounds = array<i64: 2, 1>}]} {
    %c0 = arith.constant 0 : index
    %c0_0 = arith.constant 0 : index
    %c0_1 = arith.constant 0 : index
    %0 = vector.load %arg1[%c0, %c0_0, %c0_1] : memref<2x512x64xf32, #tpu.memory_space<vmem>>, vector<2x512x64xf32>
    %c0_2 = arith.constant 0 : index
    %c0_3 = arith.constant 0 : index
    %1 = vector.load %arg2[%c0_2, %c0_3] : memref<8x512xf32, #tpu.memory_space<vmem>>, vector<8x512xf32>
    %2 = vector.extract_strided_slice %1 {offsets = [0, 0], sizes = [1, 512], strides = [1, 1]} : vector<8x512xf32> to vector<1x512xf32>
    %3 = vector.extract_strided_slice %1 {offsets = [1, 0], sizes = [1, 512], strides = [1, 1]} : vector<8x512xf32> to vector<1x512xf32>
    %4 = vector.extract_strided_slice %1 {offsets = [2, 0], sizes = [1, 512], strides = [1, 1]} : vector<8x512xf32> to vector<1x512xf32>
    %5 = vector.extract_strided_slice %1 {offsets = [3, 0], sizes = [1, 512], strides = [1, 1]} : vector<8x512xf32> to vector<1x512xf32>
    %6 = vector.extract_strided_slice %1 {offsets = [4, 0], sizes = [1, 1], strides = [1, 1]} : vector<8x512xf32> to vector<1x1xf32>
    %7 = vector.shape_cast %2 : vector<1x512xf32> to vector<1x1x512xf32>
    %8 = vector.shape_cast %7 : vector<1x1x512xf32> to vector<1x1x512xf32>
    %9 = vector.broadcast %8 : vector<1x1x512xf32> to vector<2x1x512xf32>
    %10 = vector.shape_cast %3 : vector<1x512xf32> to vector<1x1x512xf32>
    %11 = vector.shape_cast %10 : vector<1x1x512xf32> to vector<1x1x512xf32>
    %12 = vector.broadcast %11 : vector<1x1x512xf32> to vector<2x1x512xf32>
    %13 = arith.mulf %0, %0 : vector<2x512x64xf32>
    "tpu.trace_start"() <{level = 10 : i32, message = "bkc,bcp->bkp"}> : () -> ()
    %cst = arith.constant dense<0.000000e+00> : vector<2x1x64xf32>
    %14 = tpu.matmul %9, %13, %cst {dimension_numbers = #tpu.dot_dimension_numbers<[2], [1], [1], [2], [0, 0, 0, 1, 1, 2], [0], [0]>, precision = #tpu.contract_precision<fp32>} : vector<2x1x512xf32>, vector<2x512x64xf32>, vector<2x1x64xf32> -> vector<2x1x64xf32>
    %cst_4 = arith.constant dense<0.000000e+00> : vector<2x1x64xf32>
    %15 = tpu.matmul %12, %0, %cst_4 {dimension_numbers = #tpu.dot_dimension_numbers<[2], [1], [1], [2], [0, 0, 0, 1, 1, 2], [0], [0]>} : vector<2x1x512xf32>, vector<2x512x64xf32>, vector<2x1x64xf32> -> vector<2x1x64xf32>
    "tpu.trace_stop"() : () -> ()
    %cst_5 = arith.constant 2.000000e+00 : f32
    %16 = vector.broadcast %cst_5 : f32 to vector<2x1x64xf32>
    %17 = arith.mulf %16, %15 : vector<2x1x64xf32>
    %18 = arith.subf %14, %17 : vector<2x1x64xf32>
    %19 = vector.shape_cast %6 : vector<1x1xf32> to vector<1x1x1xf32>
    %20 = vector.broadcast %19 : vector<1x1x1xf32> to vector<2x1x64xf32>
    %21 = arith.addf %18, %20 : vector<2x1x64xf32>
    %22 = math.rsqrt %21 : vector<2x1x64xf32>
    %23 = arith.mulf %21, %22 : vector<2x1x64xf32>
    %cst_6 = arith.constant dense<0.000000e+00> : vector<2x1xf32>
    %24 = vector.multi_reduction <add>, %23, %cst_6 [2] : vector<2x1x64xf32> to vector<2x1xf32>
    %c0_7 = arith.constant 0 : index
    %c0_8 = arith.constant 0 : index
    %25 = vector.load %arg4[%c0_7, %c0_8] : memref<2x1xf32, #tpu.memory_space<vmem>>, vector<2x1xf32>
    tpu.vector_store %arg4[%c0_7, %c0_8], %24 {strides = array<i32>} : memref<2x1xf32, #tpu.memory_space<vmem>>, vector<2x1xf32>,
    "tpu.trace_start"() <{level = 10 : i32, message = "bqp,bcp->bqc"}> : () -> ()
    %cst_9 = arith.constant dense<0.000000e+00> : vector<2x1x512xf32>
    %26 = tpu.matmul %22, %0, %cst_9 {dimension_numbers = #tpu.dot_dimension_numbers<[2], [2], [1], [1], [0, 0, 0, 1, 1, 1], [0], [0]>} : vector<2x1x64xf32>, vector<2x512x64xf32>, vector<2x1x512xf32> -> vector<2x1x512xf32>
    "tpu.trace_stop"() : () -> ()
    %cst_10 = arith.constant dense<0.000000e+00> : vector<2x1xf32>
    %27 = vector.multi_reduction <add>, %22, %cst_10 [2] : vector<2x1x64xf32> to vector<2x1xf32>
    %28 = vector.shape_cast %27 : vector<2x1xf32> to vector<2x1x1xf32>
    %29 = vector.shape_cast %5 : vector<1x512xf32> to vector<1x1x512xf32>
    %30 = vector.broadcast %29 : vector<1x1x512xf32> to vector<2x1x512xf32>
    %31 = vector.broadcast %28 : vector<2x1x1xf32> to vector<2x1x512xf32>
    %32 = arith.mulf %30, %31 : vector<2x1x512xf32>
    %33 = arith.subf %26, %32 : vector<2x1x512xf32>
    %34 = vector.shape_cast %4 : vector<1x512xf32> to vector<1x1x512xf32>
    %35 = vector.broadcast %34 : vector<1x1x512xf32> to vector<2x1x512xf32>
    %36 = arith.mulf %35, %33 : vector<2x1x512xf32>
    %37 = vector.shape_cast %36 : vector<2x1x512xf32> to vector<2x512xf32>
    %c0_11 = arith.constant 0 : index
    %c0_12 = arith.constant 0 : index
    %38 = vector.load %arg3[%c0_11, %c0_12] : memref<2x512xf32, #tpu.memory_space<vmem>>, vector<2x512xf32>
    tpu.vector_store %arg3[%c0_11, %c0_12], %37 {strides = array<i32>} : memref<2x512xf32, #tpu.memory_space<vmem>>, vector<2x512xf32>,
    return
  }
  func.func @transform_0(%arg0: i32) -> (i32, i32, i32) {
    %c0_i32 = arith.constant 0 : i32
    %c0_i32_0 = arith.constant 0 : i32
    %c0_i32_1 = arith.constant 0 : i32
    return %arg0, %c0_i32, %c0_i32_0 : i32, i32, i32
  }
  func.func @transform_1(%arg0: i32) -> (i32, i32) {
    %c0_i32 = arith.constant 0 : i32
    %c0_i32_0 = arith.constant 0 : i32
    %c0_i32_1 = arith.constant 0 : i32
    return %c0_i32, %c0_i32_0 : i32, i32
  }
  func.func @transform_2(%arg0: i32) -> (i32, i32) {
    %c0_i32 = arith.constant 0 : i32
    %c0_i32_0 = arith.constant 0 : i32
    return %arg0, %c0_i32 : i32, i32
  }
  func.func @transform_3(%arg0: i32) -> (i32, i32) {
    %c0_i32 = arith.constant 0 : i32
    %c0_i32_0 = arith.constant 0 : i32
    return %arg0, %c0_i32 : i32, i32
  }
}

</mosaic_0001>

<llo_original>
// kernel: gnap_forward.1
$region0: #{gnap_forward.1}
  #allocation0 [shape = 'u32[]', space=smem, size = 0x4, offset = 0x4, fixed_abs, tag = 'smem constant byte address 0x4 - core index']
  #allocation1 [shape = 'u32[144,128]{1,0:T(1,128)}', space=vmem, size = 0x12000, scoped, tag = 'internal scratch']
  %s0 = inlined_call_operand.vmem [shape: f32[2,512,64], index: 0, kind: input, shape index: {}]
  %s1 = inlined_call_operand.vmem [shape: f32[8,512], index: 1, kind: input, shape index: {}]
  %s2 = inlined_call_operand.vmem [shape: f32[2,512], index: 2, kind: output, shape index: {0}]
  %s3 = inlined_call_operand.vmem [shape: f32[2,1], index: 3, kind: output, shape index: {1}]
  %4 = xla_tuple %s2, %s3
  %s5 = sld [smem:[#allocation0]]
  $region26: #{gnap_forward.1} parent=0
    _
  %s7 = ssub.s32 1, %s5
  %s8 = scalar_select 0, %s7, %s5
  // Predicated region
  $region2: #{gnap_forward.1} parent=0 // pred_check
    _
  $region3: #{gnap_forward.1} parent=0 // pred_check_branch
    %10 = sbr.rel (0) target = $region5
  $region4: #{gnap_forward.1} parent=0 // pred_region
    _
  $region5: #{gnap_forward.1} parent=0 // pred_fallthru
    _
  // Predicated region
  $region6: #{gnap_forward.1} parent=0 // pred_check
    _
  $region7: #{gnap_forward.1} parent=0 // pred_check_branch
    %12 = sbr.rel (0) target = $region9
  $region8: #{gnap_forward.1} parent=0 // pred_region
    _
  $region9: #{gnap_forward.1} parent=0 // pred_fallthru
    _
  %v13 = vld [vmem:[%s0] sm:$0xff]
  %v14 = vld [vmem:[%s0 + $0x8] sm:$0xff]
  %v15 = vld [vmem:[%s0 + $0x10] sm:$0xff]
  %v16 = vld [vmem:[%s0 + $0x18] sm:$0xff]
  %v17 = vld [vmem:[%s0 + $0x20] sm:$0xff]
  %v18 = vld [vmem:[%s0 + $0x28] sm:$0xff]
  %v19 = vld [vmem:[%s0 + $0x30] sm:$0xff]
  %v20 = vld [vmem:[%s0 + $0x38] sm:$0xff]
  %v21 = vld [vmem:[%s0 + $0x40] sm:$0xff]
  %v22 = vld [vmem:[%s0 + $0x48] sm:$0xff]
  %v23 = vld [vmem:[%s0 + $0x50] sm:$0xff]
  %v24 = vld [vmem:[%s0 + $0x58] sm:$0xff]
  %v25 = vld [vmem:[%s0 + $0x60] sm:$0xff]
  %v26 = vld [vmem:[%s0 + $0x68] sm:$0xff]
  %v27 = vld [vmem:[%s0 + $0x70] sm:$0xff]
  %v28 = vld [vmem:[%s0 + $0x78] sm:$0xff]
  %v29 = vld [vmem:[%s0 + $0x80] sm:$0xff]
  %v30 = vld [vmem:[%s0 + $0x88] sm:$0xff]
  %v31 = vld [vmem:[%s0 + $0x90] sm:$0xff]
  %v32 = vld [vmem:[%s0 + $0x98] sm:$0xff]
  %v33 = vld [vmem:[%s0 + $0xa0] sm:$0xff]
  %v34 = vld [vmem:[%s0 + $0xa8] sm:$0xff]
  %v35 = vld [vmem:[%s0 + $0xb0] sm:$0xff]
  %v36 = vld [vmem:[%s0 + $0xb8] sm:$0xff]
  %v37 = vld [vmem:[%s0 + $0xc0] sm:$0xff]
  %v38 = vld [vmem:[%s0 + $0xc8] sm:$0xff]
  %v39 = vld [vmem:[%s0 + $0xd0] sm:$0xff]
  %v40 = vld [vmem:[%s0 + $0xd8] sm:$0xff]
  %v41 = vld [vmem:[%s0 + $0xe0] sm:$0xff]
  %v42 = vld [vmem:[%s0 + $0xe8] sm:$0xff]
  %v43 = vld [vmem:[%s0 + $0xf0] sm:$0xff]
  %v44 = vld [vmem:[%s0 + $0xf8] sm:$0xff]
  %v45 = vld [vmem:[%s0 + $0x100] sm:$0xff]
  %v46 = vld [vmem:[%s0 + $0x108] sm:$0xff]
  %v47 = vld [vmem:[%s0 + $0x110] sm:$0xff]
  %v48 = vld [vmem:[%s0 + $0x118] sm:$0xff]
  %v49 = vld [vmem:[%s0 + $0x120] sm:$0xff]
  %v50 = vld [vmem:[%s0 + $0x128] sm:$0xff]
  %v51 = vld [vmem:[%s0 + $0x130] sm:$0xff]
  %v52 = vld [vmem:[%s0 + $0x138] sm:$0xff]
  %v53 = vld [vmem:[%s0 + $0x140] sm:$0xff]
  %v54 = vld [vmem:[%s0 + $0x148] sm:$0xff]
  %v55 = vld [vmem:[%s0 + $0x150] sm:$0xff]
  %v56 = vld [vmem:[%s0 + $0x158] sm:$0xff]
  %v57 = vld [vmem:[%s0 + $0x160] sm:$0xff]
  %v58 = vld [vmem:[%s0 + $0x168] sm:$0xff]
  %v59 = vld [vmem:[%s0 + $0x170] sm:$0xff]
  %v60 = vld [vmem:[%s0 + $0x178] sm:$0xff]
  %v61 = vld [vmem:[%s0 + $0x180] sm:$0xff]
  %v62 = vld [vmem:[%s0 + $0x188] sm:$0xff]
  %v63 = vld [vmem:[%s0 + $0x190] sm:$0xff]
  %v64 = vld [vmem:[%s0 + $0x198] sm:$0xff]
  %v65 = vld [vmem:[%s0 + $0x1a0] sm:$0xff]
  %v66 = vld [vmem:[%s0 + $0x1a8] sm:$0xff]
  %v67 = vld [vmem:[%s0 + $0x1b0] sm:$0xff]
  %v68 = vld [vmem:[%s0 + $0x1b8] sm:$0xff]
  %v69 = vld [vmem:[%s0 + $0x1c0] sm:$0xff]
  %v70 = vld [vmem:[%s0 + $0x1c8] sm:$0xff]
  %v71 = vld [vmem:[%s0 + $0x1d0] sm:$0xff]
  %v72 = vld [vmem:[%s0 + $0x1d8] sm:$0xff]
  %v73 = vld [vmem:[%s0 + $0x1e0] sm:$0xff]
  %v74 = vld [vmem:[%s0 + $0x1e8] sm:$0xff]
  %v75 = vld [vmem:[%s0 + $0x1f0] sm:$0xff]
  %v76 = vld [vmem:[%s0 + $0x1f8] sm:$0xff]
  %v77 = vld [vmem:[%s0 + $0x200] sm:$0xff]
  %v78 = vld [vmem:[%s0 + $0x208] sm:$0xff]
  %v79 = vld [vmem:[%s0 + $0x210] sm:$0xff]
  %v80 = vld [vmem:[%s0 + $0x218] sm:$0xff]
  %v81 = vld [vmem:[%s0 + $0x220] sm:$0xff]
  %v82 = vld [vmem:[%s0 + $0x228] sm:$0xff]
  %v83 = vld [vmem:[%s0 + $0x230] sm:$0xff]
  %v84 = vld [vmem:[%s0 + $0x238] sm:$0xff]
  %v85 = vld [vmem:[%s0 + $0x240] sm:$0xff]
  %v86 = vld [vmem:[%s0 + $0x248] sm:$0xff]
  %v87 = vld [vmem:[%s0 + $0x250] sm:$0xff]
  %v88 = vld [vmem:[%s0 + $0x258] sm:$0xff]
  %v89 = vld [vmem:[%s0 + $0x260] sm:$0xff]
  %v90 = vld [vmem:[%s0 + $0x268] sm:$0xff]
  %v91 = vld [vmem:[%s0 + $0x270] sm:$0xff]
  %v92 = vld [vmem:[%s0 + $0x278] sm:$0xff]
  %v93 = vld [vmem:[%s0 + $0x280] sm:$0xff]
  %v94 = vld [vmem:[%s0 + $0x288] sm:$0xff]
  %v95 = vld [vmem:[%s0 + $0x290] sm:$0xff]
  %v96 = vld [vmem:[%s0 + $0x298] sm:$0xff]
  %v97 = vld [vmem:[%s0 + $0x2a0] sm:$0xff]
  %v98 = vld [vmem:[%s0 + $0x2a8] sm:$0xff]
  %v99 = vld [vmem:[%s0 + $0x2b0] sm:$0xff]
  %v100 = vld [vmem:[%s0 + $0x2b8] sm:$0xff]
  %v101 = vld [vmem:[%s0 + $0x2c0] sm:$0xff]
  %v102 = vld [vmem:[%s0 + $0x2c8] sm:$0xff]
  %v103 = vld [vmem:[%s0 + $0x2d0] sm:$0xff]
  %v104 = vld [vmem:[%s0 + $0x2d8] sm:$0xff]
  %v105 = vld [vmem:[%s0 + $0x2e0] sm:$0xff]
  %v106 = vld [vmem:[%s0 + $0x2e8] sm:$0xff]
  %v107 = vld [vmem:[%s0 + $0x2f0] sm:$0xff]
  %v108 = vld [vmem:[%s0 + $0x2f8] sm:$0xff]
  %v109 = vld [vmem:[%s0 + $0x300] sm:$0xff]
  %v110 = vld [vmem:[%s0 + $0x308] sm:$0xff]
  %v111 = vld [vmem:[%s0 + $0x310] sm:$0xff]
  %v112 = vld [vmem:[%s0 + $0x318] sm:$0xff]
  %v113 = vld [vmem:[%s0 + $0x320] sm:$0xff]
  %v114 = vld [vmem:[%s0 + $0x328] sm:$0xff]
  %v115 = vld [vmem:[%s0 + $0x330] sm:$0xff]
  %v116 = vld [vmem:[%s0 + $0x338] sm:$0xff]
  %v117 = vld [vmem:[%s0 + $0x340] sm:$0xff]
  %v118 = vld [vmem:[%s0 + $0x348] sm:$0xff]
  %v119 = vld [vmem:[%s0 + $0x350] sm:$0xff]
  %v120 = vld [vmem:[%s0 + $0x358] sm:$0xff]
  %v121 = vld [vmem:[%s0 + $0x360] sm:$0xff]
  %v122 = vld [vmem:[%s0 + $0x368] sm:$0xff]
  %v123 = vld [vmem:[%s0 + $0x370] sm:$0xff]
  %v124 = vld [vmem:[%s0 + $0x378] sm:$0xff]
  %v125 = vld [vmem:[%s0 + $0x380] sm:$0xff]
  %v126 = vld [vmem:[%s0 + $0x388] sm:$0xff]
  %v127 = vld [vmem:[%s0 + $0x390] sm:$0xff]
  %v128 = vld [vmem:[%s0 + $0x398] sm:$0xff]
  %v129 = vld [vmem:[%s0 + $0x3a0] sm:$0xff]
  %v130 = vld [vmem:[%s0 + $0x3a8] sm:$0xff]
  %v131 = vld [vmem:[%s0 + $0x3b0] sm:$0xff]
  %v132 = vld [vmem:[%s0 + $0x3b8] sm:$0xff]
  %v133 = vld [vmem:[%s0 + $0x3c0] sm:$0xff]
  %v134 = vld [vmem:[%s0 + $0x3c8] sm:$0xff]
  %v135 = vld [vmem:[%s0 + $0x3d0] sm:$0xff]
  %v136 = vld [vmem:[%s0 + $0x3d8] sm:$0xff]
  %v137 = vld [vmem:[%s0 + $0x3e0] sm:$0xff]
  %v138 = vld [vmem:[%s0 + $0x3e8] sm:$0xff]
  %v139 = vld [vmem:[%s0 + $0x3f0] sm:$0xff]
  %v140 = vld [vmem:[%s0 + $0x3f8] sm:$0xff]
  %v141 = vld [vmem:[%s1] sm:$0xff]
  %v142 = vld [vmem:[%s1 + $0x8] sm:$0xff]
  %v143 = vld [vmem:[%s1 + $0x10] sm:$0xff]
  %v144 = vld [vmem:[%s1 + $0x18] sm:$0xff]
  %v145 = vmul.f32 %v13, %v13
  %v146 = vmul.f32 %v14, %v14
  %v147 = vmul.f32 %v15, %v15
  %v148 = vmul.f32 %v16, %v16
  %v149 = vmul.f32 %v17, %v17
  %v150 = vmul.f32 %v18, %v18
  %v151 = vmul.f32 %v19, %v19
  %v152 = vmul.f32 %v20, %v20
  %v153 = vmul.f32 %v21, %v21
  %v154 = vmul.f32 %v22, %v22
  %v155 = vmul.f32 %v23, %v23
  %v156 = vmul.f32 %v24, %v24
  %v157 = vmul.f32 %v25, %v25
  %v158 = vmul.f32 %v26, %v26
  %v159 = vmul.f32 %v27, %v27
  %v160 = vmul.f32 %v28, %v28
  %v161 = vmul.f32 %v29, %v29
  %v162 = vmul.f32 %v30, %v30
  %v163 = vmul.f32 %v31, %v31
  %v164 = vmul.f32 %v32, %v32
  %v165 = vmul.f32 %v33, %v33
  %v166 = vmul.f32 %v34, %v34
  %v167 = vmul.f32 %v35, %v35
  %v168 = vmul.f32 %v36, %v36
  %v169 = vmul.f32 %v37, %v37
  %v170 = vmul.f32 %v38, %v38
  %v171 = vmul.f32 %v39, %v39
  %v172 = vmul.f32 %v40, %v40
  %v173 = vmul.f32 %v41, %v41
  %v174 = vmul.f32 %v42, %v42
  %v175 = vmul.f32 %v43, %v43
  %v176 = vmul.f32 %v44, %v44
  %v177 = vmul.f32 %v45, %v45
  %v178 = vmul.f32 %v46, %v46
  %v179 = vmul.f32 %v47, %v47
  %v180 = vmul.f32 %v48, %v48
  %v181 = vmul.f32 %v49, %v49
  %v182 = vmul.f32 %v50, %v50
  %v183 = vmul.f32 %v51, %v51
  %v184 = vmul.f32 %v52, %v52
  %v185 = vmul.f32 %v53, %v53
  %v186 = vmul.f32 %v54, %v54
  %v187 = vmul.f32 %v55, %v55
  %v188 = vmul.f32 %v56, %v56
  %v189 = vmul.f32 %v57, %v57
  %v190 = vmul.f32 %v58, %v58
  %v191 = vmul.f32 %v59, %v59
  %v192 = vmul.f32 %v60, %v60
  %v193 = vmul.f32 %v61, %v61
  %v194 = vmul.f32 %v62, %v62
  %v195 = vmul.f32 %v63, %v63
  %v196 = vmul.f32 %v64, %v64
  %v197 = vmul.f32 %v65, %v65
  %v198 = vmul.f32 %v66, %v66
  %v199 = vmul.f32 %v67, %v67
  %v200 = vmul.f32 %v68, %v68
  %v201 = vmul.f32 %v69, %v69
  %v202 = vmul.f32 %v70, %v70
  %v203 = vmul.f32 %v71, %v71
  %v204 = vmul.f32 %v72, %v72
  %v205 = vmul.f32 %v73, %v73
  %v206 = vmul.f32 %v74, %v74
  %v207 = vmul.f32 %v75, %v75
  %v208 = vmul.f32 %v76, %v76
  %v209 = vmul.f32 %v77, %v77
  %v210 = vmul.f32 %v78, %v78
  %v211 = vmul.f32 %v79, %v79
  %v212 = vmul.f32 %v80, %v80
  %v213 = vmul.f32 %v81, %v81
  %v214 = vmul.f32 %v82, %v82
  %v215 = vmul.f32 %v83, %v83
  %v216 = vmul.f32 %v84, %v84
  %v217 = vmul.f32 %v85, %v85
  %v218 = vmul.f32 %v86, %v86
  %v219 = vmul.f32 %v87, %v87
  %v220 = vmul.f32 %v88, %v88
  %v221 = vmul.f32 %v89, %v89
  %v222 = vmul.f32 %v90, %v90
  %v223 = vmul.f32 %v91, %v91
  %v224 = vmul.f32 %v92, %v92
  %v225 = vmul.f32 %v93, %v93
  %v226 = vmul.f32 %v94, %v94
  %v227 = vmul.f32 %v95, %v95
  %v228 = vmul.f32 %v96, %v96
  %v229 = vmul.f32 %v97, %v97
  %v230 = vmul.f32 %v98, %v98
  %v231 = vmul.f32 %v99, %v99
  %v232 = vmul.f32 %v100, %v100
  %v233 = vmul.f32 %v101, %v101
  %v234 = vmul.f32 %v102, %v102
  %v235 = vmul.f32 %v103, %v103
  %v236 = vmul.f32 %v104, %v104
  %v237 = vmul.f32 %v105, %v105
  %v238 = vmul.f32 %v106, %v106
  %v239 = vmul.f32 %v107, %v107
  %v240 = vmul.f32 %v108, %v108
  %v241 = vmul.f32 %v109, %v109
  %v242 = vmul.f32 %v110, %v110
  %v243 = vmul.f32 %v111, %v111
  %v244 = vmul.f32 %v112, %v112
  %v245 = vmul.f32 %v113, %v113
  %v246 = vmul.f32 %v114, %v114
  %v247 = vmul.f32 %v115, %v115
  %v248 = vmul.f32 %v116, %v116
  %v249 = vmul.f32 %v117, %v117
  %v250 = vmul.f32 %v118, %v118
  %v251 = vmul.f32 %v119, %v119
  %v252 = vmul.f32 %v120, %v120
  %v253 = vmul.f32 %v121, %v121
  %v254 = vmul.f32 %v122, %v122
  %v255 = vmul.f32 %v123, %v123
  %v256 = vmul.f32 %v124, %v124
  %v257 = vmul.f32 %v125, %v125
  %v258 = vmul.f32 %v126, %v126
  %v259 = vmul.f32 %v127, %v127
  %v260 = vmul.f32 %v128, %v128
  %v261 = vmul.f32 %v129, %v129
  %v262 = vmul.f32 %v130, %v130
  %v263 = vmul.f32 %v131, %v131
  %v264 = vmul.f32 %v132, %v132
  %v265 = vmul.f32 %v133, %v133
  %v266 = vmul.f32 %v134, %v134
  %v267 = vmul.f32 %v135, %v135
  %v268 = vmul.f32 %v136, %v136
  %v269 = vmul.f32 %v137, %v137
  %v270 = vmul.f32 %v138, %v138
  %v271 = vmul.f32 %v139, %v139
  %v272 = vmul.f32 %v140, %v140
  %273 = vmatprep.subr.mxu0 0.0
  %v274 = vand.u32 %v145, 4294901760
  %275 = vmatpush1.msra.mxu0 %v274
  %276 = vmatprep.subr.mxu0 0.0
  %v277 = vand.u32 %v146, 4294901760
  %278 = vmatpush1.msra.mxu0 %v277
  %279 = vmatprep.subr.mxu0 0.0
  %v280 = vand.u32 %v147, 4294901760
  %281 = vmatpush1.msra.mxu0 %v280
  %282 = vmatprep.subr.mxu0 0.0
  %v283 = vand.u32 %v148, 4294901760
  %284 = vmatpush1.msra.mxu0 %v283
  %285 = vmatprep.subr.mxu0 0.0
  %v286 = vand.u32 %v149, 4294901760
  %287 = vmatpush1.msra.mxu0 %v286
  %288 = vmatprep.subr.mxu0 0.0
  %v289 = vand.u32 %v150, 4294901760
  %290 = vmatpush1.msra.mxu0 %v289
  %291 = vmatprep.subr.mxu0 0.0
  %v292 = vand.u32 %v151, 4294901760
  %293 = vmatpush1.msra.mxu0 %v292
  %294 = vmatprep.subr.mxu0 0.0
  %v295 = vand.u32 %v152, 4294901760
  %296 = vmatpush1.msra.mxu0 %v295
  %297 = vmatprep.subr.mxu0 0.0
  %v298 = vand.u32 %v153, 4294901760
  %299 = vmatpush1.msra.mxu0 %v298
  %300 = vmatprep.subr.mxu0 0.0
  %v301 = vand.u32 %v154, 4294901760
  %302 = vmatpush1.msra.mxu0 %v301
  %303 = vmatprep.subr.mxu0 0.0
  %v304 = vand.u32 %v155, 4294901760
  %305 = vmatpush1.msra.mxu0 %v304
  %306 = vmatprep.subr.mxu0 0.0
  %v307 = vand.u32 %v156, 4294901760
  %308 = vmatpush1.msra.mxu0 %v307
  %309 = vmatprep.subr.mxu0 0.0
  %v310 = vand.u32 %v157, 4294901760
  %311 = vmatpush1.msra.mxu0 %v310
  %312 = vmatprep.subr.mxu0 0.0
  %v313 = vand.u32 %v158, 4294901760
  %314 = vmatpush1.msra.mxu0 %v313
  %315 = vmatprep.subr.mxu0 0.0
  %v316 = vand.u32 %v159, 4294901760
  %317 = vmatpush1.msra.mxu0 %v316
  %318 = vmatprep.subr.mxu0 0.0
  %v319 = vand.u32 %v160, 4294901760
  %320 = vmatpush1.msra.mxu0 %v319
  %321 = vmatprep.subr.mxu0 0.0
  %v322 = vand.u32 %v161, 4294901760
  %323 = vmatpush1.msra.mxu0 %v322
  %324 = vmatprep.subr.mxu0 0.0
  %v325 = vand.u32 %v162, 4294901760
  %326 = vmatpush1.msra.mxu0 %v325
  %327 = vmatprep.subr.mxu0 0.0
  %v328 = vand.u32 %v163, 4294901760
  %329 = vmatpush1.msra.mxu0 %v328
  %330 = vmatprep.subr.mxu0 0.0
  %v331 = vand.u32 %v164, 4294901760
  %332 = vmatpush1.msra.mxu0 %v331
  %333 = vmatprep.subr.mxu0 0.0
  %v334 = vand.u32 %v165, 4294901760
  %335 = vmatpush1.msra.mxu0 %v334
  %336 = vmatprep.subr.mxu0 0.0
  %v337 = vand.u32 %v166, 4294901760
  %338 = vmatpush1.msra.mxu0 %v337
  %339 = vmatprep.subr.mxu0 0.0
  %v340 = vand.u32 %v167, 4294901760
  %341 = vmatpush1.msra.mxu0 %v340
  %342 = vmatprep.subr.mxu0 0.0
  %v343 = vand.u32 %v168, 4294901760
  %344 = vmatpush1.msra.mxu0 %v343
  %345 = vmatprep.subr.mxu0 0.0
  %v346 = vand.u32 %v169, 4294901760
  %347 = vmatpush1.msra.mxu0 %v346
  %348 = vmatprep.subr.mxu0 0.0
  %v349 = vand.u32 %v170, 4294901760
  %350 = vmatpush1.msra.mxu0 %v349
  %351 = vmatprep.subr.mxu0 0.0
  %v352 = vand.u32 %v171, 4294901760
  %353 = vmatpush1.msra.mxu0 %v352
  %354 = vmatprep.subr.mxu0 0.0
  %v355 = vand.u32 %v172, 4294901760
  %356 = vmatpush1.msra.mxu0 %v355
  %357 = vmatprep.subr.mxu0 0.0
  %v358 = vand.u32 %v173, 4294901760
  %359 = vmatpush1.msra.mxu0 %v358
  %360 = vmatprep.subr.mxu0 0.0
  %v361 = vand.u32 %v174, 4294901760
  %362 = vmatpush1.msra.mxu0 %v361
  %363 = vmatprep.subr.mxu0 0.0
  %v364 = vand.u32 %v175, 4294901760
  %365 = vmatpush1.msra.mxu0 %v364
  %366 = vmatprep.subr.mxu0 0.0
  %v367 = vand.u32 %v176, 4294901760
  %368 = vmatpush1.msra.mxu0 %v367
  %v369 = vand.u32 %v142, 4294901760
  %v370 = vsub.f32 %v142, %v369
  %v371 = vand.u32 %v370, 4294901760
  %v372 = vsub.f32 %v370, %v371
  %v373 = vand.u32 %v372, 4294901760
  %374 = vmatprep.mubr.f32.mxu0 %v373
  %v375 = vand.u32 %v141, 4294901760
  %v376 = vsub.f32 %v141, %v375
  %v377 = vand.u32 %v376, 4294901760
  %v378 = vsub.f32 %v376, %v377
  %v379 = vand.u32 %v378, 4294901760
  %380 = vmatmul.mubr.f32.gmra.mrb[0].mxu0 %v379
  %v381 = vpop.f32.mrb[0].mxu0
  %v382 = vadd.f32 0.0, %v381
  %v383 = vpop.f32.mrb[0].mxu0
  %384 = vdwg.mxu0
  %385 = vmatprep.subr.mxu0 0.0
  %v386 = vand.u32 %v145, 4294901760
  %v387 = vsub.f32 %v145, %v386
  %v388 = vand.u32 %v387, 4294901760
  %v389 = vsub.f32 %v387, %v388
  %v390 = vand.u32 %v389, 4294901760
  %391 = vmatpush1.msra.mxu0 %v390
  %392 = vmatprep.subr.mxu0 0.0
  %v393 = vand.u32 %v146, 4294901760
  %v394 = vsub.f32 %v146, %v393
  %v395 = vand.u32 %v394, 4294901760
  %v396 = vsub.f32 %v394, %v395
  %v397 = vand.u32 %v396, 4294901760
  %398 = vmatpush1.msra.mxu0 %v397
  %399 = vmatprep.subr.mxu0 0.0
  %v400 = vand.u32 %v147, 4294901760
  %v401 = vsub.f32 %v147, %v400
  %v402 = vand.u32 %v401, 4294901760
  %v403 = vsub.f32 %v401, %v402
  %v404 = vand.u32 %v403, 4294901760
  %405 = vmatpush1.msra.mxu0 %v404
  %406 = vmatprep.subr.mxu0 0.0
  %v407 = vand.u32 %v148, 4294901760
  %v408 = vsub.f32 %v148, %v407
  %v409 = vand.u32 %v408, 4294901760
  %v410 = vsub.f32 %v408, %v409
  %v411 = vand.u32 %v410, 4294901760
  %412 = vmatpush1.msra.mxu0 %v411
  %413 = vmatprep.subr.mxu0 0.0
  %v414 = vand.u32 %v149, 4294901760
  %v415 = vsub.f32 %v149, %v414
  %v416 = vand.u32 %v415, 4294901760
  %v417 = vsub.f32 %v415, %v416
  %v418 = vand.u32 %v417, 4294901760
  %419 = vmatpush1.msra.mxu0 %v418
  %420 = vmatprep.subr.mxu0 0.0
  %v421 = vand.u32 %v150, 4294901760
  %v422 = vsub.f32 %v150, %v421
  %v423 = vand.u32 %v422, 4294901760
  %v424 = vsub.f32 %v422, %v423
  %v425 = vand.u32 %v424, 4294901760
  %426 = vmatpush1.msra.mxu0 %v425
  %427 = vmatprep.subr.mxu0 0.0
  %v428 = vand.u32 %v151, 4294901760
  %v429 = vsub.f32 %v151, %v428
  %v430 = vand.u32 %v429, 4294901760
  %v431 = vsub.f32 %v429, %v430
  %v432 = vand.u32 %v431, 4294901760
  %433 = vmatpush1.msra.mxu0 %v432
  %434 = vmatprep.subr.mxu0 0.0
  %v435 = vand.u32 %v152, 4294901760
  %v436 = vsub.f32 %v152, %v435
  %v437 = vand.u32 %v436, 4294901760
  %v438 = vsub.f32 %v436, %v437
  %v439 = vand.u32 %v438, 4294901760
  %440 = vmatpush1.msra.mxu0 %v439
  %441 = vmatprep.subr.mxu0 0.0
  %v442 = vand.u32 %v153, 4294901760
  %v443 = vsub.f32 %v153, %v442
  %v444 = vand.u32 %v443, 4294901760
  %v445 = vsub.f32 %v443, %v444
  %v446 = vand.u32 %v445, 4294901760
  %447 = vmatpush1.msra.mxu0 %v446
  %448 = vmatprep.subr.mxu0 0.0
  %v449 = vand.u32 %v154, 4294901760
  %v450 = vsub.f32 %v154, %v449
  %v451 = vand.u32 %v450, 4294901760
  %v452 = vsub.f32 %v450, %v451
  %v453 = vand.u32 %v452, 4294901760
  %454 = vmatpush1.msra.mxu0 %v453
  %455 = vmatprep.subr.mxu0 0.0
  %v456 = vand.u32 %v155, 4294901760
  %v457 = vsub.f32 %v155, %v456
  %v458 = vand.u32 %v457, 4294901760
  %v459 = vsub.f32 %v457, %v458
  %v460 = vand.u32 %v459, 4294901760
  %461 = vmatpush1.msra.mxu0 %v460
  %462 = vmatprep.subr.mxu0 0.0
  %v463 = vand.u32 %v156, 4294901760
  %v464 = vsub.f32 %v156, %v463
  %v465 = vand.u32 %v464, 4294901760
  %v466 = vsub.f32 %v464, %v465
  %v467 = vand.u32 %v466, 4294901760
  %468 = vmatpush1.msra.mxu0 %v467
  %469 = vmatprep.subr.mxu0 0.0
  %v470 = vand.u32 %v157, 4294901760
  %v471 = vsub.f32 %v157, %v470
  %v472 = vand.u32 %v471, 4294901760
  %v473 = vsub.f32 %v471, %v472
  %v474 = vand.u32 %v473, 4294901760
  %475 = vmatpush1.msra.mxu0 %v474
  %476 = vmatprep.subr.mxu0 0.0
  %v477 = vand.u32 %v158, 4294901760
  %v478 = vsub.f32 %v158, %v477
  %v479 = vand.u32 %v478, 4294901760
  %v480 = vsub.f32 %v478, %v479
  %v481 = vand.u32 %v480, 4294901760
  %482 = vmatpush1.msra.mxu0 %v481
  %483 = vmatprep.subr.mxu0 0.0
  %v484 = vand.u32 %v159, 4294901760
  %v485 = vsub.f32 %v159, %v484
  %v486 = vand.u32 %v485, 4294901760
  %v487 = vsub.f32 %v485, %v486
  %v488 = vand.u32 %v487, 4294901760
  %489 = vmatpush1.msra.mxu0 %v488
  %490 = vmatprep.subr.mxu0 0.0
  %v491 = vand.u32 %v160, 4294901760
  %v492 = vsub.f32 %v160, %v491
  %v493 = vand.u32 %v492, 4294901760
  %v494 = vsub.f32 %v492, %v493
  %v495 = vand.u32 %v494, 4294901760
  %496 = vmatpush1.msra.mxu0 %v495
  %497 = vmatprep.subr.mxu0 0.0
  %v498 = vand.u32 %v161, 4294901760
  %v499 = vsub.f32 %v161, %v498
  %v500 = vand.u32 %v499, 4294901760
  %v501 = vsub.f32 %v499, %v500
  %v502 = vand.u32 %v501, 4294901760
  %503 = vmatpush1.msra.mxu0 %v502
  %504 = vmatprep.subr.mxu0 0.0
  %v505 = vand.u32 %v162, 4294901760
  %v506 = vsub.f32 %v162, %v505
  %v507 = vand.u32 %v506, 4294901760
  %v508 = vsub.f32 %v506, %v507
  %v509 = vand.u32 %v508, 4294901760
  %510 = vmatpush1.msra.mxu0 %v509
  %511 = vmatprep.subr.mxu0 0.0
  %v512 = vand.u32 %v163, 4294901760
  %v513 = vsub.f32 %v163, %v512
  %v514 = vand.u32 %v513, 4294901760
  %v515 = vsub.f32 %v513, %v514
  %v516 = vand.u32 %v515, 4294901760
  %517 = vmatpush1.msra.mxu0 %v516
  %518 = vmatprep.subr.mxu0 0.0
  %v519 = vand.u32 %v164, 4294901760
  %v520 = vsub.f32 %v164, %v519
  %v521 = vand.u32 %v520, 4294901760
  %v522 = vsub.f32 %v520, %v521
  %v523 = vand.u32 %v522, 4294901760
  %524 = vmatpush1.msra.mxu0 %v523
  %525 = vmatprep.subr.mxu0 0.0
  %v526 = vand.u32 %v165, 4294901760
  %v527 = vsub.f32 %v165, %v526
  %v528 = vand.u32 %v527, 4294901760
  %v529 = vsub.f32 %v527, %v528
  %v530 = vand.u32 %v529, 4294901760
  %531 = vmatpush1.msra.mxu0 %v530
  %532 = vmatprep.subr.mxu0 0.0
  %v533 = vand.u32 %v166, 4294901760
  %v534 = vsub.f32 %v166, %v533
  %v535 = vand.u32 %v534, 4294901760
  %v536 = vsub.f32 %v534, %v535
  %v537 = vand.u32 %v536, 4294901760
  %538 = vmatpush1.msra.mxu0 %v537
  %539 = vmatprep.subr.mxu0 0.0
  %v540 = vand.u32 %v167, 4294901760
  %v541 = vsub.f32 %v167, %v540
  %v542 = vand.u32 %v541, 4294901760
  %v543 = vsub.f32 %v541, %v542
  %v544 = vand.u32 %v543, 4294901760
  %545 = vmatpush1.msra.mxu0 %v544
  %546 = vmatprep.subr.mxu0 0.0
  %v547 = vand.u32 %v168, 4294901760
  %v548 = vsub.f32 %v168, %v547
  %v549 = vand.u32 %v548, 4294901760
  %v550 = vsub.f32 %v548, %v549
  %v551 = vand.u32 %v550, 4294901760
  %552 = vmatpush1.msra.mxu0 %v551
  %553 = vmatprep.subr.mxu0 0.0
  %v554 = vand.u32 %v169, 4294901760
  %v555 = vsub.f32 %v169, %v554
  %v556 = vand.u32 %v555, 4294901760
  %v557 = vsub.f32 %v555, %v556
  %v558 = vand.u32 %v557, 4294901760
  %559 = vmatpush1.msra.mxu0 %v558
  %560 = vmatprep.subr.mxu0 0.0
  %v561 = vand.u32 %v170, 4294901760
  %v562 = vsub.f32 %v170, %v561
  %v563 = vand.u32 %v562, 4294901760
  %v564 = vsub.f32 %v562, %v563
  %v565 = vand.u32 %v564, 4294901760
  %566 = vmatpush1.msra.mxu0 %v565
  %567 = vmatprep.subr.mxu0 0.0
  %v568 = vand.u32 %v171, 4294901760
  %v569 = vsub.f32 %v171, %v568
  %v570 = vand.u32 %v569, 4294901760
  %v571 = vsub.f32 %v569, %v570
  %v572 = vand.u32 %v571, 4294901760
  %573 = vmatpush1.msra.mxu0 %v572
  %574 = vmatprep.subr.mxu0 0.0
  %v575 = vand.u32 %v172, 4294901760
  %v576 = vsub.f32 %v172, %v575
  %v577 = vand.u32 %v576, 4294901760
  %v578 = vsub.f32 %v576, %v577
  %v579 = vand.u32 %v578, 4294901760
  %580 = vmatpush1.msra.mxu0 %v579
  %581 = vmatprep.subr.mxu0 0.0
  %v582 = vand.u32 %v173, 4294901760
  %v583 = vsub.f32 %v173, %v582
  %v584 = vand.u32 %v583, 4294901760
  %v585 = vsub.f32 %v583, %v584
  %v586 = vand.u32 %v585, 4294901760
  %587 = vmatpush1.msra.mxu0 %v586
  %588 = vmatprep.subr.mxu0 0.0
  %v589 = vand.u32 %v174, 4294901760
  %v590 = vsub.f32 %v174, %v589
  %v591 = vand.u32 %v590, 4294901760
  %v592 = vsub.f32 %v590, %v591
  %v593 = vand.u32 %v592, 4294901760
  %594 = vmatpush1.msra.mxu0 %v593
  %595 = vmatprep.subr.mxu0 0.0
  %v596 = vand.u32 %v175, 4294901760
  %v597 = vsub.f32 %v175, %v596
  %v598 = vand.u32 %v597, 4294901760
  %v599 = vsub.f32 %v597, %v598
  %v600 = vand.u32 %v599, 4294901760
  %601 = vmatpush1.msra.mxu0 %v600
  %602 = vmatprep.subr.mxu0 0.0
  %v603 = vand.u32 %v176, 4294901760
  %v604 = vsub.f32 %v176, %v603
  %v605 = vand.u32 %v604, 4294901760
  %v606 = vsub.f32 %v604, %v605
  %v607 = vand.u32 %v606, 4294901760
  %608 = vmatpush1.msra.mxu0 %v607
  %v609 = vand.u32 %v142, 4294901760
  %610 = vmatprep.mubr.f32.mxu0 %v609
  %v611 = vand.u32 %v141, 4294901760
  %612 = vmatmul.mubr.f32.gmra.mrb[0].mxu0 %v611
  %v613 = vpop.f32.mrb[0].mxu0
  %v614 = vadd.f32 %v382, %v613
  %v615 = vpop.f32.mrb[0].mxu0
  %616 = vdwg.mxu0
  %617 = vmatprep.subr.mxu0 0.0
  %v618 = vand.u32 %v145, 4294901760
  %v619 = vsub.f32 %v145, %v618
  %620 = vmatpush1.msra.mxu0 %v619
  %621 = vmatprep.subr.mxu0 0.0
  %v622 = vand.u32 %v146, 4294901760
  %v623 = vsub.f32 %v146, %v622
  %624 = vmatpush1.msra.mxu0 %v623
  %625 = vmatprep.subr.mxu0 0.0
  %v626 = vand.u32 %v147, 4294901760
  %v627 = vsub.f32 %v147, %v626
  %628 = vmatpush1.msra.mxu0 %v627
  %629 = vmatprep.subr.mxu0 0.0
  %v630 = vand.u32 %v148, 4294901760
  %v631 = vsub.f32 %v148, %v630
  %632 = vmatpush1.msra.mxu0 %v631
  %633 = vmatprep.subr.mxu0 0.0
  %v634 = vand.u32 %v149, 4294901760
  %v635 = vsub.f32 %v149, %v634
  %636 = vmatpush1.msra.mxu0 %v635
  %637 = vmatprep.subr.mxu0 0.0
  %v638 = vand.u32 %v150, 4294901760
  %v639 = vsub.f32 %v150, %v638
  %640 = vmatpush1.msra.mxu0 %v639
  %641 = vmatprep.subr.mxu0 0.0
  %v642 = vand.u32 %v151, 4294901760
  %v643 = vsub.f32 %v151, %v642
  %644 = vmatpush1.msra.mxu0 %v643
  %645 = vmatprep.subr.mxu0 0.0
  %v646 = vand.u32 %v152, 4294901760
  %v647 = vsub.f32 %v152, %v646
  %648 = vmatpush1.msra.mxu0 %v647
  %649 = vmatprep.subr.mxu0 0.0
  %v650 = vand.u32 %v153, 4294901760
  %v651 = vsub.f32 %v153, %v650
  %652 = vmatpush1.msra.mxu0 %v651
  %653 = vmatprep.subr.mxu0 0.0
  %v654 = vand.u32 %v154, 4294901760
  %v655 = vsub.f32 %v154, %v654
  %656 = vmatpush1.msra.mxu0 %v655
  %657 = vmatprep.subr.mxu0 0.0
  %v658 = vand.u32 %v155, 4294901760
  %v659 = vsub.f32 %v155, %v658
  %660 = vmatpush1.msra.mxu0 %v659
  %661 = vmatprep.subr.mxu0 0.0
  %v662 = vand.u32 %v156, 4294901760
  %v663 = vsub.f32 %v156, %v662
  %664 = vmatpush1.msra.mxu0 %v663
  %665 = vmatprep.subr.mxu0 0.0
  %v666 = vand.u32 %v157, 4294901760
  %v667 = vsub.f32 %v157, %v666
  %668 = vmatpush1.msra.mxu0 %v667
  %669 = vmatprep.subr.mxu0 0.0
  %v670 = vand.u32 %v158, 4294901760
  %v671 = vsub.f32 %v158, %v670
  %672 = vmatpush1.msra.mxu0 %v671
  %673 = vmatprep.subr.mxu0 0.0
  %v674 = vand.u32 %v159, 4294901760
  %v675 = vsub.f32 %v159, %v674
  %676 = vmatpush1.msra.mxu0 %v675
  %677 = vmatprep.subr.mxu0 0.0
  %v678 = vand.u32 %v160, 4294901760
  %v679 = vsub.f32 %v160, %v678
  %680 = vmatpush1.msra.mxu0 %v679
  %681 = vmatprep.subr.mxu0 0.0
  %v682 = vand.u32 %v161, 4294901760
  %v683 = vsub.f32 %v161, %v682
  %684 = vmatpush1.msra.mxu0 %v683
  %685 = vmatprep.subr.mxu0 0.0
  %v686 = vand.u32 %v162, 4294901760
  %v687 = vsub.f32 %v162, %v686
  %688 = vmatpush1.msra.mxu0 %v687
  %689 = vmatprep.subr.mxu0 0.0
  %v690 = vand.u32 %v163, 4294901760
  %v691 = vsub.f32 %v163, %v690
  %692 = vmatpush1.msra.mxu0 %v691
  %693 = vmatprep.subr.mxu0 0.0
  %v694 = vand.u32 %v164, 4294901760
  %v695 = vsub.f32 %v164, %v694
  %696 = vmatpush1.msra.mxu0 %v695
  %697 = vmatprep.subr.mxu0 0.0
  %v698 = vand.u32 %v165, 4294901760
  %v699 = vsub.f32 %v165, %v698
  %700 = vmatpush1.msra.mxu0 %v699
  %701 = vmatprep.subr.mxu0 0.0
  %v702 = vand.u32 %v166, 4294901760
  %v703 = vsub.f32 %v166, %v702
  %704 = vmatpush1.msra.mxu0 %v703
  %705 = vmatprep.subr.mxu0 0.0
  %v706 = vand.u32 %v167, 4294901760
  %v707 = vsub.f32 %v167, %v706
  %708 = vmatpush1.msra.mxu0 %v707
  %709 = vmatprep.subr.mxu0 0.0
  %v710 = vand.u32 %v168, 4294901760
  %v711 = vsub.f32 %v168, %v710
  %712 = vmatpush1.msra.mxu0 %v711
  %713 = vmatprep.subr.mxu0 0.0
  %v714 = vand.u32 %v169, 4294901760
  %v715 = vsub.f32 %v169, %v714
  %716 = vmatpush1.msra.mxu0 %v715
  %717 = vmatprep.subr.mxu0 0.0
  %v718 = vand.u32 %v170, 4294901760
  %v719 = vsub.f32 %v170, %v718
  %720 = vmatpush1.msra.mxu0 %v719
  %721 = vmatprep.subr.mxu0 0.0
  %v722 = vand.u32 %v171, 4294901760
  %v723 = vsub.f32 %v171, %v722
  %724 = vmatpush1.msra.mxu0 %v723
  %725 = vmatprep.subr.mxu0 0.0
  %v726 = vand.u32 %v172, 4294901760
  %v727 = vsub.f32 %v172, %v726
  %728 = vmatpush1.msra.mxu0 %v727
  %729 = vmatprep.subr.mxu0 0.0
  %v730 = vand.u32 %v173, 4294901760
  %v731 = vsub.f32 %v173, %v730
  %732 = vmatpush1.msra.mxu0 %v731
  %733 = vmatprep.subr.mxu0 0.0
  %v734 = vand.u32 %v174, 4294901760
  %v735 = vsub.f32 %v174, %v734
  %736 = vmatpush1.msra.mxu0 %v735
  %737 = vmatprep.subr.mxu0 0.0
  %v738 = vand.u32 %v175, 4294901760
  %v739 = vsub.f32 %v175, %v738
  %740 = vmatpush1.msra.mxu0 %v739
  %741 = vmatprep.subr.mxu0 0.0
  %v742 = vand.u32 %v176, 4294901760
  %v743 = vsub.f32 %v176, %v742
  %744 = vmatpush1.msra.mxu0 %v743
  %v745 = vand.u32 %v142, 4294901760
  %v746 = vsub.f32 %v142, %v745
  %747 = vmatprep.mubr.f32.mxu0 %v746
  %v748 = vand.u32 %v141, 4294901760
  %v749 = vsub.f32 %v141, %v748
  %750 = vmatmul.mubr.f32.gmra.mrb[0].mxu0 %v749
  %v751 = vpop.f32.mrb[0].mxu0
  %v752 = vadd.f32 %v614, %v751
  %v753 = vpop.f32.mrb[0].mxu0
  %754 = vdwg.mxu0
  %755 = vmatprep.subr.mxu0 0.0
  %v756 = vand.u32 %v145, 4294901760
  %757 = vmatpush1.msra.mxu0 %v756
  %758 = vmatprep.subr.mxu0 0.0
  %v759 = vand.u32 %v146, 4294901760
  %760 = vmatpush1.msra.mxu0 %v759
  %761 = vmatprep.subr.mxu0 0.0
  %v762 = vand.u32 %v147, 4294901760
  %763 = vmatpush1.msra.mxu0 %v762
  %764 = vmatprep.subr.mxu0 0.0
  %v765 = vand.u32 %v148, 4294901760
  %766 = vmatpush1.msra.mxu0 %v765
  %767 = vmatprep.subr.mxu0 0.0
  %v768 = vand.u32 %v149, 4294901760
  %769 = vmatpush1.msra.mxu0 %v768
  %770 = vmatprep.subr.mxu0 0.0
  %v771 = vand.u32 %v150, 4294901760
  %772 = vmatpush1.msra.mxu0 %v771
  %773 = vmatprep.subr.mxu0 0.0
  %v774 = vand.u32 %v151, 4294901760
  %775 = vmatpush1.msra.mxu0 %v774
  %776 = vmatprep.subr.mxu0 0.0
  %v777 = vand.u32 %v152, 4294901760
  %778 = vmatpush1.msra.mxu0 %v777
  %779 = vmatprep.subr.mxu0 0.0
  %v780 = vand.u32 %v153, 4294901760
  %781 = vmatpush1.msra.mxu0 %v780
  %782 = vmatprep.subr.mxu0 0.0
  %v783 = vand.u32 %v154, 4294901760
  %784 = vmatpush1.msra.mxu0 %v783
  %785 = vmatprep.subr.mxu0 0.0
  %v786 = vand.u32 %v155, 4294901760
  %787 = vmatpush1.msra.mxu0 %v786
  %788 = vmatprep.subr.mxu0 0.0
  %v789 = vand.u32 %v156, 4294901760
  %790 = vmatpush1.msra.mxu0 %v789
  %791 = vmatprep.subr.mxu0 0.0
  %v792 = vand.u32 %v157, 4294901760
  %793 = vmatpush1.msra.mxu0 %v792
  %794 = vmatprep.subr.mxu0 0.0
  %v795 = vand.u32 %v158, 4294901760
  %796 = vmatpush1.msra.mxu0 %v795
  %797 = vmatprep.subr.mxu0 0.0
  %v798 = vand.u32 %v159, 4294901760
  %799 = vmatpush1.msra.mxu0 %v798
  %800 = vmatprep.subr.mxu0 0.0
  %v801 = vand.u32 %v160, 4294901760
  %802 = vmatpush1.msra.mxu0 %v801
  %803 = vmatprep.subr.mxu0 0.0
  %v804 = vand.u32 %v161, 4294901760
  %805 = vmatpush1.msra.mxu0 %v804
  %806 = vmatprep.subr.mxu0 0.0
  %v807 = vand.u32 %v162, 4294901760
  %808 = vmatpush1.msra.mxu0 %v807
  %809 = vmatprep.subr.mxu0 0.0
  %v810 = vand.u32 %v163, 4294901760
  %811 = vmatpush1.msra.mxu0 %v810
  %812 = vmatprep.subr.mxu0 0.0
  %v813 = vand.u32 %v164, 4294901760
  %814 = vmatpush1.msra.mxu0 %v813
  %815 = vmatprep.subr.mxu0 0.0
  %v816 = vand.u32 %v165, 4294901760
  %817 = vmatpush1.msra.mxu0 %v816
  %818 = vmatprep.subr.mxu0 0.0
  %v819 = vand.u32 %v166, 4294901760
  %820 = vmatpush1.msra.mxu0 %v819
  %821 = vmatprep.subr.mxu0 0.0
  %v822 = vand.u32 %v167, 4294901760
  %823 = vmatpush1.msra.mxu0 %v822
  %824 = vmatprep.subr.mxu0 0.0
  %v825 = vand.u32 %v168, 4294901760
  %826 = vmatpush1.msra.mxu0 %v825
  %827 = vmatprep.subr.mxu0 0.0
  %v828 = vand.u32 %v169, 4294901760
  %829 = vmatpush1.msra.mxu0 %v828
  %830 = vmatprep.subr.mxu0 0.0
  %v831 = vand.u32 %v170, 4294901760
  %832 = vmatpush1.msra.mxu0 %v831
  %833 = vmatprep.subr.mxu0 0.0
  %v834 = vand.u32 %v171, 4294901760
  %835 = vmatpush1.msra.mxu0 %v834
  %836 = vmatprep.subr.mxu0 0.0
  %v837 = vand.u32 %v172, 4294901760
  %838 = vmatpush1.msra.mxu0 %v837
  %839 = vmatprep.subr.mxu0 0.0
  %v840 = vand.u32 %v173, 4294901760
  %841 = vmatpush1.msra.mxu0 %v840
  %842 = vmatprep.subr.mxu0 0.0
  %v843 = vand.u32 %v174, 4294901760
  %844 = vmatpush1.msra.mxu0 %v843
  %845 = vmatprep.subr.mxu0 0.0
  %v846 = vand.u32 %v175, 4294901760
  %847 = vmatpush1.msra.mxu0 %v846
  %848 = vmatprep.subr.mxu0 0.0
  %v849 = vand.u32 %v176, 4294901760
  %850 = vmatpush1.msra.mxu0 %v849
  %v851 = vand.u32 %v142, 4294901760
  %v852 = vsub.f32 %v142, %v851
  %v853 = vand.u32 %v852, 4294901760
  %854 = vmatprep.mubr.f32.mxu0 %v853
  %v855 = vand.u32 %v141, 4294901760
  %v856 = vsub.f32 %v141, %v855
  %v857 = vand.u32 %v856, 4294901760
  %858 = vmatmul.mubr.f32.gmra.mrb[0].mxu0 %v857
  %v859 = vpop.f32.mrb[0].mxu0
  %v860 = vadd.f32 %v752, %v859
  %v861 = vpop.f32.mrb[0].mxu0
  %862 = vdwg.mxu0
  %863 = vmatprep.subr.mxu0 0.0
  %v864 = vand.u32 %v145, 4294901760
  %v865 = vsub.f32 %v145, %v864
  %v866 = vand.u32 %v865, 4294901760
  %867 = vmatpush1.msra.mxu0 %v866
  %868 = vmatprep.subr.mxu0 0.0
  %v869 = vand.u32 %v146, 4294901760
  %v870 = vsub.f32 %v146, %v869
  %v871 = vand.u32 %v870, 4294901760
  %872 = vmatpush1.msra.mxu0 %v871
  %873 = vmatprep.subr.mxu0 0.0
  %v874 = vand.u32 %v147, 4294901760
  %v875 = vsub.f32 %v147, %v874
  %v876 = vand.u32 %v875, 4294901760
  %877 = vmatpush1.msra.mxu0 %v876
  %878 = vmatprep.subr.mxu0 0.0
  %v879 = vand.u32 %v148, 4294901760
  %v880 = vsub.f32 %v148, %v879
  %v881 = vand.u32 %v880, 4294901760
  %882 = vmatpush1.msra.mxu0 %v881
  %883 = vmatprep.subr.mxu0 0.0
  %v884 = vand.u32 %v149, 4294901760
  %v885 = vsub.f32 %v149, %v884
  %v886 = vand.u32 %v885, 4294901760
  %887 = vmatpush1.msra.mxu0 %v886
  %888 = vmatprep.subr.mxu0 0.0
  %v889 = vand.u32 %v150, 4294901760
  %v890 = vsub.f32 %v150, %v889
  %v891 = vand.u32 %v890, 4294901760
  %892 = vmatpush1.msra.mxu0 %v891
  %893 = vmatprep.subr.mxu0 0.0
  %v894 = vand.u32 %v151, 4294901760
  %v895 = vsub.f32 %v151, %v894
  %v896 = vand.u32 %v895, 4294901760
  %897 = vmatpush1.msra.mxu0 %v896
  %898 = vmatprep.subr.mxu0 0.0
  %v899 = vand.u32 %v152, 4294901760
  %v900 = vsub.f32 %v152, %v899
  %v901 = vand.u32 %v900, 4294901760
  %902 = vmatpush1.msra.mxu0 %v901
  %903 = vmatprep.subr.mxu0 0.0
  %v904 = vand.u32 %v153, 4294901760
  %v905 = vsub.f32 %v153, %v904
  %v906 = vand.u32 %v905, 4294901760
  %907 = vmatpush1.msra.mxu0 %v906
  %908 = vmatprep.subr.mxu0 0.0
  %v909 = vand.u32 %v154, 4294901760
  %v910 = vsub.f32 %v154, %v909
  %v911 = vand.u32 %v910, 4294901760
  %912 = vmatpush1.msra.mxu0 %v911
  %913 = vmatprep.subr.mxu0 0.0
  %v914 = vand.u32 %v155, 4294901760
  %v915 = vsub.f32 %v155, %v914
  %v916 = vand.u32 %v915, 4294901760
  %917 = vmatpush1.msra.mxu0 %v916
  %918 = vmatprep.subr.mxu0 0.0
  %v919 = vand.u32 %v156, 4294901760
  %v920 = vsub.f32 %v156, %v919
  %v921 = vand.u32 %v920, 4294901760
  %922 = vmatpush1.msra.mxu0 %v921
  %923 = vmatprep.subr.mxu0 0.0
  %v924 = vand.u32 %v157, 4294901760
  %v925 = vsub.f32 %v157, %v924
  %v926 = vand.u32 %v925, 4294901760
  %927 = vmatpush1.msra.mxu0 %v926
  %928 = vmatprep.subr.mxu0 0.0
  %v929 = vand.u32 %v158, 4294901760
  %v930 = vsub.f32 %v158, %v929
  %v931 = vand.u32 %v930, 4294901760
  %932 = vmatpush1.msra.mxu0 %v931
  %933 = vmatprep.subr.mxu0 0.0
  %v934 = vand.u32 %v159, 4294901760
  %v935 = vsub.f32 %v159, %v934
  %v936 = vand.u32 %v935, 4294901760
  %937 = vmatpush1.msra.mxu0 %v936
  %938 = vmatprep.subr.mxu0 0.0
  %v939 = vand.u32 %v160, 4294901760
  %v940 = vsub.f32 %v160, %v939
  %v941 = vand.u32 %v940, 4294901760
  %942 = vmatpush1.msra.mxu0 %v941
  %943 = vmatprep.subr.mxu0 0.0
  %v944 = vand.u32 %v161, 4294901760
  %v945 = vsub.f32 %v161, %v944
  %v946 = vand.u32 %v945, 4294901760
  %947 = vmatpush1.msra.mxu0 %v946
  %948 = vmatprep.subr.mxu0 0.0
  %v949 = vand.u32 %v162, 4294901760
  %v950 = vsub.f32 %v162, %v949
  %v951 = vand.u32 %v950, 4294901760
  %952 = vmatpush1.msra.mxu0 %v951
  %953 = vmatprep.subr.mxu0 0.0
  %v954 = vand.u32 %v163, 4294901760
  %v955 = vsub.f32 %v163, %v954
  %v956 = vand.u32 %v955, 4294901760
  %957 = vmatpush1.msra.mxu0 %v956
  %958 = vmatprep.subr.mxu0 0.0
  %v959 = vand.u32 %v164, 4294901760
  %v960 = vsub.f32 %v164, %v959
  %v961 = vand.u32 %v960, 4294901760
  %962 = vmatpush1.msra.mxu0 %v961
  %963 = vmatprep.subr.mxu0 0.0
  %v964 = vand.u32 %v165, 4294901760
  %v965 = vsub.f32 %v165, %v964
  %v966 = vand.u32 %v965, 4294901760
  %967 = vmatpush1.msra.mxu0 %v966
  %968 = vmatprep.subr.mxu0 0.0
  %v969 = vand.u32 %v166, 4294901760
  %v970 = vsub.f32 %v166, %v969
  %v971 = vand.u32 %v970, 4294901760
  %972 = vmatpush1.msra.mxu0 %v971
  %973 = vmatprep.subr.mxu0 0.0
  %v974 = vand.u32 %v167, 4294901760
  %v975 = vsub.f32 %v167, %v974
  %v976 = vand.u32 %v975, 4294901760
  %977 = vmatpush1.msra.mxu0 %v976
  %978 = vmatprep.subr.mxu0 0.0
  %v979 = vand.u32 %v168, 4294901760
  %v980 = vsub.f32 %v168, %v979
  %v981 = vand.u32 %v980, 4294901760
  %982 = vmatpush1.msra.mxu0 %v981
  %983 = vmatprep.subr.mxu0 0.0
  %v984 = vand.u32 %v169, 4294901760
  %v985 = vsub.f32 %v169, %v984
  %v986 = vand.u32 %v985, 4294901760
  %987 = vmatpush1.msra.mxu0 %v986
  %988 = vmatprep.subr.mxu0 0.0
  %v989 = vand.u32 %v170, 4294901760
  %v990 = vsub.f32 %v170, %v989
  %v991 = vand.u32 %v990, 4294901760
  %992 = vmatpush1.msra.mxu0 %v991
  %993 = vmatprep.subr.mxu0 0.0
  %v994 = vand.u32 %v171, 4294901760
  %v995 = vsub.f32 %v171, %v994
  %v996 = vand.u32 %v995, 4294901760
  %997 = vmatpush1.msra.mxu0 %v996
  %998 = vmatprep.subr.mxu0 0.0
  %v999 = vand.u32 %v172, 4294901760
  %v1000 = vsub.f32 %v172, %v999
  %v1001 = vand.u32 %v1000, 4294901760
  %1002 = vmatpush1.msra.mxu0 %v1001
  %1003 = vmatprep.subr.mxu0 0.0
  %v1004 = vand.u32 %v173, 4294901760
  %v1005 = vsub.f32 %v173, %v1004
  %v1006 = vand.u32 %v1005, 4294901760
  %1007 = vmatpush1.msra.mxu0 %v1006
  %1008 = vmatprep.subr.mxu0 0.0
  %v1009 = vand.u32 %v174, 4294901760
  %v1010 = vsub.f32 %v174, %v1009
  %v1011 = vand.u32 %v1010, 4294901760
  %1012 = vmatpush1.msra.mxu0 %v1011
  %1013 = vmatprep.subr.mxu0 0.0
  %v1014 = vand.u32 %v175, 4294901760
  %v1015 = vsub.f32 %v175, %v1014
  %v1016 = vand.u32 %v1015, 4294901760
  %1017 = vmatpush1.msra.mxu0 %v1016
  %1018 = vmatprep.subr.mxu0 0.0
  %v1019 = vand.u32 %v176, 4294901760
  %v1020 = vsub.f32 %v176, %v1019
  %v1021 = vand.u32 %v1020, 4294901760
  %1022 = vmatpush1.msra.mxu0 %v1021
  %v1023 = vand.u32 %v142, 4294901760
  %1024 = vmatprep.mubr.f32.mxu0 %v1023
  %v1025 = vand.u32 %v141, 4294901760
  %1026 = vmatmul.mubr.f32.gmra.mrb[0].mxu0 %v1025
  %v1027 = vpop.f32.mrb[0].mxu0
  %v1028 = vadd.f32 %v860, %v1027
  %v1029 = vpop.f32.mrb[0].mxu0
  %1030 = vdwg.mxu0
  %1031 = vmatprep.subr.mxu0 0.0
  %v1032 = vand.u32 %v145, 4294901760
  %1033 = vmatpush1.msra.mxu0 %v1032
  %1034 = vmatprep.subr.mxu0 0.0
  %v1035 = vand.u32 %v146, 4294901760
  %1036 = vmatpush1.msra.mxu0 %v1035
  %1037 = vmatprep.subr.mxu0 0.0
  %v1038 = vand.u32 %v147, 4294901760
  %1039 = vmatpush1.msra.mxu0 %v1038
  %1040 = vmatprep.subr.mxu0 0.0
  %v1041 = vand.u32 %v148, 4294901760
  %1042 = vmatpush1.msra.mxu0 %v1041
  %1043 = vmatprep.subr.mxu0 0.0
  %v1044 = vand.u32 %v149, 4294901760
  %1045 = vmatpush1.msra.mxu0 %v1044
  %1046 = vmatprep.subr.mxu0 0.0
  %v1047 = vand.u32 %v150, 4294901760
  %1048 = vmatpush1.msra.mxu0 %v1047
  %1049 = vmatprep.subr.mxu0 0.0
  %v1050 = vand.u32 %v151, 4294901760
  %1051 = vmatpush1.msra.mxu0 %v1050
  %1052 = vmatprep.subr.mxu0 0.0
  %v1053 = vand.u32 %v152, 4294901760
  %1054 = vmatpush1.msra.mxu0 %v1053
  %1055 = vmatprep.subr.mxu0 0.0
  %v1056 = vand.u32 %v153, 4294901760
  %1057 = vmatpush1.msra.mxu0 %v1056
  %1058 = vmatprep.subr.mxu0 0.0
  %v1059 = vand.u32 %v154, 4294901760
  %1060 = vmatpush1.msra.mxu0 %v1059
  %1061 = vmatprep.subr.mxu0 0.0
  %v1062 = vand.u32 %v155, 4294901760
  %1063 = vmatpush1.msra.mxu0 %v1062
  %1064 = vmatprep.subr.mxu0 0.0
  %v1065 = vand.u32 %v156, 4294901760
  %1066 = vmatpush1.msra.mxu0 %v1065
  %1067 = vmatprep.subr.mxu0 0.0
  %v1068 = vand.u32 %v157, 4294901760
  %1069 = vmatpush1.msra.mxu0 %v1068
  %1070 = vmatprep.subr.mxu0 0.0
  %v1071 = vand.u32 %v158, 4294901760
  %1072 = vmatpush1.msra.mxu0 %v1071
  %1073 = vmatprep.subr.mxu0 0.0
  %v1074 = vand.u32 %v159, 4294901760
  %1075 = vmatpush1.msra.mxu0 %v1074
  %1076 = vmatprep.subr.mxu0 0.0
  %v1077 = vand.u32 %v160, 4294901760
  %1078 = vmatpush1.msra.mxu0 %v1077
  %1079 = vmatprep.subr.mxu0 0.0
  %v1080 = vand.u32 %v161, 4294901760
  %1081 = vmatpush1.msra.mxu0 %v1080
  %1082 = vmatprep.subr.mxu0 0.0
  %v1083 = vand.u32 %v162, 4294901760
  %1084 = vmatpush1.msra.mxu0 %v1083
  %1085 = vmatprep.subr.mxu0 0.0
  %v1086 = vand.u32 %v163, 4294901760
  %1087 = vmatpush1.msra.mxu0 %v1086
  %1088 = vmatprep.subr.mxu0 0.0
  %v1089 = vand.u32 %v164, 4294901760
  %1090 = vmatpush1.msra.mxu0 %v1089
  %1091 = vmatprep.subr.mxu0 0.0
  %v1092 = vand.u32 %v165, 4294901760
  %1093 = vmatpush1.msra.mxu0 %v1092
  %1094 = vmatprep.subr.mxu0 0.0
  %v1095 = vand.u32 %v166, 4294901760
  %1096 = vmatpush1.msra.mxu0 %v1095
  %1097 = vmatprep.subr.mxu0 0.0
  %v1098 = vand.u32 %v167, 4294901760
  %1099 = vmatpush1.msra.mxu0 %v1098
  %1100 = vmatprep.subr.mxu0 0.0
  %v1101 = vand.u32 %v168, 4294901760
  %1102 = vmatpush1.msra.mxu0 %v1101
  %1103 = vmatprep.subr.mxu0 0.0
  %v1104 = vand.u32 %v169, 4294901760
  %1105 = vmatpush1.msra.mxu0 %v1104
  %1106 = vmatprep.subr.mxu0 0.0
  %v1107 = vand.u32 %v170, 4294901760
  %1108 = vmatpush1.msra.mxu0 %v1107
  %1109 = vmatprep.subr.mxu0 0.0
  %v1110 = vand.u32 %v171, 4294901760
  %1111 = vmatpush1.msra.mxu0 %v1110
  %1112 = vmatprep.subr.mxu0 0.0
  %v1113 = vand.u32 %v172, 4294901760
  %1114 = vmatpush1.msra.mxu0 %v1113
  %1115 = vmatprep.subr.mxu0 0.0
  %v1116 = vand.u32 %v173, 4294901760
  %1117 = vmatpush1.msra.mxu0 %v1116
  %1118 = vmatprep.subr.mxu0 0.0
  %v1119 = vand.u32 %v174, 4294901760
  %1120 = vmatpush1.msra.mxu0 %v1119
  %1121 = vmatprep.subr.mxu0 0.0
  %v1122 = vand.u32 %v175, 4294901760
  %1123 = vmatpush1.msra.mxu0 %v1122
  %1124 = vmatprep.subr.mxu0 0.0
  %v1125 = vand.u32 %v176, 4294901760
  %1126 = vmatpush1.msra.mxu0 %v1125
  %v1127 = vand.u32 %v142, 4294901760
  %1128 = vmatprep.mubr.f32.mxu0 %v1127
  %v1129 = vand.u32 %v141, 4294901760
  %1130 = vmatmul.mubr.f32.gmra.mrb[0].mxu0 %v1129
  %v1131 = vpop.f32.mrb[0].mxu0
  %v1132 = vadd.f32 %v1028, %v1131
  %v1133 = vpop.f32.mrb[0].mxu0
  %1134 = vdwg.mxu0
  %1135 = vmatprep.subr.mxu0 0.0
  %v1136 = vand.u32 %v177, 4294901760
  %1137 = vmatpush1.msra.mxu0 %v1136
  %1138 = vmatprep.subr.mxu0 0.0
  %v1139 = vand.u32 %v178, 4294901760
  %1140 = vmatpush1.msra.mxu0 %v1139
  %1141 = vmatprep.subr.mxu0 0.0
  %v1142 = vand.u32 %v179, 4294901760
  %1143 = vmatpush1.msra.mxu0 %v1142
  %1144 = vmatprep.subr.mxu0 0.0
  %v1145 = vand.u32 %v180, 4294901760
  %1146 = vmatpush1.msra.mxu0 %v1145
  %1147 = vmatprep.subr.mxu0 0.0
  %v1148 = vand.u32 %v181, 4294901760
  %1149 = vmatpush1.msra.mxu0 %v1148
  %1150 = vmatprep.subr.mxu0 0.0
  %v1151 = vand.u32 %v182, 4294901760
  %1152 = vmatpush1.msra.mxu0 %v1151
  %1153 = vmatprep.subr.mxu0 0.0
  %v1154 = vand.u32 %v183, 4294901760
  %1155 = vmatpush1.msra.mxu0 %v1154
  %1156 = vmatprep.subr.mxu0 0.0
  %v1157 = vand.u32 %v184, 4294901760
  %1158 = vmatpush1.msra.mxu0 %v1157
  %1159 = vmatprep.subr.mxu0 0.0
  %v1160 = vand.u32 %v185, 4294901760
  %1161 = vmatpush1.msra.mxu0 %v1160
  %1162 = vmatprep.subr.mxu0 0.0
  %v1163 = vand.u32 %v186, 4294901760
  %1164 = vmatpush1.msra.mxu0 %v1163
  %1165 = vmatprep.subr.mxu0 0.0
  %v1166 = vand.u32 %v187, 4294901760
  %1167 = vmatpush1.msra.mxu0 %v1166
  %1168 = vmatprep.subr.mxu0 0.0
  %v1169 = vand.u32 %v188, 4294901760
  %1170 = vmatpush1.msra.mxu0 %v1169
  %1171 = vmatprep.subr.mxu0 0.0
  %v1172 = vand.u32 %v189, 4294901760
  %1173 = vmatpush1.msra.mxu0 %v1172
  %1174 = vmatprep.subr.mxu0 0.0
  %v1175 = vand.u32 %v190, 4294901760
  %1176 = vmatpush1.msra.mxu0 %v1175
  %1177 = vmatprep.subr.mxu0 0.0
  %v1178 = vand.u32 %v191, 4294901760
  %1179 = vmatpush1.msra.mxu0 %v1178
  %1180 = vmatprep.subr.mxu0 0.0
  %v1181 = vand.u32 %v192, 4294901760
  %1182 = vmatpush1.msra.mxu0 %v1181
  %1183 = vmatprep.subr.mxu0 0.0
  %v1184 = vand.u32 %v193, 4294901760
  %1185 = vmatpush1.msra.mxu0 %v1184
  %1186 = vmatprep.subr.mxu0 0.0
  %v1187 = vand.u32 %v194, 4294901760
  %1188 = vmatpush1.msra.mxu0 %v1187
  %1189 = vmatprep.subr.mxu0 0.0
  %v1190 = vand.u32 %v195, 4294901760
  %1191 = vmatpush1.msra.mxu0 %v1190
  %1192 = vmatprep.subr.mxu0 0.0
  %v1193 = vand.u32 %v196, 4294901760
  %1194 = vmatpush1.msra.mxu0 %v1193
  %1195 = vmatprep.subr.mxu0 0.0
  %v1196 = vand.u32 %v197, 4294901760
  %1197 = vmatpush1.msra.mxu0 %v1196
  %1198 = vmatprep.subr.mxu0 0.0
  %v1199 = vand.u32 %v198, 4294901760
  %1200 = vmatpush1.msra.mxu0 %v1199
  %1201 = vmatprep.subr.mxu0 0.0
  %v1202 = vand.u32 %v199, 4294901760
  %1203 = vmatpush1.msra.mxu0 %v1202
  %1204 = vmatprep.subr.mxu0 0.0
  %v1205 = vand.u32 %v200, 4294901760
  %1206 = vmatpush1.msra.mxu0 %v1205
  %1207 = vmatprep.subr.mxu0 0.0
  %v1208 = vand.u32 %v201, 4294901760
  %1209 = vmatpush1.msra.mxu0 %v1208
  %1210 = vmatprep.subr.mxu0 0.0
  %v1211 = vand.u32 %v202, 4294901760
  %1212 = vmatpush1.msra.mxu0 %v1211
  %1213 = vmatprep.subr.mxu0 0.0
  %v1214 = vand.u32 %v203, 4294901760
  %1215 = vmatpush1.msra.mxu0 %v1214
  %1216 = vmatprep.subr.mxu0 0.0
  %v1217 = vand.u32 %v204, 4294901760
  %1218 = vmatpush1.msra.mxu0 %v1217
  %1219 = vmatprep.subr.mxu0 0.0
  %v1220 = vand.u32 %v205, 4294901760
  %1221 = vmatpush1.msra.mxu0 %v1220
  %1222 = vmatprep.subr.mxu0 0.0
  %v1223 = vand.u32 %v206, 4294901760
  %1224 = vmatpush1.msra.mxu0 %v1223
  %1225 = vmatprep.subr.mxu0 0.0
  %v1226 = vand.u32 %v207, 4294901760
  %1227 = vmatpush1.msra.mxu0 %v1226
  %1228 = vmatprep.subr.mxu0 0.0
  %v1229 = vand.u32 %v208, 4294901760
  %1230 = vmatpush1.msra.mxu0 %v1229
  %v1231 = vand.u32 %v144, 4294901760
  %v1232 = vsub.f32 %v144, %v1231
  %v1233 = vand.u32 %v1232, 4294901760
  %v1234 = vsub.f32 %v1232, %v1233
  %v1235 = vand.u32 %v1234, 4294901760
  %1236 = vmatprep.mubr.f32.mxu0 %v1235
  %v1237 = vand.u32 %v143, 4294901760
  %v1238 = vsub.f32 %v143, %v1237
  %v1239 = vand.u32 %v1238, 4294901760
  %v1240 = vsub.f32 %v1238, %v1239
  %v1241 = vand.u32 %v1240, 4294901760
  %1242 = vmatmul.mubr.f32.gmra.mrb[0].mxu0 %v1241
  %v1243 = vpop.f32.mrb[0].mxu0
  %v1244 = vadd.f32 %v1132, %v1243
  %v1245 = vpop.f32.mrb[0].mxu0
  %1246 = vdwg.mxu0
  %1247 = vmatprep.subr.mxu0 0.0
  %v1248 = vand.u32 %v177, 4294901760
  %v1249 = vsub.f32 %v177, %v1248
  %v1250 = vand.u32 %v1249, 4294901760
  %v1251 = vsub.f32 %v1249, %v1250
  %v1252 = vand.u32 %v1251, 4294901760
  %1253 = vmatpush1.msra.mxu0 %v1252
  %1254 = vmatprep.subr.mxu0 0.0
  %v1255 = vand.u32 %v178, 4294901760
  %v1256 = vsub.f32 %v178, %v1255
  %v1257 = vand.u32 %v1256, 4294901760
  %v1258 = vsub.f32 %v1256, %v1257
  %v1259 = vand.u32 %v1258, 4294901760
  %1260 = vmatpush1.msra.mxu0 %v1259
  %1261 = vmatprep.subr.mxu0 0.0
  %v1262 = vand.u32 %v179, 4294901760
  %v1263 = vsub.f32 %v179, %v1262
  %v1264 = vand.u32 %v1263, 4294901760
  %v1265 = vsub.f32 %v1263, %v1264
  %v1266 = vand.u32 %v1265, 4294901760
  %1267 = vmatpush1.msra.mxu0 %v1266
  %1268 = vmatprep.subr.mxu0 0.0
  %v1269 = vand.u32 %v180, 4294901760
  %v1270 = vsub.f32 %v180, %v1269
  %v1271 = vand.u32 %v1270, 4294901760
  %v1272 = vsub.f32 %v1270, %v1271
  %v1273 = vand.u32 %v1272, 4294901760
  %1274 = vmatpush1.msra.mxu0 %v1273
  %1275 = vmatprep.subr.mxu0 0.0
  %v1276 = vand.u32 %v181, 4294901760
  %v1277 = vsub.f32 %v181, %v1276
  %v1278 = vand.u32 %v1277, 4294901760
  %v1279 = vsub.f32 %v1277, %v1278
  %v1280 = vand.u32 %v1279, 4294901760
  %1281 = vmatpush1.msra.mxu0 %v1280
  %1282 = vmatprep.subr.mxu0 0.0
  %v1283 = vand.u32 %v182, 4294901760
  %v1284 = vsub.f32 %v182, %v1283
  %v1285 = vand.u32 %v1284, 4294901760
  %v1286 = vsub.f32 %v1284, %v1285
  %v1287 = vand.u32 %v1286, 4294901760
  %1288 = vmatpush1.msra.mxu0 %v1287
  %1289 = vmatprep.subr.mxu0 0.0
  %v1290 = vand.u32 %v183, 4294901760
  %v1291 = vsub.f32 %v183, %v1290
  %v1292 = vand.u32 %v1291, 4294901760
  %v1293 = vsub.f32 %v1291, %v1292
  %v1294 = vand.u32 %v1293, 4294901760
  %1295 = vmatpush1.msra.mxu0 %v1294
  %1296 = vmatprep.subr.mxu0 0.0
  %v1297 = vand.u32 %v184, 4294901760
  %v1298 = vsub.f32 %v184, %v1297
  %v1299 = vand.u32 %v1298, 4294901760
  %v1300 = vsub.f32 %v1298, %v1299
  %v1301 = vand.u32 %v1300, 4294901760
  %1302 = vmatpush1.msra.mxu0 %v1301
  %1303 = vmatprep.subr.mxu0 0.0
  %v1304 = vand.u32 %v185, 4294901760
  %v1305 = vsub.f32 %v185, %v1304
  %v1306 = vand.u32 %v1305, 4294901760
  %v1307 = vsub.f32 %v1305, %v1306
  %v1308 = vand.u32 %v1307, 4294901760
  %1309 = vmatpush1.msra.mxu0 %v1308
  %1310 = vmatprep.subr.mxu0 0.0
  %v1311 = vand.u32 %v186, 4294901760
  %v1312 = vsub.f32 %v186, %v1311
  %v1313 = vand.u32 %v1312, 4294901760
  %v1314 = vsub.f32 %v1312, %v1313
  %v1315 = vand.u32 %v1314, 4294901760
  %1316 = vmatpush1.msra.mxu0 %v1315
  %1317 = vmatprep.subr.mxu0 0.0
  %v1318 = vand.u32 %v187, 4294901760
  %v1319 = vsub.f32 %v187, %v1318
  %v1320 = vand.u32 %v1319, 4294901760
  %v1321 = vsub.f32 %v1319, %v1320
  %v1322 = vand.u32 %v1321, 4294901760
  %1323 = vmatpush1.msra.mxu0 %v1322
  %1324 = vmatprep.subr.mxu0 0.0
  %v1325 = vand.u32 %v188, 4294901760
  %v1326 = vsub.f32 %v188, %v1325
  %v1327 = vand.u32 %v1326, 4294901760
  %v1328 = vsub.f32 %v1326, %v1327
  %v1329 = vand.u32 %v1328, 4294901760
  %1330 = vmatpush1.msra.mxu0 %v1329
  %1331 = vmatprep.subr.mxu0 0.0
  %v1332 = vand.u32 %v189, 4294901760
  %v1333 = vsub.f32 %v189, %v1332
  %v1334 = vand.u32 %v1333, 4294901760
  %v1335 = vsub.f32 %v1333, %v1334
  %v1336 = vand.u32 %v1335, 4294901760
  %1337 = vmatpush1.msra.mxu0 %v1336
  %1338 = vmatprep.subr.mxu0 0.0
  %v1339 = vand.u32 %v190, 4294901760
  %v1340 = vsub.f32 %v190, %v1339
  %v1341 = vand.u32 %v1340, 4294901760
  %v1342 = vsub.f32 %v1340, %v1341
  %v1343 = vand.u32 %v1342, 4294901760
  %1344 = vmatpush1.msra.mxu0 %v1343
  %1345 = vmatprep.subr.mxu0 0.0
  %v1346 = vand.u32 %v191, 4294901760
  %v1347 = vsub.f32 %v191, %v1346
  %v1348 = vand.u32 %v1347, 4294901760
  %v1349 = vsub.f32 %v1347, %v1348
  %v1350 = vand.u32 %v1349, 4294901760
  %1351 = vmatpush1.msra.mxu0 %v1350
  %1352 = vmatprep.subr.mxu0 0.0
  %v1353 = vand.u32 %v192, 4294901760
  %v1354 = vsub.f32 %v192, %v1353
  %v1355 = vand.u32 %v1354, 4294901760
  %v1356 = vsub.f32 %v1354, %v1355
  %v1357 = vand.u32 %v1356, 4294901760
  %1358 = vmatpush1.msra.mxu0 %v1357
  %1359 = vmatprep.subr.mxu0 0.0
  %v1360 = vand.u32 %v193, 4294901760
  %v1361 = vsub.f32 %v193, %v1360
  %v1362 = vand.u32 %v1361, 4294901760
  %v1363 = vsub.f32 %v1361, %v1362
  %v1364 = vand.u32 %v1363, 4294901760
  %1365 = vmatpush1.msra.mxu0 %v1364
  %1366 = vmatprep.subr.mxu0 0.0
  %v1367 = vand.u32 %v194, 4294901760
  %v1368 = vsub.f32 %v194, %v1367
  %v1369 = vand.u32 %v1368, 4294901760
  %v1370 = vsub.f32 %v1368, %v1369
  %v1371 = vand.u32 %v1370, 4294901760
  %1372 = vmatpush1.msra.mxu0 %v1371
  %1373 = vmatprep.subr.mxu0 0.0
  %v1374 = vand.u32 %v195, 4294901760
  %v1375 = vsub.f32 %v195, %v1374
  %v1376 = vand.u32 %v1375, 4294901760
  %v1377 = vsub.f32 %v1375, %v1376
  %v1378 = vand.u32 %v1377, 4294901760
  %1379 = vmatpush1.msra.mxu0 %v1378
  %1380 = vmatprep.subr.mxu0 0.0
  %v1381 = vand.u32 %v196, 4294901760
  %v1382 = vsub.f32 %v196, %v1381
  %v1383 = vand.u32 %v1382, 4294901760
  %v1384 = vsub.f32 %v1382, %v1383
  %v1385 = vand.u32 %v1384, 4294901760
  %1386 = vmatpush1.msra.mxu0 %v1385
  %1387 = vmatprep.subr.mxu0 0.0
  %v1388 = vand.u32 %v197, 4294901760
  %v1389 = vsub.f32 %v197, %v1388
  %v1390 = vand.u32 %v1389, 4294901760
  %v1391 = vsub.f32 %v1389, %v1390
  %v1392 = vand.u32 %v1391, 4294901760
  %1393 = vmatpush1.msra.mxu0 %v1392
  %1394 = vmatprep.subr.mxu0 0.0
  %v1395 = vand.u32 %v198, 4294901760
  %v1396 = vsub.f32 %v198, %v1395
  %v1397 = vand.u32 %v1396, 4294901760
  %v1398 = vsub.f32 %v1396, %v1397
  %v1399 = vand.u32 %v1398, 4294901760
  %1400 = vmatpush1.msra.mxu0 %v1399
  %1401 = vmatprep.subr.mxu0 0.0
  %v1402 = vand.u32 %v199, 4294901760
  %v1403 = vsub.f32 %v199, %v1402
  %v1404 = vand.u32 %v1403, 4294901760
  %v1405 = vsub.f32 %v1403, %v1404
  %v1406 = vand.u32 %v1405, 4294901760
  %1407 = vmatpush1.msra.mxu0 %v1406
  %1408 = vmatprep.subr.mxu0 0.0
  %v1409 = vand.u32 %v200, 4294901760
  %v1410 = vsub.f32 %v200, %v1409
  %v1411 = vand.u32 %v1410, 4294901760
  %v1412 = vsub.f32 %v1410, %v1411
  %v1413 = vand.u32 %v1412, 4294901760
  %1414 = vmatpush1.msra.mxu0 %v1413
  %1415 = vmatprep.subr.mxu0 0.0
  %v1416 = vand.u32 %v201, 4294901760
  %v1417 = vsub.f32 %v201, %v1416
  %v1418 = vand.u32 %v1417, 4294901760
  %v1419 = vsub.f32 %v1417, %v1418
  %v1420 = vand.u32 %v1419, 4294901760
  %1421 = vmatpush1.msra.mxu0 %v1420
  %1422 = vmatprep.subr.mxu0 0.0
  %v1423 = vand.u32 %v202, 4294901760
  %v1424 = vsub.f32 %v202, %v1423
  %v1425 = vand.u32 %v1424, 4294901760
  %v1426 = vsub.f32 %v1424, %v1425
  %v1427 = vand.u32 %v1426, 4294901760
  %1428 = vmatpush1.msra.mxu0 %v1427
  %1429 = vmatprep.subr.mxu0 0.0
  %v1430 = vand.u32 %v203, 4294901760
  %v1431 = vsub.f32 %v203, %v1430
  %v1432 = vand.u32 %v1431, 4294901760
  %v1433 = vsub.f32 %v1431, %v1432
  %v1434 = vand.u32 %v1433, 4294901760
  %1435 = vmatpush1.msra.mxu0 %v1434
  %1436 = vmatprep.subr.mxu0 0.0
  %v1437 = vand.u32 %v204, 4294901760
  %v1438 = vsub.f32 %v204, %v1437
  %v1439 = vand.u32 %v1438, 4294901760
  %v1440 = vsub.f32 %v1438, %v1439
  %v1441 = vand.u32 %v1440, 4294901760
  %1442 = vmatpush1.msra.mxu0 %v1441
  %1443 = vmatprep.subr.mxu0 0.0
  %v1444 = vand.u32 %v205, 4294901760
  %v1445 = vsub.f32 %v205, %v1444
  %v1446 = vand.u32 %v1445, 4294901760
  %v1447 = vsub.f32 %v1445, %v1446
  %v1448 = vand.u32 %v1447, 4294901760
  %1449 = vmatpush1.msra.mxu0 %v1448
  %1450 = vmatprep.subr.mxu0 0.0
  %v1451 = vand.u32 %v206, 4294901760
  %v1452 = vsub.f32 %v206, %v1451
  %v1453 = vand.u32 %v1452, 4294901760
  %v1454 = vsub.f32 %v1452, %v1453
  %v1455 = vand.u32 %v1454, 4294901760
  %1456 = vmatpush1.msra.mxu0 %v1455
  %1457 = vmatprep.subr.mxu0 0.0
  %v1458 = vand.u32 %v207, 4294901760
  %v1459 = vsub.f32 %v207, %v1458
  %v1460 = vand.u32 %v1459, 4294901760
  %v1461 = vsub.f32 %v1459, %v1460
  %v1462 = vand.u32 %v1461, 4294901760
  %1463 = vmatpush1.msra.mxu0 %v1462
  %1464 = vmatprep.subr.mxu0 0.0
  %v1465 = vand.u32 %v208, 4294901760
  %v1466 = vsub.f32 %v208, %v1465
  %v1467 = vand.u32 %v1466, 4294901760
  %v1468 = vsub.f32 %v1466, %v1467
  %v1469 = vand.u32 %v1468, 4294901760
  %1470 = vmatpush1.msra.mxu0 %v1469
  %v1471 = vand.u32 %v144, 4294901760
  %1472 = vmatprep.mubr.f32.mxu0 %v1471
  %v1473 = vand.u32 %v143, 4294901760
  %1474 = vmatmul.mubr.f32.gmra.mrb[0].mxu0 %v1473
  %v1475 = vpop.f32.mrb[0].mxu0
  %v1476 = vadd.f32 %v1244, %v1475
  %v1477 = vpop.f32.mrb[0].mxu0
  %1478 = vdwg.mxu0
  %1479 = vmatprep.subr.mxu0 0.0
  %v1480 = vand.u32 %v177, 4294901760
  %v1481 = vsub.f32 %v177, %v1480
  %1482 = vmatpush1.msra.mxu0 %v1481
  %1483 = vmatprep.subr.mxu0 0.0
  %v1484 = vand.u32 %v178, 4294901760
  %v1485 = vsub.f32 %v178, %v1484
  %1486 = vmatpush1.msra.mxu0 %v1485
  %1487 = vmatprep.subr.mxu0 0.0
  %v1488 = vand.u32 %v179, 4294901760
  %v1489 = vsub.f32 %v179, %v1488
  %1490 = vmatpush1.msra.mxu0 %v1489
  %1491 = vmatprep.subr.mxu0 0.0
  %v1492 = vand.u32 %v180, 4294901760
  %v1493 = vsub.f32 %v180, %v1492
  %1494 = vmatpush1.msra.mxu0 %v1493
  %1495 = vmatprep.subr.mxu0 0.0
  %v1496 = vand.u32 %v181, 4294901760
  %v1497 = vsub.f32 %v181, %v1496
  %1498 = vmatpush1.msra.mxu0 %v1497
  %1499 = vmatprep.subr.mxu0 0.0
  %v1500 = vand.u32 %v182, 4294901760
  %v1501 = vsub.f32 %v182, %v1500
  %1502 = vmatpush1.msra.mxu0 %v1501
  %1503 = vmatprep.subr.mxu0 0.0
  %v1504 = vand.u32 %v183, 4294901760
  %v1505 = vsub.f32 %v183, %v1504
  %1506 = vmatpush1.msra.mxu0 %v1505
  %1507 = vmatprep.subr.mxu0 0.0
  %v1508 = vand.u32 %v184, 4294901760
  %v1509 = vsub.f32 %v184, %v1508
  %1510 = vmatpush1.msra.mxu0 %v1509
  %1511 = vmatprep.subr.mxu0 0.0
  %v1512 = vand.u32 %v185, 4294901760
  %v1513 = vsub.f32 %v185, %v1512
  %1514 = vmatpush1.msra.mxu0 %v1513
  %1515 = vmatprep.subr.mxu0 0.0
  %v1516 = vand.u32 %v186, 4294901760
  %v1517 = vsub.f32 %v186, %v1516
  %1518 = vmatpush1.msra.mxu0 %v1517
  %1519 = vmatprep.subr.mxu0 0.0
  %v1520 = vand.u32 %v187, 4294901760
  %v1521 = vsub.f32 %v187, %v1520
  %1522 = vmatpush1.msra.mxu0 %v1521
  %1523 = vmatprep.subr.mxu0 0.0
  %v1524 = vand.u32 %v188, 4294901760
  %v1525 = vsub.f32 %v188, %v1524
  %1526 = vmatpush1.msra.mxu0 %v1525
  %1527 = vmatprep.subr.mxu0 0.0
  %v1528 = vand.u32 %v189, 4294901760
  %v1529 = vsub.f32 %v189, %v1528
  %1530 = vmatpush1.msra.mxu0 %v1529
  %1531 = vmatprep.subr.mxu0 0.0
  %v1532 = vand.u32 %v190, 4294901760
  %v1533 = vsub.f32 %v190, %v1532
  %1534 = vmatpush1.msra.mxu0 %v1533
  %1535 = vmatprep.subr.mxu0 0.0
  %v1536 = vand.u32 %v191, 4294901760
  %v1537 = vsub.f32 %v191, %v1536
  %1538 = vmatpush1.msra.mxu0 %v1537
  %1539 = vmatprep.subr.mxu0 0.0
  %v1540 = vand.u32 %v192, 4294901760
  %v1541 = vsub.f32 %v192, %v1540
  %1542 = vmatpush1.msra.mxu0 %v1541
  %1543 = vmatprep.subr.mxu0 0.0
  %v1544 = vand.u32 %v193, 4294901760
  %v1545 = vsub.f32 %v193, %v1544
  %1546 = vmatpush1.msra.mxu0 %v1545
  %1547 = vmatprep.subr.mxu0 0.0
  %v1548 = vand.u32 %v194, 4294901760
  %v1549 = vsub.f32 %v194, %v1548
  %1550 = vmatpush1.msra.mxu0 %v1549
  %1551 = vmatprep.subr.mxu0 0.0
  %v1552 = vand.u32 %v195, 4294901760
  %v1553 = vsub.f32 %v195, %v1552
  %1554 = vmatpush1.msra.mxu0 %v1553
  %1555 = vmatprep.subr.mxu0 0.0
  %v1556 = vand.u32 %v196, 4294901760
  %v1557 = vsub.f32 %v196, %v1556
  %1558 = vmatpush1.msra.mxu0 %v1557
  %1559 = vmatprep.subr.mxu0 0.0
  %v1560 = vand.u32 %v197, 4294901760
  %v1561 = vsub.f32 %v197, %v1560
  %1562 = vmatpush1.msra.mxu0 %v1561
  %1563 = vmatprep.subr.mxu0 0.0
  %v1564 = vand.u32 %v198, 4294901760
  %v1565 = vsub.f32 %v198, %v1564
  %1566 = vmatpush1.msra.mxu0 %v1565
  %1567 = vmatprep.subr.mxu0 0.0
  %v1568 = vand.u32 %v199, 4294901760
  %v1569 = vsub.f32 %v199, %v1568
  %1570 = vmatpush1.msra.mxu0 %v1569
  %1571 = vmatprep.subr.mxu0 0.0
  %v1572 = vand.u32 %v200, 4294901760
  %v1573 = vsub.f32 %v200, %v1572
  %1574 = vmatpush1.msra.mxu0 %v1573
  %1575 = vmatprep.subr.mxu0 0.0
  %v1576 = vand.u32 %v201, 4294901760
  %v1577 = vsub.f32 %v201, %v1576
  %1578 = vmatpush1.msra.mxu0 %v1577
  %1579 = vmatprep.subr.mxu0 0.0
  %v1580 = vand.u32 %v202, 4294901760
  %v1581 = vsub.f32 %v202, %v1580
  %1582 = vmatpush1.msra.mxu0 %v1581
  %1583 = vmatprep.subr.mxu0 0.0
  %v1584 = vand.u32 %v203, 4294901760
  %v1585 = vsub.f32 %v203, %v1584
  %1586 = vmatpush1.msra.mxu0 %v1585
  %1587 = vmatprep.subr.mxu0 0.0
  %v1588 = vand.u32 %v204, 4294901760
  %v1589 = vsub.f32 %v204, %v1588
  %1590 = vmatpush1.msra.mxu0 %v1589
  %1591 = vmatprep.subr.mxu0 0.0
  %v1592 = vand.u32 %v205, 4294901760
  %v1593 = vsub.f32 %v205, %v1592
  %1594 = vmatpush1.msra.mxu0 %v1593
  %1595 = vmatprep.subr.mxu0 0.0
  %v1596 = vand.u32 %v206, 4294901760
  %v1597 = vsub.f32 %v206, %v1596
  %1598 = vmatpush1.msra.mxu0 %v1597
  %1599 = vmatprep.subr.mxu0 0.0
  %v1600 = vand.u32 %v207, 4294901760
  %v1601 = vsub.f32 %v207, %v1600
  %1602 = vmatpush1.msra.mxu0 %v1601
  %1603 = vmatprep.subr.mxu0 0.0
  %v1604 = vand.u32 %v208, 4294901760
  %v1605 = vsub.f32 %v208, %v1604
  %1606 = vmatpush1.msra.mxu0 %v1605
  %v1607 = vand.u32 %v144, 4294901760
  %v1608 = vsub.f32 %v144, %v1607
  %1609 = vmatprep.mubr.f32.mxu0 %v1608
  %v1610 = vand.u32 %v143, 4294901760
  %v1611 = vsub.f32 %v143, %v1610
  %1612 = vmatmul.mubr.f32.gmra.mrb[0].mxu0 %v1611
  %v1613 = vpop.f32.mrb[0].mxu0
  %v1614 = vadd.f32 %v1476, %v1613
  %v1615 = vpop.f32.mrb[0].mxu0
  %1616 = vdwg.mxu0
  %1617 = vmatprep.subr.mxu0 0.0
  %v1618 = vand.u32 %v177, 4294901760
  %1619 = vmatpush1.msra.mxu0 %v1618
  %1620 = vmatprep.subr.mxu0 0.0
  %v1621 = vand.u32 %v178, 4294901760
  %1622 = vmatpush1.msra.mxu0 %v1621
  %1623 = vmatprep.subr.mxu0 0.0
  %v1624 = vand.u32 %v179, 4294901760
  %1625 = vmatpush1.msra.mxu0 %v1624
  %1626 = vmatprep.subr.mxu0 0.0
  %v1627 = vand.u32 %v180, 4294901760
  %1628 = vmatpush1.msra.mxu0 %v1627
  %1629 = vmatprep.subr.mxu0 0.0
  %v1630 = vand.u32 %v181, 4294901760
  %1631 = vmatpush1.msra.mxu0 %v1630
  %1632 = vmatprep.subr.mxu0 0.0
  %v1633 = vand.u32 %v182, 4294901760
  %1634 = vmatpush1.msra.mxu0 %v1633
  %1635 = vmatprep.subr.mxu0 0.0
  %v1636 = vand.u32 %v183, 4294901760
  %1637 = vmatpush1.msra.mxu0 %v1636
  %1638 = vmatprep.subr.mxu0 0.0
  %v1639 = vand.u32 %v184, 4294901760
  %1640 = vmatpush1.msra.mxu0 %v1639
  %1641 = vmatprep.subr.mxu0 0.0
  %v1642 = vand.u32 %v185, 4294901760
  %1643 = vmatpush1.msra.mxu0 %v1642
  %1644 = vmatprep.subr.mxu0 0.0
  %v1645 = vand.u32 %v186, 4294901760
  %1646 = vmatpush1.msra.mxu0 %v1645
  %1647 = vmatprep.subr.mxu0 0.0
  %v1648 = vand.u32 %v187, 4294901760
  %1649 = vmatpush1.msra.mxu0 %v1648
  %1650 = vmatprep.subr.mxu0 0.0
  %v1651 = vand.u32 %v188, 4294901760
  %1652 = vmatpush1.msra.mxu0 %v1651
  %1653 = vmatprep.subr.mxu0 0.0
  %v1654 = vand.u32 %v189, 4294901760
  %1655 = vmatpush1.msra.mxu0 %v1654
  %1656 = vmatprep.subr.mxu0 0.0
  %v1657 = vand.u32 %v190, 4294901760
  %1658 = vmatpush1.msra.mxu0 %v1657
  %1659 = vmatprep.subr.mxu0 0.0
  %v1660 = vand.u32 %v191, 4294901760
  %1661 = vmatpush1.msra.mxu0 %v1660
  %1662 = vmatprep.subr.mxu0 0.0
  %v1663 = vand.u32 %v192, 4294901760
  %1664 = vmatpush1.msra.mxu0 %v1663
  %1665 = vmatprep.subr.mxu0 0.0
  %v1666 = vand.u32 %v193, 4294901760
  %1667 = vmatpush1.msra.mxu0 %v1666
  %1668 = vmatprep.subr.mxu0 0.0
  %v1669 = vand.u32 %v194, 4294901760
  %1670 = vmatpush1.msra.mxu0 %v1669
  %1671 = vmatprep.subr.mxu0 0.0
  %v1672 = vand.u32 %v195, 4294901760
  %1673 = vmatpush1.msra.mxu0 %v1672
  %1674 = vmatprep.subr.mxu0 0.0
  %v1675 = vand.u32 %v196, 4294901760
  %1676 = vmatpush1.msra.mxu0 %v1675
  %1677 = vmatprep.subr.mxu0 0.0
  %v1678 = vand.u32 %v197, 4294901760
  %1679 = vmatpush1.msra.mxu0 %v1678
  %1680 = vmatprep.subr.mxu0 0.0
  %v1681 = vand.u32 %v198, 4294901760
  %1682 = vmatpush1.msra.mxu0 %v1681
  %1683 = vmatprep.subr.mxu0 0.0
  %v1684 = vand.u32 %v199, 4294901760
  %1685 = vmatpush1.msra.mxu0 %v1684
  %1686 = vmatprep.subr.mxu0 0.0
  %v1687 = vand.u32 %v200, 4294901760
  %1688 = vmatpush1.msra.mxu0 %v1687
  %1689 = vmatprep.subr.mxu0 0.0
  %v1690 = vand.u32 %v201, 4294901760
  %1691 = vmatpush1.msra.mxu0 %v1690
  %1692 = vmatprep.subr.mxu0 0.0
  %v1693 = vand.u32 %v202, 4294901760
  %1694 = vmatpush1.msra.mxu0 %v1693
  %1695 = vmatprep.subr.mxu0 0.0
  %v1696 = vand.u32 %v203, 4294901760
  %1697 = vmatpush1.msra.mxu0 %v1696
  %1698 = vmatprep.subr.mxu0 0.0
  %v1699 = vand.u32 %v204, 4294901760
  %1700 = vmatpush1.msra.mxu0 %v1699
  %1701 = vmatprep.subr.mxu0 0.0
  %v1702 = vand.u32 %v205, 4294901760
  %1703 = vmatpush1.msra.mxu0 %v1702
  %1704 = vmatprep.subr.mxu0 0.0
  %v1705 = vand.u32 %v206, 4294901760
  %1706 = vmatpush1.msra.mxu0 %v1705
  %1707 = vmatprep.subr.mxu0 0.0
  %v1708 = vand.u32 %v207, 4294901760
  %1709 = vmatpush1.msra.mxu0 %v1708
  %1710 = vmatprep.subr.mxu0 0.0
  %v1711 = vand.u32 %v208, 4294901760
  %1712 = vmatpush1.msra.mxu0 %v1711
  %v1713 = vand.u32 %v144, 4294901760
  %v1714 = vsub.f32 %v144, %v1713
  %v1715 = vand.u32 %v1714, 4294901760
  %1716 = vmatprep.mubr.f32.mxu0 %v1715
  %v1717 = vand.u32 %v143, 4294901760
  %v1718 = vsub.f32 %v143, %v1717
  %v1719 = vand.u32 %v1718, 4294901760
  %1720 = vmatmul.mubr.f32.gmra.mrb[0].mxu0 %v1719
  %v1721 = vpop.f32.mrb[0].mxu0
  %v1722 = vadd.f32 %v1614, %v1721
  %v1723 = vpop.f32.mrb[0].mxu0
  %1724 = vdwg.mxu0
  %1725 = vmatprep.subr.mxu0 0.0
  %v1726 = vand.u32 %v177, 4294901760
  %v1727 = vsub.f32 %v177, %v1726
  %v1728 = vand.u32 %v1727, 4294901760
  %1729 = vmatpush1.msra.mxu0 %v1728
  %1730 = vmatprep.subr.mxu0 0.0
  %v1731 = vand.u32 %v178, 4294901760
  %v1732 = vsub.f32 %v178, %v1731
  %v1733 = vand.u32 %v1732, 4294901760
  %1734 = vmatpush1.msra.mxu0 %v1733
  %1735 = vmatprep.subr.mxu0 0.0
  %v1736 = vand.u32 %v179, 4294901760
  %v1737 = vsub.f32 %v179, %v1736
  %v1738 = vand.u32 %v1737, 4294901760
  %1739 = vmatpush1.msra.mxu0 %v1738
  %1740 = vmatprep.subr.mxu0 0.0
  %v1741 = vand.u32 %v180, 4294901760
  %v1742 = vsub.f32 %v180, %v1741
  %v1743 = vand.u32 %v1742, 4294901760
  %1744 = vmatpush1.msra.mxu0 %v1743
  %1745 = vmatprep.subr.mxu0 0.0
  %v1746 = vand.u32 %v181, 4294901760
  %v1747 = vsub.f32 %v181, %v1746
  %v1748 = vand.u32 %v1747, 4294901760
  %1749 = vmatpush1.msra.mxu0 %v1748
  %1750 = vmatprep.subr.mxu0 0.0
  %v1751 = vand.u32 %v182, 4294901760
  %v1752 = vsub.f32 %v182, %v1751
  %v1753 = vand.u32 %v1752, 4294901760
  %1754 = vmatpush1.msra.mxu0 %v1753
  %1755 = vmatprep.subr.mxu0 0.0
  %v1756 = vand.u32 %v183, 4294901760
  %v1757 = vsub.f32 %v183, %v1756
  %v1758 = vand.u32 %v1757, 4294901760
  %1759 = vmatpush1.msra.mxu0 %v1758
  %1760 = vmatprep.subr.mxu0 0.0
  %v1761 = vand.u32 %v184, 4294901760
  %v1762 = vsub.f32 %v184, %v1761
  %v1763 = vand.u32 %v1762, 4294901760
  %1764 = vmatpush1.msra.mxu0 %v1763
  %1765 = vmatprep.subr.mxu0 0.0
  %v1766 = vand.u32 %v185, 4294901760
  %v1767 = vsub.f32 %v185, %v1766
  %v1768 = vand.u32 %v1767, 4294901760
  %1769 = vmatpush1.msra.mxu0 %v1768
  %1770 = vmatprep.subr.mxu0 0.0
  %v1771 = vand.u32 %v186, 4294901760
  %v1772 = vsub.f32 %v186, %v1771
  %v1773 = vand.u32 %v1772, 4294901760
  %1774 = vmatpush1.msra.mxu0 %v1773
  %1775 = vmatprep.subr.mxu0 0.0
  %v1776 = vand.u32 %v187, 4294901760
  %v1777 = vsub.f32 %v187, %v1776
  %v1778 = vand.u32 %v1777, 4294901760
  %1779 = vmatpush1.msra.mxu0 %v1778
  %1780 = vmatprep.subr.mxu0 0.0
  %v1781 = vand.u32 %v188, 4294901760
  %v1782 = vsub.f32 %v188, %v1781
  %v1783 = vand.u32 %v1782, 4294901760
  %1784 = vmatpush1.msra.mxu0 %v1783
  %1785 = vmatprep.subr.mxu0 0.0
  %v1786 = vand.u32 %v189, 4294901760
  %v1787 = vsub.f32 %v189, %v1786
  %v1788 = vand.u32 %v1787, 4294901760
  %1789 = vmatpush1.msra.mxu0 %v1788
  %1790 = vmatprep.subr.mxu0 0.0
  %v1791 = vand.u32 %v190, 4294901760
  %v1792 = vsub.f32 %v190, %v1791
  %v1793 = vand.u32 %v1792, 4294901760
  %1794 = vmatpush1.msra.mxu0 %v1793
  %1795 = vmatprep.subr.mxu0 0.0
  %v1796 = vand.u32 %v191, 4294901760
  %v1797 = vsub.f32 %v191, %v1796
  %v1798 = vand.u32 %v1797, 4294901760
  %1799 = vmatpush1.msra.mxu0 %v1798
  %1800 = vmatprep.subr.mxu0 0.0
  %v1801 = vand.u32 %v192, 4294901760
  %v1802 = vsub.f32 %v192, %v1801
  %v1803 = vand.u32 %v1802, 4294901760
  %1804 = vmatpush1.msra.mxu0 %v1803
  %1805 = vmatprep.subr.mxu0 0.0
  %v1806 = vand.u32 %v193, 4294901760
  %v1807 = vsub.f32 %v193, %v1806
  %v1808 = vand.u32 %v1807, 4294901760
  %1809 = vmatpush1.msra.mxu0 %v1808
  %1810 = vmatprep.subr.mxu0 0.0
  %v1811 = vand.u32 %v194, 4294901760
  %v1812 = vsub.f32 %v194, %v1811
  %v1813 = vand.u32 %v1812, 4294901760
  %1814 = vmatpush1.msra.mxu0 %v1813
  %1815 = vmatprep.subr.mxu0 0.0
  %v1816 = vand.u32 %v195, 4294901760
  %v1817 = vsub.f32 %v195, %v1816
  %v1818 = vand.u32 %v1817, 4294901760
  %1819 = vmatpush1.msra.mxu0 %v1818
  %1820 = vmatprep.subr.mxu0 0.0
  %v1821 = vand.u32 %v196, 4294901760
  %v1822 = vsub.f32 %v196, %v1821
  %v1823 = vand.u32 %v1822, 4294901760
  %1824 = vmatpush1.msra.mxu0 %v1823
  %1825 = vmatprep.subr.mxu0 0.0
  %v1826 = vand.u32 %v197, 4294901760
  %v1827 = vsub.f32 %v197, %v1826
  %v1828 = vand.u32 %v1827, 4294901760
  %1829 = vmatpush1.msra.mxu0 %v1828
  %1830 = vmatprep.subr.mxu0 0.0
  %v1831 = vand.u32 %v198, 4294901760
  %v1832 = vsub.f32 %v198, %v1831
  %v1833 = vand.u32 %v1832, 4294901760
  %1834 = vmatpush1.msra.mxu0 %v1833
  %1835 = vmatprep.subr.mxu0 0.0
  %v1836 = vand.u32 %v199, 4294901760
  %v1837 = vsub.f32 %v199, %v1836
  %v1838 = vand.u32 %v1837, 4294901760
  %1839 = vmatpush1.msra.mxu0 %v1838
  %1840 = vmatprep.subr.mxu0 0.0
  %v1841 = vand.u32 %v200, 4294901760
  %v1842 = vsub.f32 %v200, %v1841
  %v1843 = vand.u32 %v1842, 4294901760
  %1844 = vmatpush1.msra.mxu0 %v1843
  %1845 = vmatprep.subr.mxu0 0.0
  %v1846 = vand.u32 %v201, 4294901760
  %v1847 = vsub.f32 %v201, %v1846
  %v1848 = vand.u32 %v1847, 4294901760
  %1849 = vmatpush1.msra.mxu0 %v1848
  %1850 = vmatprep.subr.mxu0 0.0
  %v1851 = vand.u32 %v202, 4294901760
  %v1852 = vsub.f32 %v202, %v1851
  %v1853 = vand.u32 %v1852, 4294901760
  %1854 = vmatpush1.msra.mxu0 %v1853
  %1855 = vmatprep.subr.mxu0 0.0
  %v1856 = vand.u32 %v203, 4294901760
  %v1857 = vsub.f32 %v203, %v1856
  %v1858 = vand.u32 %v1857, 4294901760
  %1859 = vmatpush1.msra.mxu0 %v1858
  %1860 = vmatprep.subr.mxu0 0.0
  %v1861 = vand.u32 %v204, 4294901760
  %v1862 = vsub.f32 %v204, %v1861
  %v1863 = vand.u32 %v1862, 4294901760
  %1864 = vmatpush1.msra.mxu0 %v1863
  %1865 = vmatprep.subr.mxu0 0.0
  %v1866 = vand.u32 %v205, 4294901760
  %v1867 = vsub.f32 %v205, %v1866
  %v1868 = vand.u32 %v1867, 4294901760
  %1869 = vmatpush1.msra.mxu0 %v1868
  %1870 = vmatprep.subr.mxu0 0.0
  %v1871 = vand.u32 %v206, 4294901760
  %v1872 = vsub.f32 %v206, %v1871
  %v1873 = vand.u32 %v1872, 4294901760
  %1874 = vmatpush1.msra.mxu0 %v1873
  %1875 = vmatprep.subr.mxu0 0.0
  %v1876 = vand.u32 %v207, 4294901760
  %v1877 = vsub.f32 %v207, %v1876
  %v1878 = vand.u32 %v1877, 4294901760
  %1879 = vmatpush1.msra.mxu0 %v1878
  %1880 = vmatprep.subr.mxu0 0.0
  %v1881 = vand.u32 %v208, 4294901760
  %v1882 = vsub.f32 %v208, %v1881
  %v1883 = vand.u32 %v1882, 4294901760
  %1884 = vmatpush1.msra.mxu0 %v1883
  %v1885 = vand.u32 %v144, 4294901760
  %1886 = vmatprep.mubr.f32.mxu0 %v1885
  %v1887 = vand.u32 %v143, 4294901760
  %1888 = vmatmul.mubr.f32.gmra.mrb[0].mxu0 %v1887
  %v1889 = vpop.f32.mrb[0].mxu0
  %v1890 = vadd.f32 %v1722, %v1889
  %v1891 = vpop.f32.mrb[0].mxu0
  %1892 = vdwg.mxu0
  %1893 = vmatprep.subr.mxu0 0.0
  %v1894 = vand.u32 %v177, 4294901760
  %1895 = vmatpush1.msra.mxu0 %v1894
  %1896 = vmatprep.subr.mxu0 0.0
  %v1897 = vand.u32 %v178, 4294901760
  %1898 = vmatpush1.msra.mxu0 %v1897
  %1899 = vmatprep.subr.mxu0 0.0
  %v1900 = vand.u32 %v179, 4294901760
  %1901 = vmatpush1.msra.mxu0 %v1900
  %1902 = vmatprep.subr.mxu0 0.0
  %v1903 = vand.u32 %v180, 4294901760
  %1904 = vmatpush1.msra.mxu0 %v1903
  %1905 = vmatprep.subr.mxu0 0.0
  %v1906 = vand.u32 %v181, 4294901760
  %1907 = vmatpush1.msra.mxu0 %v1906
  %1908 = vmatprep.subr.mxu0 0.0
  %v1909 = vand.u32 %v182, 4294901760
  %1910 = vmatpush1.msra.mxu0 %v1909
  %1911 = vmatprep.subr.mxu0 0.0
  %v1912 = vand.u32 %v183, 4294901760
  %1913 = vmatpush1.msra.mxu0 %v1912
  %1914 = vmatprep.subr.mxu0 0.0
  %v1915 = vand.u32 %v184, 4294901760
  %1916 = vmatpush1.msra.mxu0 %v1915
  %1917 = vmatprep.subr.mxu0 0.0
  %v1918 = vand.u32 %v185, 4294901760
  %1919 = vmatpush1.msra.mxu0 %v1918
  %1920 = vmatprep.subr.mxu0 0.0
  %v1921 = vand.u32 %v186, 4294901760
  %1922 = vmatpush1.msra.mxu0 %v1921
  %1923 = vmatprep.subr.mxu0 0.0
  %v1924 = vand.u32 %v187, 4294901760
  %1925 = vmatpush1.msra.mxu0 %v1924
  %1926 = vmatprep.subr.mxu0 0.0
  %v1927 = vand.u32 %v188, 4294901760
  %1928 = vmatpush1.msra.mxu0 %v1927
  %1929 = vmatprep.subr.mxu0 0.0
  %v1930 = vand.u32 %v189, 4294901760
  %1931 = vmatpush1.msra.mxu0 %v1930
  %1932 = vmatprep.subr.mxu0 0.0
  %v1933 = vand.u32 %v190, 4294901760
  %1934 = vmatpush1.msra.mxu0 %v1933
  %1935 = vmatprep.subr.mxu0 0.0
  %v1936 = vand.u32 %v191, 4294901760
  %1937 = vmatpush1.msra.mxu0 %v1936
  %1938 = vmatprep.subr.mxu0 0.0
  %v1939 = vand.u32 %v192, 4294901760
  %1940 = vmatpush1.msra.mxu0 %v1939
  %1941 = vmatprep.subr.mxu0 0.0
  %v1942 = vand.u32 %v193, 4294901760
  %1943 = vmatpush1.msra.mxu0 %v1942
  %1944 = vmatprep.subr.mxu0 0.0
  %v1945 = vand.u32 %v194, 4294901760
  %1946 = vmatpush1.msra.mxu0 %v1945
  %1947 = vmatprep.subr.mxu0 0.0
  %v1948 = vand.u32 %v195, 4294901760
  %1949 = vmatpush1.msra.mxu0 %v1948
  %1950 = vmatprep.subr.mxu0 0.0
  %v1951 = vand.u32 %v196, 4294901760
  %1952 = vmatpush1.msra.mxu0 %v1951
  %1953 = vmatprep.subr.mxu0 0.0
  %v1954 = vand.u32 %v197, 4294901760
  %1955 = vmatpush1.msra.mxu0 %v1954
  %1956 = vmatprep.subr.mxu0 0.0
  %v1957 = vand.u32 %v198, 4294901760
  %1958 = vmatpush1.msra.mxu0 %v1957
  %1959 = vmatprep.subr.mxu0 0.0
  %v1960 = vand.u32 %v199, 4294901760
  %1961 = vmatpush1.msra.mxu0 %v1960
  %1962 = vmatprep.subr.mxu0 0.0
  %v1963 = vand.u32 %v200, 4294901760
  %1964 = vmatpush1.msra.mxu0 %v1963
  %1965 = vmatprep.subr.mxu0 0.0
  %v1966 = vand.u32 %v201, 4294901760
  %1967 = vmatpush1.msra.mxu0 %v1966
  %1968 = vmatprep.subr.mxu0 0.0
  %v1969 = vand.u32 %v202, 4294901760
  %1970 = vmatpush1.msra.mxu0 %v1969
  %1971 = vmatprep.subr.mxu0 0.0
  %v1972 = vand.u32 %v203, 4294901760
  %1973 = vmatpush1.msra.mxu0 %v1972
  %1974 = vmatprep.subr.mxu0 0.0
  %v1975 = vand.u32 %v204, 4294901760
  %1976 = vmatpush1.msra.mxu0 %v1975
  %1977 = vmatprep.subr.mxu0 0.0
  %v1978 = vand.u32 %v205, 4294901760
  %1979 = vmatpush1.msra.mxu0 %v1978
  %1980 = vmatprep.subr.mxu0 0.0
  %v1981 = vand.u32 %v206, 4294901760
  %1982 = vmatpush1.msra.mxu0 %v1981
  %1983 = vmatprep.subr.mxu0 0.0
  %v1984 = vand.u32 %v207, 4294901760
  %1985 = vmatpush1.msra.mxu0 %v1984
  %1986 = vmatprep.subr.mxu0 0.0
  %v1987 = vand.u32 %v208, 4294901760
  %1988 = vmatpush1.msra.mxu0 %v1987
  %v1989 = vand.u32 %v144, 4294901760
  %1990 = vmatprep.mubr.f32.mxu0 %v1989
  %v1991 = vand.u32 %v143, 4294901760
  %1992 = vmatmul.mubr.f32.gmra.mrb[0].mxu0 %v1991
  %v1993 = vpop.f32.mrb[0].mxu0
  %v1994 = vadd.f32 %v1890, %v1993
  %v1995 = vpop.f32.mrb[0].mxu0
  %1996 = vdwg.mxu0
  %1997 = vmatprep.subr.mxu0 0.0
  %v1998 = vand.u32 %v209, 4294901760
  %1999 = vmatpush1.msra.mxu0 %v1998
  %2000 = vmatprep.subr.mxu0 0.0
  %v2001 = vand.u32 %v210, 4294901760
  %2002 = vmatpush1.msra.mxu0 %v2001
  %2003 = vmatprep.subr.mxu0 0.0
  %v2004 = vand.u32 %v211, 4294901760
  %2005 = vmatpush1.msra.mxu0 %v2004
  %2006 = vmatprep.subr.mxu0 0.0
  %v2007 = vand.u32 %v212, 4294901760
  %2008 = vmatpush1.msra.mxu0 %v2007
  %2009 = vmatprep.subr.mxu0 0.0
  %v2010 = vand.u32 %v213, 4294901760
  %2011 = vmatpush1.msra.mxu0 %v2010
  %2012 = vmatprep.subr.mxu0 0.0
  %v2013 = vand.u32 %v214, 4294901760
  %2014 = vmatpush1.msra.mxu0 %v2013
  %2015 = vmatprep.subr.mxu0 0.0
  %v2016 = vand.u32 %v215, 4294901760
  %2017 = vmatpush1.msra.mxu0 %v2016
  %2018 = vmatprep.subr.mxu0 0.0
  %v2019 = vand.u32 %v216, 4294901760
  %2020 = vmatpush1.msra.mxu0 %v2019
  %2021 = vmatprep.subr.mxu0 0.0
  %v2022 = vand.u32 %v217, 4294901760
  %2023 = vmatpush1.msra.mxu0 %v2022
  %2024 = vmatprep.subr.mxu0 0.0
  %v2025 = vand.u32 %v218, 4294901760
  %2026 = vmatpush1.msra.mxu0 %v2025
  %2027 = vmatprep.subr.mxu0 0.0
  %v2028 = vand.u32 %v219, 4294901760
  %2029 = vmatpush1.msra.mxu0 %v2028
  %2030 = vmatprep.subr.mxu0 0.0
  %v2031 = vand.u32 %v220, 4294901760
  %2032 = vmatpush1.msra.mxu0 %v2031
  %2033 = vmatprep.subr.mxu0 0.0
  %v2034 = vand.u32 %v221, 4294901760
  %2035 = vmatpush1.msra.mxu0 %v2034
  %2036 = vmatprep.subr.mxu0 0.0
  %v2037 = vand.u32 %v222, 4294901760
  %2038 = vmatpush1.msra.mxu0 %v2037
  %2039 = vmatprep.subr.mxu0 0.0
  %v2040 = vand.u32 %v223, 4294901760
  %2041 = vmatpush1.msra.mxu0 %v2040
  %2042 = vmatprep.subr.mxu0 0.0
  %v2043 = vand.u32 %v224, 4294901760
  %2044 = vmatpush1.msra.mxu0 %v2043
  %2045 = vmatprep.subr.mxu0 0.0
  %v2046 = vand.u32 %v225, 4294901760
  %2047 = vmatpush1.msra.mxu0 %v2046
  %2048 = vmatprep.subr.mxu0 0.0
  %v2049 = vand.u32 %v226, 4294901760
  %2050 = vmatpush1.msra.mxu0 %v2049
  %2051 = vmatprep.subr.mxu0 0.0
  %v2052 = vand.u32 %v227, 4294901760
  %2053 = vmatpush1.msra.mxu0 %v2052
  %2054 = vmatprep.subr.mxu0 0.0
  %v2055 = vand.u32 %v228, 4294901760
  %2056 = vmatpush1.msra.mxu0 %v2055
  %2057 = vmatprep.subr.mxu0 0.0
  %v2058 = vand.u32 %v229, 4294901760
  %2059 = vmatpush1.msra.mxu0 %v2058
  %2060 = vmatprep.subr.mxu0 0.0
  %v2061 = vand.u32 %v230, 4294901760
  %2062 = vmatpush1.msra.mxu0 %v2061
  %2063 = vmatprep.subr.mxu0 0.0
  %v2064 = vand.u32 %v231, 4294901760
  %2065 = vmatpush1.msra.mxu0 %v2064
  %2066 = vmatprep.subr.mxu0 0.0
  %v2067 = vand.u32 %v232, 4294901760
  %2068 = vmatpush1.msra.mxu0 %v2067
  %2069 = vmatprep.subr.mxu0 0.0
  %v2070 = vand.u32 %v233, 4294901760
  %2071 = vmatpush1.msra.mxu0 %v2070
  %2072 = vmatprep.subr.mxu0 0.0
  %v2073 = vand.u32 %v234, 4294901760
  %2074 = vmatpush1.msra.mxu0 %v2073
  %2075 = vmatprep.subr.mxu0 0.0
  %v2076 = vand.u32 %v235, 4294901760
  %2077 = vmatpush1.msra.mxu0 %v2076
  %2078 = vmatprep.subr.mxu0 0.0
  %v2079 = vand.u32 %v236, 4294901760
  %2080 = vmatpush1.msra.mxu0 %v2079
  %2081 = vmatprep.subr.mxu0 0.0
  %v2082 = vand.u32 %v237, 4294901760
  %2083 = vmatpush1.msra.mxu0 %v2082
  %2084 = vmatprep.subr.mxu0 0.0
  %v2085 = vand.u32 %v238, 4294901760
  %2086 = vmatpush1.msra.mxu0 %v2085
  %2087 = vmatprep.subr.mxu0 0.0
  %v2088 = vand.u32 %v239, 4294901760
  %2089 = vmatpush1.msra.mxu0 %v2088
  %2090 = vmatprep.subr.mxu0 0.0
  %v2091 = vand.u32 %v240, 4294901760
  %2092 = vmatpush1.msra.mxu0 %v2091
  %v2093 = vand.u32 %v142, 4294901760
  %v2094 = vsub.f32 %v142, %v2093
  %v2095 = vand.u32 %v2094, 4294901760
  %v2096 = vsub.f32 %v2094, %v2095
  %v2097 = vand.u32 %v2096, 4294901760
  %2098 = vmatprep.mubr.f32.mxu0 %v2097
  %v2099 = vand.u32 %v141, 4294901760
  %v2100 = vsub.f32 %v141, %v2099
  %v2101 = vand.u32 %v2100, 4294901760
  %v2102 = vsub.f32 %v2100, %v2101
  %v2103 = vand.u32 %v2102, 4294901760
  %2104 = vmatmul.mubr.f32.gmra.mrb[0].mxu0 %v2103
  %v2105 = vpop.f32.mrb[0].mxu0
  %v2106 = vadd.f32 0.0, %v2105
  %v2107 = vpop.f32.mrb[0].mxu0
  %2108 = vdwg.mxu0
  %2109 = vmatprep.subr.mxu0 0.0
  %v2110 = vand.u32 %v209, 4294901760
  %v2111 = vsub.f32 %v209, %v2110
  %v2112 = vand.u32 %v2111, 4294901760
  %v2113 = vsub.f32 %v2111, %v2112
  %v2114 = vand.u32 %v2113, 4294901760
  %2115 = vmatpush1.msra.mxu0 %v2114
  %2116 = vmatprep.subr.mxu0 0.0
  %v2117 = vand.u32 %v210, 4294901760
  %v2118 = vsub.f32 %v210, %v2117
  %v2119 = vand.u32 %v2118, 4294901760
  %v2120 = vsub.f32 %v2118, %v2119
  %v2121 = vand.u32 %v2120, 4294901760
  %2122 = vmatpush1.msra.mxu0 %v2121
  %2123 = vmatprep.subr.mxu0 0.0
  %v2124 = vand.u32 %v211, 4294901760
  %v2125 = vsub.f32 %v211, %v2124
  %v2126 = vand.u32 %v2125, 4294901760
  %v2127 = vsub.f32 %v2125, %v2126
  %v2128 = vand.u32 %v2127, 4294901760
  %2129 = vmatpush1.msra.mxu0 %v2128
  %2130 = vmatprep.subr.mxu0 0.0
  %v2131 = vand.u32 %v212, 4294901760
  %v2132 = vsub.f32 %v212, %v2131
  %v2133 = vand.u32 %v2132, 4294901760
  %v2134 = vsub.f32 %v2132, %v2133
  %v2135 = vand.u32 %v2134, 4294901760
  %2136 = vmatpush1.msra.mxu0 %v2135
  %2137 = vmatprep.subr.mxu0 0.0
  %v2138 = vand.u32 %v213, 4294901760
  %v2139 = vsub.f32 %v213, %v2138
  %v2140 = vand.u32 %v2139, 4294901760
  %v2141 = vsub.f32 %v2139, %v2140
  %v2142 = vand.u32 %v2141, 4294901760
  %2143 = vmatpush1.msra.mxu0 %v2142
  %2144 = vmatprep.subr.mxu0 0.0
  %v2145 = vand.u32 %v214, 4294901760
  %v2146 = vsub.f32 %v214, %v2145
  %v2147 = vand.u32 %v2146, 4294901760
  %v2148 = vsub.f32 %v2146, %v2147
  %v2149 = vand.u32 %v2148, 4294901760
  %2150 = vmatpush1.msra.mxu0 %v2149
  %2151 = vmatprep.subr.mxu0 0.0
  %v2152 = vand.u32 %v215, 4294901760
  %v2153 = vsub.f32 %v215, %v2152
  %v2154 = vand.u32 %v2153, 4294901760
  %v2155 = vsub.f32 %v2153, %v2154
  %v2156 = vand.u32 %v2155, 4294901760
  %2157 = vmatpush1.msra.mxu0 %v2156
  %2158 = vmatprep.subr.mxu0 0.0
  %v2159 = vand.u32 %v216, 4294901760
  %v2160 = vsub.f32 %v216, %v2159
  %v2161 = vand.u32 %v2160, 4294901760
  %v2162 = vsub.f32 %v2160, %v2161
  %v2163 = vand.u32 %v2162, 4294901760
  %2164 = vmatpush1.msra.mxu0 %v2163
  %2165 = vmatprep.subr.mxu0 0.0
  %v2166 = vand.u32 %v217, 4294901760
  %v2167 = vsub.f32 %v217, %v2166
  %v2168 = vand.u32 %v2167, 4294901760
  %v2169 = vsub.f32 %v2167, %v2168
  %v2170 = vand.u32 %v2169, 4294901760
  %2171 = vmatpush1.msra.mxu0 %v2170
  %2172 = vmatprep.subr.mxu0 0.0
  %v2173 = vand.u32 %v218, 4294901760
  %v2174 = vsub.f32 %v218, %v2173
  %v2175 = vand.u32 %v2174, 4294901760
  %v2176 = vsub.f32 %v2174, %v2175
  %v2177 = vand.u32 %v2176, 4294901760
  %2178 = vmatpush1.msra.mxu0 %v2177
  %2179 = vmatprep.subr.mxu0 0.0
  %v2180 = vand.u32 %v219, 4294901760
  %v2181 = vsub.f32 %v219, %v2180
  %v2182 = vand.u32 %v2181, 4294901760
  %v2183 = vsub.f32 %v2181, %v2182
  %v2184 = vand.u32 %v2183, 4294901760
  %2185 = vmatpush1.msra.mxu0 %v2184
  %2186 = vmatprep.subr.mxu0 0.0
  %v2187 = vand.u32 %v220, 4294901760
  %v2188 = vsub.f32 %v220, %v2187
  %v2189 = vand.u32 %v2188, 4294901760
  %v2190 = vsub.f32 %v2188, %v2189
  %v2191 = vand.u32 %v2190, 4294901760
  %2192 = vmatpush1.msra.mxu0 %v2191
  %2193 = vmatprep.subr.mxu0 0.0
  %v2194 = vand.u32 %v221, 4294901760
  %v2195 = vsub.f32 %v221, %v2194
  %v2196 = vand.u32 %v2195, 4294901760
  %v2197 = vsub.f32 %v2195, %v2196
  %v2198 = vand.u32 %v2197, 4294901760
  %2199 = vmatpush1.msra.mxu0 %v2198
  %2200 = vmatprep.subr.mxu0 0.0
  %v2201 = vand.u32 %v222, 4294901760
  %v2202 = vsub.f32 %v222, %v2201
  %v2203 = vand.u32 %v2202, 4294901760
  %v2204 = vsub.f32 %v2202, %v2203
  %v2205 = vand.u32 %v2204, 4294901760
  %2206 = vmatpush1.msra.mxu0 %v2205
  %2207 = vmatprep.subr.mxu0 0.0
  %v2208 = vand.u32 %v223, 4294901760
  %v2209 = vsub.f32 %v223, %v2208
  %v2210 = vand.u32 %v2209, 4294901760
  %v2211 = vsub.f32 %v2209, %v2210
  %v2212 = vand.u32 %v2211, 4294901760
  %2213 = vmatpush1.msra.mxu0 %v2212
  %2214 = vmatprep.subr.mxu0 0.0
  %v2215 = vand.u32 %v224, 4294901760
  %v2216 = vsub.f32 %v224, %v2215
  %v2217 = vand.u32 %v2216, 4294901760
  %v2218 = vsub.f32 %v2216, %v2217
  %v2219 = vand.u32 %v2218, 4294901760
  %2220 = vmatpush1.msra.mxu0 %v2219
  %2221 = vmatprep.subr.mxu0 0.0
  %v2222 = vand.u32 %v225, 4294901760
  %v2223 = vsub.f32 %v225, %v2222
  %v2224 = vand.u32 %v2223, 4294901760
  %v2225 = vsub.f32 %v2223, %v2224
  %v2226 = vand.u32 %v2225, 4294901760
  %2227 = vmatpush1.msra.mxu0 %v2226
  %2228 = vmatprep.subr.mxu0 0.0
  %v2229 = vand.u32 %v226, 4294901760
  %v2230 = vsub.f32 %v226, %v2229
  %v2231 = vand.u32 %v2230, 4294901760
  %v2232 = vsub.f32 %v2230, %v2231
  %v2233 = vand.u32 %v2232, 4294901760
  %2234 = vmatpush1.msra.mxu0 %v2233
  %2235 = vmatprep.subr.mxu0 0.0
  %v2236 = vand.u32 %v227, 4294901760
  %v2237 = vsub.f32 %v227, %v2236
  %v2238 = vand.u32 %v2237, 4294901760
  %v2239 = vsub.f32 %v2237, %v2238
  %v2240 = vand.u32 %v2239, 4294901760
  %2241 = vmatpush1.msra.mxu0 %v2240
  %2242 = vmatprep.subr.mxu0 0.0
  %v2243 = vand.u32 %v228, 4294901760
  %v2244 = vsub.f32 %v228, %v2243
  %v2245 = vand.u32 %v2244, 4294901760
  %v2246 = vsub.f32 %v2244, %v2245
  %v2247 = vand.u32 %v2246, 4294901760
  %2248 = vmatpush1.msra.mxu0 %v2247
  %2249 = vmatprep.subr.mxu0 0.0
  %v2250 = vand.u32 %v229, 4294901760
  %v2251 = vsub.f32 %v229, %v2250
  %v2252 = vand.u32 %v2251, 4294901760
  %v2253 = vsub.f32 %v2251, %v2252
  %v2254 = vand.u32 %v2253, 4294901760
  %2255 = vmatpush1.msra.mxu0 %v2254
  %2256 = vmatprep.subr.mxu0 0.0
  %v2257 = vand.u32 %v230, 4294901760
  %v2258 = vsub.f32 %v230, %v2257
  %v2259 = vand.u32 %v2258, 4294901760
  %v2260 = vsub.f32 %v2258, %v2259
  %v2261 = vand.u32 %v2260, 4294901760
  %2262 = vmatpush1.msra.mxu0 %v2261
  %2263 = vmatprep.subr.mxu0 0.0
  %v2264 = vand.u32 %v231, 4294901760
  %v2265 = vsub.f32 %v231, %v2264
  %v2266 = vand.u32 %v2265, 4294901760
  %v2267 = vsub.f32 %v2265, %v2266
  %v2268 = vand.u32 %v2267, 4294901760
  %2269 = vmatpush1.msra.mxu0 %v2268
  %2270 = vmatprep.subr.mxu0 0.0
  %v2271 = vand.u32 %v232, 4294901760
  %v2272 = vsub.f32 %v232, %v2271
  %v2273 = vand.u32 %v2272, 4294901760
  %v2274 = vsub.f32 %v2272, %v2273
  %v2275 = vand.u32 %v2274, 4294901760
  %2276 = vmatpush1.msra.mxu0 %v2275
  %2277 = vmatprep.subr.mxu0 0.0
  %v2278 = vand.u32 %v233, 4294901760
  %v2279 = vsub.f32 %v233, %v2278
  %v2280 = vand.u32 %v2279, 4294901760
  %v2281 = vsub.f32 %v2279, %v2280
  %v2282 = vand.u32 %v2281, 4294901760
  %2283 = vmatpush1.msra.mxu0 %v2282
  %2284 = vmatprep.subr.mxu0 0.0
  %v2285 = vand.u32 %v234, 4294901760
  %v2286 = vsub.f32 %v234, %v2285
  %v2287 = vand.u32 %v2286, 4294901760
  %v2288 = vsub.f32 %v2286, %v2287
  %v2289 = vand.u32 %v2288, 4294901760
  %2290 = vmatpush1.msra.mxu0 %v2289
  %2291 = vmatprep.subr.mxu0 0.0
  %v2292 = vand.u32 %v235, 4294901760
  %v2293 = vsub.f32 %v235, %v2292
  %v2294 = vand.u32 %v2293, 4294901760
  %v2295 = vsub.f32 %v2293, %v2294
  %v2296 = vand.u32 %v2295, 4294901760
  %2297 = vmatpush1.msra.mxu0 %v2296
  %2298 = vmatprep.subr.mxu0 0.0
  %v2299 = vand.u32 %v236, 4294901760
  %v2300 = vsub.f32 %v236, %v2299
  %v2301 = vand.u32 %v2300, 4294901760
  %v2302 = vsub.f32 %v2300, %v2301
  %v2303 = vand.u32 %v2302, 4294901760
  %2304 = vmatpush1.msra.mxu0 %v2303
  %2305 = vmatprep.subr.mxu0 0.0
  %v2306 = vand.u32 %v237, 4294901760
  %v2307 = vsub.f32 %v237, %v2306
  %v2308 = vand.u32 %v2307, 4294901760
  %v2309 = vsub.f32 %v2307, %v2308
  %v2310 = vand.u32 %v2309, 4294901760
  %2311 = vmatpush1.msra.mxu0 %v2310
  %2312 = vmatprep.subr.mxu0 0.0
  %v2313 = vand.u32 %v238, 4294901760
  %v2314 = vsub.f32 %v238, %v2313
  %v2315 = vand.u32 %v2314, 4294901760
  %v2316 = vsub.f32 %v2314, %v2315
  %v2317 = vand.u32 %v2316, 4294901760
  %2318 = vmatpush1.msra.mxu0 %v2317
  %2319 = vmatprep.subr.mxu0 0.0
  %v2320 = vand.u32 %v239, 4294901760
  %v2321 = vsub.f32 %v239, %v2320
  %v2322 = vand.u32 %v2321, 4294901760
  %v2323 = vsub.f32 %v2321, %v2322
  %v2324 = vand.u32 %v2323, 4294901760
  %2325 = vmatpush1.msra.mxu0 %v2324
  %2326 = vmatprep.subr.mxu0 0.0
  %v2327 = vand.u32 %v240, 4294901760
  %v2328 = vsub.f32 %v240, %v2327
  %v2329 = vand.u32 %v2328, 4294901760
  %v2330 = vsub.f32 %v2328, %v2329
  %v2331 = vand.u32 %v2330, 4294901760
  %2332 = vmatpush1.msra.mxu0 %v2331
  %v2333 = vand.u32 %v142, 4294901760
  %2334 = vmatprep.mubr.f32.mxu0 %v2333
  %v2335 = vand.u32 %v141, 4294901760
  %2336 = vmatmul.mubr.f32.gmra.mrb[0].mxu0 %v2335
  %v2337 = vpop.f32.mrb[0].mxu0
  %v2338 = vadd.f32 %v2106, %v2337
  %v2339 = vpop.f32.mrb[0].mxu0
  %2340 = vdwg.mxu0
  %2341 = vmatprep.subr.mxu0 0.0
  %v2342 = vand.u32 %v209, 4294901760
  %v2343 = vsub.f32 %v209, %v2342
  %2344 = vmatpush1.msra.mxu0 %v2343
  %2345 = vmatprep.subr.mxu0 0.0
  %v2346 = vand.u32 %v210, 4294901760
  %v2347 = vsub.f32 %v210, %v2346
  %2348 = vmatpush1.msra.mxu0 %v2347
  %2349 = vmatprep.subr.mxu0 0.0
  %v2350 = vand.u32 %v211, 4294901760
  %v2351 = vsub.f32 %v211, %v2350
  %2352 = vmatpush1.msra.mxu0 %v2351
  %2353 = vmatprep.subr.mxu0 0.0
  %v2354 = vand.u32 %v212, 4294901760
  %v2355 = vsub.f32 %v212, %v2354
  %2356 = vmatpush1.msra.mxu0 %v2355
  %2357 = vmatprep.subr.mxu0 0.0
  %v2358 = vand.u32 %v213, 4294901760
  %v2359 = vsub.f32 %v213, %v2358
  %2360 = vmatpush1.msra.mxu0 %v2359
  %2361 = vmatprep.subr.mxu0 0.0
  %v2362 = vand.u32 %v214, 4294901760
  %v2363 = vsub.f32 %v214, %v2362
  %2364 = vmatpush1.msra.mxu0 %v2363
  %2365 = vmatprep.subr.mxu0 0.0
  %v2366 = vand.u32 %v215, 4294901760
  %v2367 = vsub.f32 %v215, %v2366
  %2368 = vmatpush1.msra.mxu0 %v2367
  %2369 = vmatprep.subr.mxu0 0.0
  %v2370 = vand.u32 %v216, 4294901760
  %v2371 = vsub.f32 %v216, %v2370
  %2372 = vmatpush1.msra.mxu0 %v2371
  %2373 = vmatprep.subr.mxu0 0.0
  %v2374 = vand.u32 %v217, 4294901760
  %v2375 = vsub.f32 %v217, %v2374
  %2376 = vmatpush1.msra.mxu0 %v2375
  %2377 = vmatprep.subr.mxu0 0.0
  %v2378 = vand.u32 %v218, 4294901760
  %v2379 = vsub.f32 %v218, %v2378
  %2380 = vmatpush1.msra.mxu0 %v2379
  %2381 = vmatprep.subr.mxu0 0.0
  %v2382 = vand.u32 %v219, 4294901760
  %v2383 = vsub.f32 %v219, %v2382
  %2384 = vmatpush1.msra.mxu0 %v2383
  %2385 = vmatprep.subr.mxu0 0.0
  %v2386 = vand.u32 %v220, 4294901760
  %v2387 = vsub.f32 %v220, %v2386
  %2388 = vmatpush1.msra.mxu0 %v2387
  %2389 = vmatprep.subr.mxu0 0.0
  %v2390 = vand.u32 %v221, 4294901760
  %v2391 = vsub.f32 %v221, %v2390
  %2392 = vmatpush1.msra.mxu0 %v2391
  %2393 = vmatprep.subr.mxu0 0.0
  %v2394 = vand.u32 %v222, 4294901760
  %v2395 = vsub.f32 %v222, %v2394
  %2396 = vmatpush1.msra.mxu0 %v2395
  %2397 = vmatprep.subr.mxu0 0.0
  %v2398 = vand.u32 %v223, 4294901760
  %v2399 = vsub.f32 %v223, %v2398
  %2400 = vmatpush1.msra.mxu0 %v2399
  %2401 = vmatprep.subr.mxu0 0.0
  %v2402 = vand.u32 %v224, 4294901760
  %v2403 = vsub.f32 %v224, %v2402
  %2404 = vmatpush1.msra.mxu0 %v2403
  %2405 = vmatprep.subr.mxu0 0.0
  %v2406 = vand.u32 %v225, 4294901760
  %v2407 = vsub.f32 %v225, %v2406
  %2408 = vmatpush1.msra.mxu0 %v2407
  %2409 = vmatprep.subr.mxu0 0.0
  %v2410 = vand.u32 %v226, 4294901760
  %v2411 = vsub.f32 %v226, %v2410
  %2412 = vmatpush1.msra.mxu0 %v2411
  %2413 = vmatprep.subr.mxu0 0.0
  %v2414 = vand.u32 %v227, 4294901760
  %v2415 = vsub.f32 %v227, %v2414
  %2416 = vmatpush1.msra.mxu0 %v2415
  %2417 = vmatprep.subr.mxu0 0.0
  %v2418 = vand.u32 %v228, 4294901760
  %v2419 = vsub.f32 %v228, %v2418
  %2420 = vmatpush1.msra.mxu0 %v2419
  %2421 = vmatprep.subr.mxu0 0.0
  %v2422 = vand.u32 %v229, 4294901760
  %v2423 = vsub.f32 %v229, %v2422
  %2424 = vmatpush1.msra.mxu0 %v2423
  %2425 = vmatprep.subr.mxu0 0.0
  %v2426 = vand.u32 %v230, 4294901760
  %v2427 = vsub.f32 %v230, %v2426
  %2428 = vmatpush1.msra.mxu0 %v2427
  %2429 = vmatprep.subr.mxu0 0.0
  %v2430 = vand.u32 %v231, 4294901760
  %v2431 = vsub.f32 %v231, %v2430
  %2432 = vmatpush1.msra.mxu0 %v2431
  %2433 = vmatprep.subr.mxu0 0.0
  %v2434 = vand.u32 %v232, 4294901760
  %v2435 = vsub.f32 %v232, %v2434
  %2436 = vmatpush1.msra.mxu0 %v2435
  %2437 = vmatprep.subr.mxu0 0.0
  %v2438 = vand.u32 %v233, 4294901760
  %v2439 = vsub.f32 %v233, %v2438
  %2440 = vmatpush1.msra.mxu0 %v2439
  %2441 = vmatprep.subr.mxu0 0.0
  %v2442 = vand.u32 %v234, 4294901760
  %v2443 = vsub.f32 %v234, %v2442
  %2444 = vmatpush1.msra.mxu0 %v2443
  %2445 = vmatprep.subr.mxu0 0.0
  %v2446 = vand.u32 %v235, 4294901760
  %v2447 = vsub.f32 %v235, %v2446
  %2448 = vmatpush1.msra.mxu0 %v2447
  %2449 = vmatprep.subr.mxu0 0.0
  %v2450 = vand.u32 %v236, 4294901760
  %v2451 = vsub.f32 %v236, %v2450
  %2452 = vmatpush1.msra.mxu0 %v2451
  %2453 = vmatprep.subr.mxu0 0.0
  %v2454 = vand.u32 %v237, 4294901760
  %v2455 = vsub.f32 %v237, %v2454
  %2456 = vmatpush1.msra.mxu0 %v2455
  %2457 = vmatprep.subr.mxu0 0.0
  %v2458 = vand.u32 %v238, 4294901760
  %v2459 = vsub.f32 %v238, %v2458
  %2460 = vmatpush1.msra.mxu0 %v2459
  %2461 = vmatprep.subr.mxu0 0.0
  %v2462 = vand.u32 %v239, 4294901760
  %v2463 = vsub.f32 %v239, %v2462
  %2464 = vmatpush1.msra.mxu0 %v2463
  %2465 = vmatprep.subr.mxu0 0.0
  %v2466 = vand.u32 %v240, 4294901760
  %v2467 = vsub.f32 %v240, %v2466
  %2468 = vmatpush1.msra.mxu0 %v2467
  %v2469 = vand.u32 %v142, 4294901760
  %v2470 = vsub.f32 %v142, %v2469
  %2471 = vmatprep.mubr.f32.mxu0 %v2470
  %v2472 = vand.u32 %v141, 4294901760
  %v2473 = vsub.f32 %v141, %v2472
  %2474 = vmatmul.mubr.f32.gmra.mrb[0].mxu0 %v2473
  %v2475 = vpop.f32.mrb[0].mxu0
  %v2476 = vadd.f32 %v2338, %v2475
  %v2477 = vpop.f32.mrb[0].mxu0
  %2478 = vdwg.mxu0
  %2479 = vmatprep.subr.mxu0 0.0
  %v2480 = vand.u32 %v209, 4294901760
  %2481 = vmatpush1.msra.mxu0 %v2480
  %2482 = vmatprep.subr.mxu0 0.0
  %v2483 = vand.u32 %v210, 4294901760
  %2484 = vmatpush1.msra.mxu0 %v2483
  %2485 = vmatprep.subr.mxu0 0.0
  %v2486 = vand.u32 %v211, 4294901760
  %2487 = vmatpush1.msra.mxu0 %v2486
  %2488 = vmatprep.subr.mxu0 0.0
  %v2489 = vand.u32 %v212, 4294901760
  %2490 = vmatpush1.msra.mxu0 %v2489
  %2491 = vmatprep.subr.mxu0 0.0
  %v2492 = vand.u32 %v213, 4294901760
  %2493 = vmatpush1.msra.mxu0 %v2492
  %2494 = vmatprep.subr.mxu0 0.0
  %v2495 = vand.u32 %v214, 4294901760
  %2496 = vmatpush1.msra.mxu0 %v2495
  %2497 = vmatprep.subr.mxu0 0.0
  %v2498 = vand.u32 %v215, 4294901760
  %2499 = vmatpush1.msra.mxu0 %v2498
  %2500 = vmatprep.subr.mxu0 0.0
  %v2501 = vand.u32 %v216, 4294901760
  %2502 = vmatpush1.msra.mxu0 %v2501
  %2503 = vmatprep.subr.mxu0 0.0
  %v2504 = vand.u32 %v217, 4294901760
  %2505 = vmatpush1.msra.mxu0 %v2504
  %2506 = vmatprep.subr.mxu0 0.0
  %v2507 = vand.u32 %v218, 4294901760
  %2508 = vmatpush1.msra.mxu0 %v2507
  %2509 = vmatprep.subr.mxu0 0.0
  %v2510 = vand.u32 %v219, 4294901760
  %2511 = vmatpush1.msra.mxu0 %v2510
  %2512 = vmatprep.subr.mxu0 0.0
  %v2513 = vand.u32 %v220, 4294901760
  %2514 = vmatpush1.msra.mxu0 %v2513
  %2515 = vmatprep.subr.mxu0 0.0
  %v2516 = vand.u32 %v221, 4294901760
  %2517 = vmatpush1.msra.mxu0 %v2516
  %2518 = vmatprep.subr.mxu0 0.0
  %v2519 = vand.u32 %v222, 4294901760
  %2520 = vmatpush1.msra.mxu0 %v2519
  %2521 = vmatprep.subr.mxu0 0.0
  %v2522 = vand.u32 %v223, 4294901760
  %2523 = vmatpush1.msra.mxu0 %v2522
  %2524 = vmatprep.subr.mxu0 0.0
  %v2525 = vand.u32 %v224, 4294901760
  %2526 = vmatpush1.msra.mxu0 %v2525
  %2527 = vmatprep.subr.mxu0 0.0
  %v2528 = vand.u32 %v225, 4294901760
  %2529 = vmatpush1.msra.mxu0 %v2528
  %2530 = vmatprep.subr.mxu0 0.0
  %v2531 = vand.u32 %v226, 4294901760
  %2532 = vmatpush1.msra.mxu0 %v2531
  %2533 = vmatprep.subr.mxu0 0.0
  %v2534 = vand.u32 %v227, 4294901760
  %2535 = vmatpush1.msra.mxu0 %v2534
  %2536 = vmatprep.subr.mxu0 0.0
  %v2537 = vand.u32 %v228, 4294901760
  %2538 = vmatpush1.msra.mxu0 %v2537
  %2539 = vmatprep.subr.mxu0 0.0
  %v2540 = vand.u32 %v229, 4294901760
  %2541 = vmatpush1.msra.mxu0 %v2540
  %2542 = vmatprep.subr.mxu0 0.0
  %v2543 = vand.u32 %v230, 4294901760
  %2544 = vmatpush1.msra.mxu0 %v2543
  %2545 = vmatprep.subr.mxu0 0.0
  %v2546 = vand.u32 %v231, 4294901760
  %2547 = vmatpush1.msra.mxu0 %v2546
  %2548 = vmatprep.subr.mxu0 0.0
  %v2549 = vand.u32 %v232, 4294901760
  %2550 = vmatpush1.msra.mxu0 %v2549
  %2551 = vmatprep.subr.mxu0 0.0
  %v2552 = vand.u32 %v233, 4294901760
  %2553 = vmatpush1.msra.mxu0 %v2552
  %2554 = vmatprep.subr.mxu0 0.0
  %v2555 = vand.u32 %v234, 4294901760
  %2556 = vmatpush1.msra.mxu0 %v2555
  %2557 = vmatprep.subr.mxu0 0.0
  %v2558 = vand.u32 %v235, 4294901760
  %2559 = vmatpush1.msra.mxu0 %v2558
  %2560 = vmatprep.subr.mxu0 0.0
  %v2561 = vand.u32 %v236, 4294901760
  %2562 = vmatpush1.msra.mxu0 %v2561
  %2563 = vmatprep.subr.mxu0 0.0
  %v2564 = vand.u32 %v237, 4294901760
  %2565 = vmatpush1.msra.mxu0 %v2564
  %2566 = vmatprep.subr.mxu0 0.0
  %v2567 = vand.u32 %v238, 4294901760
  %2568 = vmatpush1.msra.mxu0 %v2567
  %2569 = vmatprep.subr.mxu0 0.0
  %v2570 = vand.u32 %v239, 4294901760
  %2571 = vmatpush1.msra.mxu0 %v2570
  %2572 = vmatprep.subr.mxu0 0.0
  %v2573 = vand.u32 %v240, 4294901760
  %2574 = vmatpush1.msra.mxu0 %v2573
  %v2575 = vand.u32 %v142, 4294901760
  %v2576 = vsub.f32 %v142, %v2575
  %v2577 = vand.u32 %v2576, 4294901760
  %2578 = vmatprep.mubr.f32.mxu0 %v2577
  %v2579 = vand.u32 %v141, 4294901760
  %v2580 = vsub.f32 %v141, %v2579
  %v2581 = vand.u32 %v2580, 4294901760
  %2582 = vmatmul.mubr.f32.gmra.mrb[0].mxu0 %v2581
  %v2583 = vpop.f32.mrb[0].mxu0
  %v2584 = vadd.f32 %v2476, %v2583
  %v2585 = vpop.f32.mrb[0].mxu0
  %2586 = vdwg.mxu0
  %2587 = vmatprep.subr.mxu0 0.0
  %v2588 = vand.u32 %v209, 4294901760
  %v2589 = vsub.f32 %v209, %v2588
  %v2590 = vand.u32 %v2589, 4294901760
  %2591 = vmatpush1.msra.mxu0 %v2590
  %2592 = vmatprep.subr.mxu0 0.0
  %v2593 = vand.u32 %v210, 4294901760
  %v2594 = vsub.f32 %v210, %v2593
  %v2595 = vand.u32 %v2594, 4294901760
  %2596 = vmatpush1.msra.mxu0 %v2595
  %2597 = vmatprep.subr.mxu0 0.0
  %v2598 = vand.u32 %v211, 4294901760
  %v2599 = vsub.f32 %v211, %v2598
  %v2600 = vand.u32 %v2599, 4294901760
  %2601 = vmatpush1.msra.mxu0 %v2600
  %2602 = vmatprep.subr.mxu0 0.0
  %v2603 = vand.u32 %v212, 4294901760
  %v2604 = vsub.f32 %v212, %v2603
  %v2605 = vand.u32 %v2604, 4294901760
  %2606 = vmatpush1.msra.mxu0 %v2605
  %2607 = vmatprep.subr.mxu0 0.0
  %v2608 = vand.u32 %v213, 4294901760
  %v2609 = vsub.f32 %v213, %v2608
  %v2610 = vand.u32 %v2609, 4294901760
  %2611 = vmatpush1.msra.mxu0 %v2610
  %2612 = vmatprep.subr.mxu0 0.0
  %v2613 = vand.u32 %v214, 4294901760
  %v2614 = vsub.f32 %v214, %v2613
  %v2615 = vand.u32 %v2614, 4294901760
  %2616 = vmatpush1.msra.mxu0 %v2615
  %2617 = vmatprep.subr.mxu0 0.0
  %v2618 = vand.u32 %v215, 4294901760
  %v2619 = vsub.f32 %v215, %v2618
  %v2620 = vand.u32 %v2619, 4294901760
  %2621 = vmatpush1.msra.mxu0 %v2620
  %2622 = vmatprep.subr.mxu0 0.0
  %v2623 = vand.u32 %v216, 4294901760
  %v2624 = vsub.f32 %v216, %v2623
  %v2625 = vand.u32 %v2624, 4294901760
  %2626 = vmatpush1.msra.mxu0 %v2625
  %2627 = vmatprep.subr.mxu0 0.0
  %v2628 = vand.u32 %v217, 4294901760
  %v2629 = vsub.f32 %v217, %v2628
  %v2630 = vand.u32 %v2629, 4294901760
  %2631 = vmatpush1.msra.mxu0 %v2630
  %2632 = vmatprep.subr.mxu0 0.0
  %v2633 = vand.u32 %v218, 4294901760
  %v2634 = vsub.f32 %v218, %v2633
  %v2635 = vand.u32 %v2634, 4294901760
  %2636 = vmatpush1.msra.mxu0 %v2635
  %2637 = vmatprep.subr.mxu0 0.0
  %v2638 = vand.u32 %v219, 4294901760
  %v2639 = vsub.f32 %v219, %v2638
  %v2640 = vand.u32 %v2639, 4294901760
  %2641 = vmatpush1.msra.mxu0 %v2640
  %2642 = vmatprep.subr.mxu0 0.0
  %v2643 = vand.u32 %v220, 4294901760
  %v2644 = vsub.f32 %v220, %v2643
  %v2645 = vand.u32 %v2644, 4294901760
  %2646 = vmatpush1.msra.mxu0 %v2645
  %2647 = vmatprep.subr.mxu0 0.0
  %v2648 = vand.u32 %v221, 4294901760
  %v2649 = vsub.f32 %v221, %v2648
  %v2650 = vand.u32 %v2649, 4294901760
  %2651 = vmatpush1.msra.mxu0 %v2650
  %2652 = vmatprep.subr.mxu0 0.0
  %v2653 = vand.u32 %v222, 4294901760
  %v2654 = vsub.f32 %v222, %v2653
  %v2655 = vand.u32 %v2654, 4294901760
  %2656 = vmatpush1.msra.mxu0 %v2655
  %2657 = vmatprep.subr.mxu0 0.0
  %v2658 = vand.u32 %v223, 4294901760
  %v2659 = vsub.f32 %v223, %v2658
  %v2660 = vand.u32 %v2659, 4294901760
  %2661 = vmatpush1.msra.mxu0 %v2660
  %2662 = vmatprep.subr.mxu0 0.0
  %v2663 = vand.u32 %v224, 4294901760
  %v2664 = vsub.f32 %v224, %v2663
  %v2665 = vand.u32 %v2664, 4294901760
  %2666 = vmatpush1.msra.mxu0 %v2665
  %2667 = vmatprep.subr.mxu0 0.0
  %v2668 = vand.u32 %v225, 4294901760
  %v2669 = vsub.f32 %v225, %v2668
  %v2670 = vand.u32 %v2669, 4294901760
  %2671 = vmatpush1.msra.mxu0 %v2670
  %2672 = vmatprep.subr.mxu0 0.0
  %v2673 = vand.u32 %v226, 4294901760
  %v2674 = vsub.f32 %v226, %v2673
  %v2675 = vand.u32 %v2674, 4294901760
  %2676 = vmatpush1.msra.mxu0 %v2675
  %2677 = vmatprep.subr.mxu0 0.0
  %v2678 = vand.u32 %v227, 4294901760
  %v2679 = vsub.f32 %v227, %v2678
  %v2680 = vand.u32 %v2679, 4294901760
  %2681 = vmatpush1.msra.mxu0 %v2680
  %2682 = vmatprep.subr.mxu0 0.0
  %v2683 = vand.u32 %v228, 4294901760
  %v2684 = vsub.f32 %v228, %v2683
  %v2685 = vand.u32 %v2684, 4294901760
  %2686 = vmatpush1.msra.mxu0 %v2685
  %2687 = vmatprep.subr.mxu0 0.0
  %v2688 = vand.u32 %v229, 4294901760
  %v2689 = vsub.f32 %v229, %v2688
  %v2690 = vand.u32 %v2689, 4294901760
  %2691 = vmatpush1.msra.mxu0 %v2690
  %2692 = vmatprep.subr.mxu0 0.0
  %v2693 = vand.u32 %v230, 4294901760
  %v2694 = vsub.f32 %v230, %v2693
  %v2695 = vand.u32 %v2694, 4294901760
  %2696 = vmatpush1.msra.mxu0 %v2695
  %2697 = vmatprep.subr.mxu0 0.0
  %v2698 = vand.u32 %v231, 4294901760
  %v2699 = vsub.f32 %v231, %v2698
  %v2700 = vand.u32 %v2699, 4294901760
  %2701 = vmatpush1.msra.mxu0 %v2700
  %2702 = vmatprep.subr.mxu0 0.0
  %v2703 = vand.u32 %v232, 4294901760
  %v2704 = vsub.f32 %v232, %v2703
  %v2705 = vand.u32 %v2704, 4294901760
  %2706 = vmatpush1.msra.mxu0 %v2705
  %2707 = vmatprep.subr.mxu0 0.0
  %v2708 = vand.u32 %v233, 4294901760
  %v2709 = vsub.f32 %v233, %v2708
  %v2710 = vand.u32 %v2709, 4294901760
  %2711 = vmatpush1.msra.mxu0 %v2710
  %2712 = vmatprep.subr.mxu0 0.0
  %v2713 = vand.u32 %v234, 4294901760
  %v2714 = vsub.f32 %v234, %v2713
  %v2715 = vand.u32 %v2714, 4294901760
  %2716 = vmatpush1.msra.mxu0 %v2715
  %2717 = vmatprep.subr.mxu0 0.0
  %v2718 = vand.u32 %v235, 4294901760
  %v2719 = vsub.f32 %v235, %v2718
  %v2720 = vand.u32 %v2719, 4294901760
  %2721 = vmatpush1.msra.mxu0 %v2720
  %2722 = vmatprep.subr.mxu0 0.0
  %v2723 = vand.u32 %v236, 4294901760
  %v2724 = vsub.f32 %v236, %v2723
  %v2725 = vand.u32 %v2724, 4294901760
  %2726 = vmatpush1.msra.mxu0 %v2725
  %2727 = vmatprep.subr.mxu0 0.0
  %v2728 = vand.u32 %v237, 4294901760
  %v2729 = vsub.f32 %v237, %v2728
  %v2730 = vand.u32 %v2729, 4294901760
  %2731 = vmatpush1.msra.mxu0 %v2730
  %2732 = vmatprep.subr.mxu0 0.0
  %v2733 = vand.u32 %v238, 4294901760
  %v2734 = vsub.f32 %v238, %v2733
  %v2735 = vand.u32 %v2734, 4294901760
  %2736 = vmatpush1.msra.mxu0 %v2735
  %2737 = vmatprep.subr.mxu0 0.0
  %v2738 = vand.u32 %v239, 4294901760
  %v2739 = vsub.f32 %v239, %v2738
  %v2740 = vand.u32 %v2739, 4294901760
  %2741 = vmatpush1.msra.mxu0 %v2740
  %2742 = vmatprep.subr.mxu0 0.0
  %v2743 = vand.u32 %v240, 4294901760
  %v2744 = vsub.f32 %v240, %v2743
  %v2745 = vand.u32 %v2744, 4294901760
  %2746 = vmatpush1.msra.mxu0 %v2745
  %v2747 = vand.u32 %v142, 4294901760
  %2748 = vmatprep.mubr.f32.mxu0 %v2747
  %v2749 = vand.u32 %v141, 4294901760
  %2750 = vmatmul.mubr.f32.gmra.mrb[0].mxu0 %v2749
  %v2751 = vpop.f32.mrb[0].mxu0
  %v2752 = vadd.f32 %v2584, %v2751
  %v2753 = vpop.f32.mrb[0].mxu0
  %2754 = vdwg.mxu0
  %2755 = vmatprep.subr.mxu0 0.0
  %v2756 = vand.u32 %v209, 4294901760
  %2757 = vmatpush1.msra.mxu0 %v2756
  %2758 = vmatprep.subr.mxu0 0.0
  %v2759 = vand.u32 %v210, 4294901760
  %2760 = vmatpush1.msra.mxu0 %v2759
  %2761 = vmatprep.subr.mxu0 0.0
  %v2762 = vand.u32 %v211, 4294901760
  %2763 = vmatpush1.msra.mxu0 %v2762
  %2764 = vmatprep.subr.mxu0 0.0
  %v2765 = vand.u32 %v212, 4294901760
  %2766 = vmatpush1.msra.mxu0 %v2765
  %2767 = vmatprep.subr.mxu0 0.0
  %v2768 = vand.u32 %v213, 4294901760
  %2769 = vmatpush1.msra.mxu0 %v2768
  %2770 = vmatprep.subr.mxu0 0.0
  %v2771 = vand.u32 %v214, 4294901760
  %2772 = vmatpush1.msra.mxu0 %v2771
  %2773 = vmatprep.subr.mxu0 0.0
  %v2774 = vand.u32 %v215, 4294901760
  %2775 = vmatpush1.msra.mxu0 %v2774
  %2776 = vmatprep.subr.mxu0 0.0
  %v2777 = vand.u32 %v216, 4294901760
  %2778 = vmatpush1.msra.mxu0 %v2777
  %2779 = vmatprep.subr.mxu0 0.0
  %v2780 = vand.u32 %v217, 4294901760
  %2781 = vmatpush1.msra.mxu0 %v2780
  %2782 = vmatprep.subr.mxu0 0.0
  %v2783 = vand.u32 %v218, 4294901760
  %2784 = vmatpush1.msra.mxu0 %v2783
  %2785 = vmatprep.subr.mxu0 0.0
  %v2786 = vand.u32 %v219, 4294901760
  %2787 = vmatpush1.msra.mxu0 %v2786
  %2788 = vmatprep.subr.mxu0 0.0
  %v2789 = vand.u32 %v220, 4294901760
  %2790 = vmatpush1.msra.mxu0 %v2789
  %2791 = vmatprep.subr.mxu0 0.0
  %v2792 = vand.u32 %v221, 4294901760
  %2793 = vmatpush1.msra.mxu0 %v2792
  %2794 = vmatprep.subr.mxu0 0.0
  %v2795 = vand.u32 %v222, 4294901760
  %2796 = vmatpush1.msra.mxu0 %v2795
  %2797 = vmatprep.subr.mxu0 0.0
  %v2798 = vand.u32 %v223, 4294901760
  %2799 = vmatpush1.msra.mxu0 %v2798
  %2800 = vmatprep.subr.mxu0 0.0
  %v2801 = vand.u32 %v224, 4294901760
  %2802 = vmatpush1.msra.mxu0 %v2801
  %2803 = vmatprep.subr.mxu0 0.0
  %v2804 = vand.u32 %v225, 4294901760
  %2805 = vmatpush1.msra.mxu0 %v2804
  %2806 = vmatprep.subr.mxu0 0.0
  %v2807 = vand.u32 %v226, 4294901760
  %2808 = vmatpush1.msra.mxu0 %v2807
  %2809 = vmatprep.subr.mxu0 0.0
  %v2810 = vand.u32 %v227, 4294901760
  %2811 = vmatpush1.msra.mxu0 %v2810
  %2812 = vmatprep.subr.mxu0 0.0
  %v2813 = vand.u32 %v228, 4294901760
  %2814 = vmatpush1.msra.mxu0 %v2813
  %2815 = vmatprep.subr.mxu0 0.0
  %v2816 = vand.u32 %v229, 4294901760
  %2817 = vmatpush1.msra.mxu0 %v2816
  %2818 = vmatprep.subr.mxu0 0.0
  %v2819 = vand.u32 %v230, 4294901760
  %2820 = vmatpush1.msra.mxu0 %v2819
  %2821 = vmatprep.subr.mxu0 0.0
  %v2822 = vand.u32 %v231, 4294901760
  %2823 = vmatpush1.msra.mxu0 %v2822
  %2824 = vmatprep.subr.mxu0 0.0
  %v2825 = vand.u32 %v232, 4294901760
  %2826 = vmatpush1.msra.mxu0 %v2825
  %2827 = vmatprep.subr.mxu0 0.0
  %v2828 = vand.u32 %v233, 4294901760
  %2829 = vmatpush1.msra.mxu0 %v2828
  %2830 = vmatprep.subr.mxu0 0.0
  %v2831 = vand.u32 %v234, 4294901760
  %2832 = vmatpush1.msra.mxu0 %v2831
  %2833 = vmatprep.subr.mxu0 0.0
  %v2834 = vand.u32 %v235, 4294901760
  %2835 = vmatpush1.msra.mxu0 %v2834
  %2836 = vmatprep.subr.mxu0 0.0
  %v2837 = vand.u32 %v236, 4294901760
  %2838 = vmatpush1.msra.mxu0 %v2837
  %2839 = vmatprep.subr.mxu0 0.0
  %v2840 = vand.u32 %v237, 4294901760
  %2841 = vmatpush1.msra.mxu0 %v2840
  %2842 = vmatprep.subr.mxu0 0.0
  %v2843 = vand.u32 %v238, 4294901760
  %2844 = vmatpush1.msra.mxu0 %v2843
  %2845 = vmatprep.subr.mxu0 0.0
  %v2846 = vand.u32 %v239, 4294901760
  %2847 = vmatpush1.msra.mxu0 %v2846
  %2848 = vmatprep.subr.mxu0 0.0
  %v2849 = vand.u32 %v240, 4294901760
  %2850 = vmatpush1.msra.mxu0 %v2849
  %v2851 = vand.u32 %v142, 4294901760
  %2852 = vmatprep.mubr.f32.mxu0 %v2851
  %v2853 = vand.u32 %v141, 4294901760
  %2854 = vmatmul.mubr.f32.gmra.mrb[0].mxu0 %v2853
  %v2855 = vpop.f32.mrb[0].mxu0
  %v2856 = vadd.f32 %v2752, %v2855
  %v2857 = vpop.f32.mrb[0].mxu0
  %2858 = vdwg.mxu0
  %2859 = vmatprep.subr.mxu0 0.0
  %v2860 = vand.u32 %v241, 4294901760
  %2861 = vmatpush1.msra.mxu0 %v2860
  %2862 = vmatprep.subr.mxu0 0.0
  %v2863 = vand.u32 %v242, 4294901760
  %2864 = vmatpush1.msra.mxu0 %v2863
  %2865 = vmatprep.subr.mxu0 0.0
  %v2866 = vand.u32 %v243, 4294901760
  %2867 = vmatpush1.msra.mxu0 %v2866
  %2868 = vmatprep.subr.mxu0 0.0
  %v2869 = vand.u32 %v244, 4294901760
  %2870 = vmatpush1.msra.mxu0 %v2869
  %2871 = vmatprep.subr.mxu0 0.0
  %v2872 = vand.u32 %v245, 4294901760
  %2873 = vmatpush1.msra.mxu0 %v2872
  %2874 = vmatprep.subr.mxu0 0.0
  %v2875 = vand.u32 %v246, 4294901760
  %2876 = vmatpush1.msra.mxu0 %v2875
  %2877 = vmatprep.subr.mxu0 0.0
  %v2878 = vand.u32 %v247, 4294901760
  %2879 = vmatpush1.msra.mxu0 %v2878
  %2880 = vmatprep.subr.mxu0 0.0
  %v2881 = vand.u32 %v248, 4294901760
  %2882 = vmatpush1.msra.mxu0 %v2881
  %2883 = vmatprep.subr.mxu0 0.0
  %v2884 = vand.u32 %v249, 4294901760
  %2885 = vmatpush1.msra.mxu0 %v2884
  %2886 = vmatprep.subr.mxu0 0.0
  %v2887 = vand.u32 %v250, 4294901760
  %2888 = vmatpush1.msra.mxu0 %v2887
  %2889 = vmatprep.subr.mxu0 0.0
  %v2890 = vand.u32 %v251, 4294901760
  %2891 = vmatpush1.msra.mxu0 %v2890
  %2892 = vmatprep.subr.mxu0 0.0
  %v2893 = vand.u32 %v252, 4294901760
  %2894 = vmatpush1.msra.mxu0 %v2893
  %2895 = vmatprep.subr.mxu0 0.0
  %v2896 = vand.u32 %v253, 4294901760
  %2897 = vmatpush1.msra.mxu0 %v2896
  %2898 = vmatprep.subr.mxu0 0.0
  %v2899 = vand.u32 %v254, 4294901760
  %2900 = vmatpush1.msra.mxu0 %v2899
  %2901 = vmatprep.subr.mxu0 0.0
  %v2902 = vand.u32 %v255, 4294901760
  %2903 = vmatpush1.msra.mxu0 %v2902
  %2904 = vmatprep.subr.mxu0 0.0
  %v2905 = vand.u32 %v256, 4294901760
  %2906 = vmatpush1.msra.mxu0 %v2905
  %2907 = vmatprep.subr.mxu0 0.0
  %v2908 = vand.u32 %v257, 4294901760
  %2909 = vmatpush1.msra.mxu0 %v2908
  %2910 = vmatprep.subr.mxu0 0.0
  %v2911 = vand.u32 %v258, 4294901760
  %2912 = vmatpush1.msra.mxu0 %v2911
  %2913 = vmatprep.subr.mxu0 0.0
  %v2914 = vand.u32 %v259, 4294901760
  %2915 = vmatpush1.msra.mxu0 %v2914
  %2916 = vmatprep.subr.mxu0 0.0
  %v2917 = vand.u32 %v260, 4294901760
  %2918 = vmatpush1.msra.mxu0 %v2917
  %2919 = vmatprep.subr.mxu0 0.0
  %v2920 = vand.u32 %v261, 4294901760
  %2921 = vmatpush1.msra.mxu0 %v2920
  %2922 = vmatprep.subr.mxu0 0.0
  %v2923 = vand.u32 %v262, 4294901760
  %2924 = vmatpush1.msra.mxu0 %v2923
  %2925 = vmatprep.subr.mxu0 0.0
  %v2926 = vand.u32 %v263, 4294901760
  %2927 = vmatpush1.msra.mxu0 %v2926
  %2928 = vmatprep.subr.mxu0 0.0
  %v2929 = vand.u32 %v264, 4294901760
  %2930 = vmatpush1.msra.mxu0 %v2929
  %2931 = vmatprep.subr.mxu0 0.0
  %v2932 = vand.u32 %v265, 4294901760
  %2933 = vmatpush1.msra.mxu0 %v2932
  %2934 = vmatprep.subr.mxu0 0.0
  %v2935 = vand.u32 %v266, 4294901760
  %2936 = vmatpush1.msra.mxu0 %v2935
  %2937 = vmatprep.subr.mxu0 0.0
  %v2938 = vand.u32 %v267, 4294901760
  %2939 = vmatpush1.msra.mxu0 %v2938
  %2940 = vmatprep.subr.mxu0 0.0
  %v2941 = vand.u32 %v268, 4294901760
  %2942 = vmatpush1.msra.mxu0 %v2941
  %2943 = vmatprep.subr.mxu0 0.0
  %v2944 = vand.u32 %v269, 4294901760
  %2945 = vmatpush1.msra.mxu0 %v2944
  %2946 = vmatprep.subr.mxu0 0.0
  %v2947 = vand.u32 %v270, 4294901760
  %2948 = vmatpush1.msra.mxu0 %v2947
  %2949 = vmatprep.subr.mxu0 0.0
  %v2950 = vand.u32 %v271, 4294901760
  %2951 = vmatpush1.msra.mxu0 %v2950
  %2952 = vmatprep.subr.mxu0 0.0
  %v2953 = vand.u32 %v272, 4294901760
  %2954 = vmatpush1.msra.mxu0 %v2953
  %v2955 = vand.u32 %v144, 4294901760
  %v2956 = vsub.f32 %v144, %v2955
  %v2957 = vand.u32 %v2956, 4294901760
  %v2958 = vsub.f32 %v2956, %v2957
  %v2959 = vand.u32 %v2958, 4294901760
  %2960 = vmatprep.mubr.f32.mxu0 %v2959
  %v2961 = vand.u32 %v143, 4294901760
  %v2962 = vsub.f32 %v143, %v2961
  %v2963 = vand.u32 %v2962, 4294901760
  %v2964 = vsub.f32 %v2962, %v2963
  %v2965 = vand.u32 %v2964, 4294901760
  %2966 = vmatmul.mubr.f32.gmra.mrb[0].mxu0 %v2965
  %v2967 = vpop.f32.mrb[0].mxu0
  %v2968 = vadd.f32 %v2856, %v2967
  %v2969 = vpop.f32.mrb[0].mxu0
  %2970 = vdwg.mxu0
  %2971 = vmatprep.subr.mxu0 0.0
  %v2972 = vand.u32 %v241, 4294901760
  %v2973 = vsub.f32 %v241, %v2972
  %v2974 = vand.u32 %v2973, 4294901760
  %v2975 = vsub.f32 %v2973, %v2974
  %v2976 = vand.u32 %v2975, 4294901760
  %2977 = vmatpush1.msra.mxu0 %v2976
  %2978 = vmatprep.subr.mxu0 0.0
  %v2979 = vand.u32 %v242, 4294901760
  %v2980 = vsub.f32 %v242, %v2979
  %v2981 = vand.u32 %v2980, 4294901760
  %v2982 = vsub.f32 %v2980, %v2981
  %v2983 = vand.u32 %v2982, 4294901760
  %2984 = vmatpush1.msra.mxu0 %v2983
  %2985 = vmatprep.subr.mxu0 0.0
  %v2986 = vand.u32 %v243, 4294901760
  %v2987 = vsub.f32 %v243, %v2986
  %v2988 = vand.u32 %v2987, 4294901760
  %v2989 = vsub.f32 %v2987, %v2988
  %v2990 = vand.u32 %v2989, 4294901760
  %2991 = vmatpush1.msra.mxu0 %v2990
  %2992 = vmatprep.subr.mxu0 0.0
  %v2993 = vand.u32 %v244, 4294901760
  %v2994 = vsub.f32 %v244, %v2993
  %v2995 = vand.u32 %v2994, 4294901760
  %v2996 = vsub.f32 %v2994, %v2995
  %v2997 = vand.u32 %v2996, 4294901760
  %2998 = vmatpush1.msra.mxu0 %v2997
  %2999 = vmatprep.subr.mxu0 0.0
  %v3000 = vand.u32 %v245, 4294901760
  %v3001 = vsub.f32 %v245, %v3000
  %v3002 = vand.u32 %v3001, 4294901760
  %v3003 = vsub.f32 %v3001, %v3002
  %v3004 = vand.u32 %v3003, 4294901760
  %3005 = vmatpush1.msra.mxu0 %v3004
  %3006 = vmatprep.subr.mxu0 0.0
  %v3007 = vand.u32 %v246, 4294901760
  %v3008 = vsub.f32 %v246, %v3007
  %v3009 = vand.u32 %v3008, 4294901760
  %v3010 = vsub.f32 %v3008, %v3009
  %v3011 = vand.u32 %v3010, 4294901760
  %3012 = vmatpush1.msra.mxu0 %v3011
  %3013 = vmatprep.subr.mxu0 0.0
  %v3014 = vand.u32 %v247, 4294901760
  %v3015 = vsub.f32 %v247, %v3014
  %v3016 = vand.u32 %v3015, 4294901760
  %v3017 = vsub.f32 %v3015, %v3016
  %v3018 = vand.u32 %v3017, 4294901760
  %3019 = vmatpush1.msra.mxu0 %v3018
  %3020 = vmatprep.subr.mxu0 0.0
  %v3021 = vand.u32 %v248, 4294901760
  %v3022 = vsub.f32 %v248, %v3021
  %v3023 = vand.u32 %v3022, 4294901760
  %v3024 = vsub.f32 %v3022, %v3023
  %v3025 = vand.u32 %v3024, 4294901760
  %3026 = vmatpush1.msra.mxu0 %v3025
  %3027 = vmatprep.subr.mxu0 0.0
  %v3028 = vand.u32 %v249, 4294901760
  %v3029 = vsub.f32 %v249, %v3028
  %v3030 = vand.u32 %v3029, 4294901760
  %v3031 = vsub.f32 %v3029, %v3030
  %v3032 = vand.u32 %v3031, 4294901760
  %3033 = vmatpush1.msra.mxu0 %v3032
  %3034 = vmatprep.subr.mxu0 0.0
  %v3035 = vand.u32 %v250, 4294901760
  %v3036 = vsub.f32 %v250, %v3035
  %v3037 = vand.u32 %v3036, 4294901760
  %v3038 = vsub.f32 %v3036, %v3037
  %v3039 = vand.u32 %v3038, 4294901760
  %3040 = vmatpush1.msra.mxu0 %v3039
  %3041 = vmatprep.subr.mxu0 0.0
  %v3042 = vand.u32 %v251, 4294901760
  %v3043 = vsub.f32 %v251, %v3042
  %v3044 = vand.u32 %v3043, 4294901760
  %v3045 = vsub.f32 %v3043, %v3044
  %v3046 = vand.u32 %v3045, 4294901760
  %3047 = vmatpush1.msra.mxu0 %v3046
  %3048 = vmatprep.subr.mxu0 0.0
  %v3049 = vand.u32 %v252, 4294901760
  %v3050 = vsub.f32 %v252, %v3049
  %v3051 = vand.u32 %v3050, 4294901760
  %v3052 = vsub.f32 %v3050, %v3051
  %v3053 = vand.u32 %v3052, 4294901760
  %3054 = vmatpush1.msra.mxu0 %v3053
  %3055 = vmatprep.subr.mxu0 0.0
  %v3056 = vand.u32 %v253, 4294901760
  %v3057 = vsub.f32 %v253, %v3056
  %v3058 = vand.u32 %v3057, 4294901760
  %v3059 = vsub.f32 %v3057, %v3058
  %v3060 = vand.u32 %v3059, 4294901760
  %3061 = vmatpush1.msra.mxu0 %v3060
  %3062 = vmatprep.subr.mxu0 0.0
  %v3063 = vand.u32 %v254, 4294901760
  %v3064 = vsub.f32 %v254, %v3063
  %v3065 = vand.u32 %v3064, 4294901760
  %v3066 = vsub.f32 %v3064, %v3065
  %v3067 = vand.u32 %v3066, 4294901760
  %3068 = vmatpush1.msra.mxu0 %v3067
  %3069 = vmatprep.subr.mxu0 0.0
  %v3070 = vand.u32 %v255, 4294901760
  %v3071 = vsub.f32 %v255, %v3070
  %v3072 = vand.u32 %v3071, 4294901760
  %v3073 = vsub.f32 %v3071, %v3072
  %v3074 = vand.u32 %v3073, 4294901760
  %3075 = vmatpush1.msra.mxu0 %v3074
  %3076 = vmatprep.subr.mxu0 0.0
  %v3077 = vand.u32 %v256, 4294901760
  %v3078 = vsub.f32 %v256, %v3077
  %v3079 = vand.u32 %v3078, 4294901760
  %v3080 = vsub.f32 %v3078, %v3079
  %v3081 = vand.u32 %v3080, 4294901760
  %3082 = vmatpush1.msra.mxu0 %v3081
  %3083 = vmatprep.subr.mxu0 0.0
  %v3084 = vand.u32 %v257, 4294901760
  %v3085 = vsub.f32 %v257, %v3084
  %v3086 = vand.u32 %v3085, 4294901760
  %v3087 = vsub.f32 %v3085, %v3086
  %v3088 = vand.u32 %v3087, 4294901760
  %3089 = vmatpush1.msra.mxu0 %v3088
  %3090 = vmatprep.subr.mxu0 0.0
  %v3091 = vand.u32 %v258, 4294901760
  %v3092 = vsub.f32 %v258, %v3091
  %v3093 = vand.u32 %v3092, 4294901760
  %v3094 = vsub.f32 %v3092, %v3093
  %v3095 = vand.u32 %v3094, 4294901760
  %3096 = vmatpush1.msra.mxu0 %v3095
  %3097 = vmatprep.subr.mxu0 0.0
  %v3098 = vand.u32 %v259, 4294901760
  %v3099 = vsub.f32 %v259, %v3098
  %v3100 = vand.u32 %v3099, 4294901760
  %v3101 = vsub.f32 %v3099, %v3100
  %v3102 = vand.u32 %v3101, 4294901760
  %3103 = vmatpush1.msra.mxu0 %v3102
  %3104 = vmatprep.subr.mxu0 0.0
  %v3105 = vand.u32 %v260, 4294901760
  %v3106 = vsub.f32 %v260, %v3105
  %v3107 = vand.u32 %v3106, 4294901760
  %v3108 = vsub.f32 %v3106, %v3107
  %v3109 = vand.u32 %v3108, 4294901760
  %3110 = vmatpush1.msra.mxu0 %v3109
  %3111 = vmatprep.subr.mxu0 0.0
  %v3112 = vand.u32 %v261, 4294901760
  %v3113 = vsub.f32 %v261, %v3112
  %v3114 = vand.u32 %v3113, 4294901760
  %v3115 = vsub.f32 %v3113, %v3114
  %v3116 = vand.u32 %v3115, 4294901760
  %3117 = vmatpush1.msra.mxu0 %v3116
  %3118 = vmatprep.subr.mxu0 0.0
  %v3119 = vand.u32 %v262, 4294901760
  %v3120 = vsub.f32 %v262, %v3119
  %v3121 = vand.u32 %v3120, 4294901760
  %v3122 = vsub.f32 %v3120, %v3121
  %v3123 = vand.u32 %v3122, 4294901760
  %3124 = vmatpush1.msra.mxu0 %v3123
  %3125 = vmatprep.subr.mxu0 0.0
  %v3126 = vand.u32 %v263, 4294901760
  %v3127 = vsub.f32 %v263, %v3126
  %v3128 = vand.u32 %v3127, 4294901760
  %v3129 = vsub.f32 %v3127, %v3128
  %v3130 = vand.u32 %v3129, 4294901760
  %3131 = vmatpush1.msra.mxu0 %v3130
  %3132 = vmatprep.subr.mxu0 0.0
  %v3133 = vand.u32 %v264, 4294901760
  %v3134 = vsub.f32 %v264, %v3133
  %v3135 = vand.u32 %v3134, 4294901760
  %v3136 = vsub.f32 %v3134, %v3135
  %v3137 = vand.u32 %v3136, 4294901760
  %3138 = vmatpush1.msra.mxu0 %v3137
  %3139 = vmatprep.subr.mxu0 0.0
  %v3140 = vand.u32 %v265, 4294901760
  %v3141 = vsub.f32 %v265, %v3140
  %v3142 = vand.u32 %v3141, 4294901760
  %v3143 = vsub.f32 %v3141, %v3142
  %v3144 = vand.u32 %v3143, 4294901760
  %3145 = vmatpush1.msra.mxu0 %v3144
  %3146 = vmatprep.subr.mxu0 0.0
  %v3147 = vand.u32 %v266, 4294901760
  %v3148 = vsub.f32 %v266, %v3147
  %v3149 = vand.u32 %v3148, 4294901760
  %v3150 = vsub.f32 %v3148, %v3149
  %v3151 = vand.u32 %v3150, 4294901760
  %3152 = vmatpush1.msra.mxu0 %v3151
  %3153 = vmatprep.subr.mxu0 0.0
  %v3154 = vand.u32 %v267, 4294901760
  %v3155 = vsub.f32 %v267, %v3154
  %v3156 = vand.u32 %v3155, 4294901760
  %v3157 = vsub.f32 %v3155, %v3156
  %v3158 = vand.u32 %v3157, 4294901760
  %3159 = vmatpush1.msra.mxu0 %v3158
  %3160 = vmatprep.subr.mxu0 0.0
  %v3161 = vand.u32 %v268, 4294901760
  %v3162 = vsub.f32 %v268, %v3161
  %v3163 = vand.u32 %v3162, 4294901760
  %v3164 = vsub.f32 %v3162, %v3163
  %v3165 = vand.u32 %v3164, 4294901760
  %3166 = vmatpush1.msra.mxu0 %v3165
  %3167 = vmatprep.subr.mxu0 0.0
  %v3168 = vand.u32 %v269, 4294901760
  %v3169 = vsub.f32 %v269, %v3168
  %v3170 = vand.u32 %v3169, 4294901760
  %v3171 = vsub.f32 %v3169, %v3170
  %v3172 = vand.u32 %v3171, 4294901760
  %3173 = vmatpush1.msra.mxu0 %v3172
  %3174 = vmatprep.subr.mxu0 0.0
  %v3175 = vand.u32 %v270, 4294901760
  %v3176 = vsub.f32 %v270, %v3175
  %v3177 = vand.u32 %v3176, 4294901760
  %v3178 = vsub.f32 %v3176, %v3177
  %v3179 = vand.u32 %v3178, 4294901760
  %3180 = vmatpush1.msra.mxu0 %v3179
  %3181 = vmatprep.subr.mxu0 0.0
  %v3182 = vand.u32 %v271, 4294901760
  %v3183 = vsub.f32 %v271, %v3182
  %v3184 = vand.u32 %v3183, 4294901760
  %v3185 = vsub.f32 %v3183, %v3184
  %v3186 = vand.u32 %v3185, 4294901760
  %3187 = vmatpush1.msra.mxu0 %v3186
  %3188 = vmatprep.subr.mxu0 0.0
  %v3189 = vand.u32 %v272, 4294901760
  %v3190 = vsub.f32 %v272, %v3189
  %v3191 = vand.u32 %v3190, 4294901760
  %v3192 = vsub.f32 %v3190, %v3191
  %v3193 = vand.u32 %v3192, 4294901760
  %3194 = vmatpush1.msra.mxu0 %v3193
  %v3195 = vand.u32 %v144, 4294901760
  %3196 = vmatprep.mubr.f32.mxu0 %v3195
  %v3197 = vand.u32 %v143, 4294901760
  %3198 = vmatmul.mubr.f32.gmra.mrb[0].mxu0 %v3197
  %v3199 = vpop.f32.mrb[0].mxu0
  %v3200 = vadd.f32 %v2968, %v3199
  %v3201 = vpop.f32.mrb[0].mxu0
  %3202 = vdwg.mxu0
  %3203 = vmatprep.subr.mxu0 0.0
  %v3204 = vand.u32 %v241, 4294901760
  %v3205 = vsub.f32 %v241, %v3204
  %3206 = vmatpush1.msra.mxu0 %v3205
  %3207 = vmatprep.subr.mxu0 0.0
  %v3208 = vand.u32 %v242, 4294901760
  %v3209 = vsub.f32 %v242, %v3208
  %3210 = vmatpush1.msra.mxu0 %v3209
  %3211 = vmatprep.subr.mxu0 0.0
  %v3212 = vand.u32 %v243, 4294901760
  %v3213 = vsub.f32 %v243, %v3212
  %3214 = vmatpush1.msra.mxu0 %v3213
  %3215 = vmatprep.subr.mxu0 0.0
  %v3216 = vand.u32 %v244, 4294901760
  %v3217 = vsub.f32 %v244, %v3216
  %3218 = vmatpush1.msra.mxu0 %v3217
  %3219 = vmatprep.subr.mxu0 0.0
  %v3220 = vand.u32 %v245, 4294901760
  %v3221 = vsub.f32 %v245, %v3220
  %3222 = vmatpush1.msra.mxu0 %v3221
  %3223 = vmatprep.subr.mxu0 0.0
  %v3224 = vand.u32 %v246, 4294901760
  %v3225 = vsub.f32 %v246, %v3224
  %3226 = vmatpush1.msra.mxu0 %v3225
  %3227 = vmatprep.subr.mxu0 0.0
  %v3228 = vand.u32 %v247, 4294901760
  %v3229 = vsub.f32 %v247, %v3228
  %3230 = vmatpush1.msra.mxu0 %v3229
  %3231 = vmatprep.subr.mxu0 0.0
  %v3232 = vand.u32 %v248, 4294901760
  %v3233 = vsub.f32 %v248, %v3232
  %3234 = vmatpush1.msra.mxu0 %v3233
  %3235 = vmatprep.subr.mxu0 0.0
  %v3236 = vand.u32 %v249, 4294901760
  %v3237 = vsub.f32 %v249, %v3236
  %3238 = vmatpush1.msra.mxu0 %v3237
  %3239 = vmatprep.subr.mxu0 0.0
  %v3240 = vand.u32 %v250, 4294901760
  %v3241 = vsub.f32 %v250, %v3240
  %3242 = vmatpush1.msra.mxu0 %v3241
  %3243 = vmatprep.subr.mxu0 0.0
  %v3244 = vand.u32 %v251, 4294901760
  %v3245 = vsub.f32 %v251, %v3244
  %3246 = vmatpush1.msra.mxu0 %v3245
  %3247 = vmatprep.subr.mxu0 0.0
  %v3248 = vand.u32 %v252, 4294901760
  %v3249 = vsub.f32 %v252, %v3248
  %3250 = vmatpush1.msra.mxu0 %v3249
  %3251 = vmatprep.subr.mxu0 0.0
  %v3252 = vand.u32 %v253, 4294901760
  %v3253 = vsub.f32 %v253, %v3252
  %3254 = vmatpush1.msra.mxu0 %v3253
  %3255 = vmatprep.subr.mxu0 0.0
  %v3256 = vand.u32 %v254, 4294901760
  %v3257 = vsub.f32 %v254, %v3256
  %3258 = vmatpush1.msra.mxu0 %v3257
  %3259 = vmatprep.subr.mxu0 0.0
  %v3260 = vand.u32 %v255, 4294901760
  %v3261 = vsub.f32 %v255, %v3260
  %3262 = vmatpush1.msra.mxu0 %v3261
  %3263 = vmatprep.subr.mxu0 0.0
  %v3264 = vand.u32 %v256, 4294901760
  %v3265 = vsub.f32 %v256, %v3264
  %3266 = vmatpush1.msra.mxu0 %v3265
  %3267 = vmatprep.subr.mxu0 0.0
  %v3268 = vand.u32 %v257, 4294901760
  %v3269 = vsub.f32 %v257, %v3268
  %3270 = vmatpush1.msra.mxu0 %v3269
  %3271 = vmatprep.subr.mxu0 0.0
  %v3272 = vand.u32 %v258, 4294901760
  %v3273 = vsub.f32 %v258, %v3272
  %3274 = vmatpush1.msra.mxu0 %v3273
  %3275 = vmatprep.subr.mxu0 0.0
  %v3276 = vand.u32 %v259, 4294901760
  %v3277 = vsub.f32 %v259, %v3276
  %3278 = vmatpush1.msra.mxu0 %v3277
  %3279 = vmatprep.subr.mxu0 0.0
  %v3280 = vand.u32 %v260, 4294901760
  %v3281 = vsub.f32 %v260, %v3280
  %3282 = vmatpush1.msra.mxu0 %v3281
  %3283 = vmatprep.subr.mxu0 0.0
  %v3284 = vand.u32 %v261, 4294901760
  %v3285 = vsub.f32 %v261, %v3284
  %3286 = vmatpush1.msra.mxu0 %v3285
  %3287 = vmatprep.subr.mxu0 0.0
  %v3288 = vand.u32 %v262, 4294901760
  %v3289 = vsub.f32 %v262, %v3288
  %3290 = vmatpush1.msra.mxu0 %v3289
  %3291 = vmatprep.subr.mxu0 0.0
  %v3292 = vand.u32 %v263, 4294901760
  %v3293 = vsub.f32 %v263, %v3292
  %3294 = vmatpush1.msra.mxu0 %v3293
  %3295 = vmatprep.subr.mxu0 0.0
  %v3296 = vand.u32 %v264, 4294901760
  %v3297 = vsub.f32 %v264, %v3296
  %3298 = vmatpush1.msra.mxu0 %v3297
  %3299 = vmatprep.subr.mxu0 0.0
  %v3300 = vand.u32 %v265, 4294901760
  %v3301 = vsub.f32 %v265, %v3300
  %3302 = vmatpush1.msra.mxu0 %v3301
  %3303 = vmatprep.subr.mxu0 0.0
  %v3304 = vand.u32 %v266, 4294901760
  %v3305 = vsub.f32 %v266, %v3304
  %3306 = vmatpush1.msra.mxu0 %v3305
  %3307 = vmatprep.subr.mxu0 0.0
  %v3308 = vand.u32 %v267, 4294901760
  %v3309 = vsub.f32 %v267, %v3308
  %3310 = vmatpush1.msra.mxu0 %v3309
  %3311 = vmatprep.subr.mxu0 0.0
  %v3312 = vand.u32 %v268, 4294901760
  %v3313 = vsub.f32 %v268, %v3312
  %3314 = vmatpush1.msra.mxu0 %v3313
  %3315 = vmatprep.subr.mxu0 0.0
  %v3316 = vand.u32 %v269, 4294901760
  %v3317 = vsub.f32 %v269, %v3316
  %3318 = vmatpush1.msra.mxu0 %v3317
  %3319 = vmatprep.subr.mxu0 0.0
  %v3320 = vand.u32 %v270, 4294901760
  %v3321 = vsub.f32 %v270, %v3320
  %3322 = vmatpush1.msra.mxu0 %v3321
  %3323 = vmatprep.subr.mxu0 0.0
  %v3324 = vand.u32 %v271, 4294901760
  %v3325 = vsub.f32 %v271, %v3324
  %3326 = vmatpush1.msra.mxu0 %v3325
  %3327 = vmatprep.subr.mxu0 0.0
  %v3328 = vand.u32 %v272, 4294901760
  %v3329 = vsub.f32 %v272, %v3328
  %3330 = vmatpush1.msra.mxu0 %v3329
  %v3331 = vand.u32 %v144, 4294901760
  %v3332 = vsub.f32 %v144, %v3331
  %3333 = vmatprep.mubr.f32.mxu0 %v3332
  %v3334 = vand.u32 %v143, 4294901760
  %v3335 = vsub.f32 %v143, %v3334
  %3336 = vmatmul.mubr.f32.gmra.mrb[0].mxu0 %v3335
  %v3337 = vpop.f32.mrb[0].mxu0
  %v3338 = vadd.f32 %v3200, %v3337
  %v3339 = vpop.f32.mrb[0].mxu0
  %3340 = vdwg.mxu0
  %3341 = vmatprep.subr.mxu0 0.0
  %v3342 = vand.u32 %v241, 4294901760
  %3343 = vmatpush1.msra.mxu0 %v3342
  %3344 = vmatprep.subr.mxu0 0.0
  %v3345 = vand.u32 %v242, 4294901760
  %3346 = vmatpush1.msra.mxu0 %v3345
  %3347 = vmatprep.subr.mxu0 0.0
  %v3348 = vand.u32 %v243, 4294901760
  %3349 = vmatpush1.msra.mxu0 %v3348
  %3350 = vmatprep.subr.mxu0 0.0
  %v3351 = vand.u32 %v244, 4294901760
  %3352 = vmatpush1.msra.mxu0 %v3351
  %3353 = vmatprep.subr.mxu0 0.0
  %v3354 = vand.u32 %v245, 4294901760
  %3355 = vmatpush1.msra.mxu0 %v3354
  %3356 = vmatprep.subr.mxu0 0.0
  %v3357 = vand.u32 %v246, 4294901760
  %3358 = vmatpush1.msra.mxu0 %v3357
  %3359 = vmatprep.subr.mxu0 0.0
  %v3360 = vand.u32 %v247, 4294901760
  %3361 = vmatpush1.msra.mxu0 %v3360
  %3362 = vmatprep.subr.mxu0 0.0
  %v3363 = vand.u32 %v248, 4294901760
  %3364 = vmatpush1.msra.mxu0 %v3363
  %3365 = vmatprep.subr.mxu0 0.0
  %v3366 = vand.u32 %v249, 4294901760
  %3367 = vmatpush1.msra.mxu0 %v3366
  %3368 = vmatprep.subr.mxu0 0.0
  %v3369 = vand.u32 %v250, 4294901760
  %3370 = vmatpush1.msra.mxu0 %v3369
  %3371 = vmatprep.subr.mxu0 0.0
  %v3372 = vand.u32 %v251, 4294901760
  %3373 = vmatpush1.msra.mxu0 %v3372
  %3374 = vmatprep.subr.mxu0 0.0
  %v3375 = vand.u32 %v252, 4294901760
  %3376 = vmatpush1.msra.mxu0 %v3375
  %3377 = vmatprep.subr.mxu0 0.0
  %v3378 = vand.u32 %v253, 4294901760
  %3379 = vmatpush1.msra.mxu0 %v3378
  %3380 = vmatprep.subr.mxu0 0.0
  %v3381 = vand.u32 %v254, 4294901760
  %3382 = vmatpush1.msra.mxu0 %v3381
  %3383 = vmatprep.subr.mxu0 0.0
  %v3384 = vand.u32 %v255, 4294901760
  %3385 = vmatpush1.msra.mxu0 %v3384
  %3386 = vmatprep.subr.mxu0 0.0
  %v3387 = vand.u32 %v256, 4294901760
  %3388 = vmatpush1.msra.mxu0 %v3387
  %3389 = vmatprep.subr.mxu0 0.0
  %v3390 = vand.u32 %v257, 4294901760
  %3391 = vmatpush1.msra.mxu0 %v3390
  %3392 = vmatprep.subr.mxu0 0.0
  %v3393 = vand.u32 %v258, 4294901760
  %3394 = vmatpush1.msra.mxu0 %v3393
  %3395 = vmatprep.subr.mxu0 0.0
  %v3396 = vand.u32 %v259, 4294901760
  %3397 = vmatpush1.msra.mxu0 %v3396
  %3398 = vmatprep.subr.mxu0 0.0
  %v3399 = vand.u32 %v260, 4294901760
  %3400 = vmatpush1.msra.mxu0 %v3399
  %3401 = vmatprep.subr.mxu0 0.0
  %v3402 = vand.u32 %v261, 4294901760
  %3403 = vmatpush1.msra.mxu0 %v3402
  %3404 = vmatprep.subr.mxu0 0.0
  %v3405 = vand.u32 %v262, 4294901760
  %3406 = vmatpush1.msra.mxu0 %v3405
  %3407 = vmatprep.subr.mxu0 0.0
  %v3408 = vand.u32 %v263, 4294901760
  %3409 = vmatpush1.msra.mxu0 %v3408
  %3410 = vmatprep.subr.mxu0 0.0
  %v3411 = vand.u32 %v264, 4294901760
  %3412 = vmatpush1.msra.mxu0 %v3411
  %3413 = vmatprep.subr.mxu0 0.0
  %v3414 = vand.u32 %v265, 4294901760
  %3415 = vmatpush1.msra.mxu0 %v3414
  %3416 = vmatprep.subr.mxu0 0.0
  %v3417 = vand.u32 %v266, 4294901760
  %3418 = vmatpush1.msra.mxu0 %v3417
  %3419 = vmatprep.subr.mxu0 0.0
  %v3420 = vand.u32 %v267, 4294901760
  %3421 = vmatpush1.msra.mxu0 %v3420
  %3422 = vmatprep.subr.mxu0 0.0
  %v3423 = vand.u32 %v268, 4294901760
  %3424 = vmatpush1.msra.mxu0 %v3423
  %3425 = vmatprep.subr.mxu0 0.0
  %v3426 = vand.u32 %v269, 4294901760
  %3427 = vmatpush1.msra.mxu0 %v3426
  %3428 = vmatprep.subr.mxu0 0.0
  %v3429 = vand.u32 %v270, 4294901760
  %3430 = vmatpush1.msra.mxu0 %v3429
  %3431 = vmatprep.subr.mxu0 0.0
  %v3432 = vand.u32 %v271, 4294901760
  %3433 = vmatpush1.msra.mxu0 %v3432
  %3434 = vmatprep.subr.mxu0 0.0
  %v3435 = vand.u32 %v272, 4294901760
  %3436 = vmatpush1.msra.mxu0 %v3435
  %v3437 = vand.u32 %v144, 4294901760
  %v3438 = vsub.f32 %v144, %v3437
  %v3439 = vand.u32 %v3438, 4294901760
  %3440 = vmatprep.mubr.f32.mxu0 %v3439
  %v3441 = vand.u32 %v143, 4294901760
  %v3442 = vsub.f32 %v143, %v3441
  %v3443 = vand.u32 %v3442, 4294901760
  %3444 = vmatmul.mubr.f32.gmra.mrb[0].mxu0 %v3443
  %v3445 = vpop.f32.mrb[0].mxu0
  %v3446 = vadd.f32 %v3338, %v3445
  %v3447 = vpop.f32.mrb[0].mxu0
  %3448 = vdwg.mxu0
  %3449 = vmatprep.subr.mxu0 0.0
  %v3450 = vand.u32 %v241, 4294901760
  %v3451 = vsub.f32 %v241, %v3450
  %v3452 = vand.u32 %v3451, 4294901760
  %3453 = vmatpush1.msra.mxu0 %v3452
  %3454 = vmatprep.subr.mxu0 0.0
  %v3455 = vand.u32 %v242, 4294901760
  %v3456 = vsub.f32 %v242, %v3455
  %v3457 = vand.u32 %v3456, 4294901760
  %3458 = vmatpush1.msra.mxu0 %v3457
  %3459 = vmatprep.subr.mxu0 0.0
  %v3460 = vand.u32 %v243, 4294901760
  %v3461 = vsub.f32 %v243, %v3460
  %v3462 = vand.u32 %v3461, 4294901760
  %3463 = vmatpush1.msra.mxu0 %v3462
  %3464 = vmatprep.subr.mxu0 0.0
  %v3465 = vand.u32 %v244, 4294901760
  %v3466 = vsub.f32 %v244, %v3465
  %v3467 = vand.u32 %v3466, 4294901760
  %3468 = vmatpush1.msra.mxu0 %v3467
  %3469 = vmatprep.subr.mxu0 0.0
  %v3470 = vand.u32 %v245, 4294901760
  %v3471 = vsub.f32 %v245, %v3470
  %v3472 = vand.u32 %v3471, 4294901760
  %3473 = vmatpush1.msra.mxu0 %v3472
  %3474 = vmatprep.subr.mxu0 0.0
  %v3475 = vand.u32 %v246, 4294901760
  %v3476 = vsub.f32 %v246, %v3475
  %v3477 = vand.u32 %v3476, 4294901760
  %3478 = vmatpush1.msra.mxu0 %v3477
  %3479 = vmatprep.subr.mxu0 0.0
  %v3480 = vand.u32 %v247, 4294901760
  %v3481 = vsub.f32 %v247, %v3480
  %v3482 = vand.u32 %v3481, 4294901760
  %3483 = vmatpush1.msra.mxu0 %v3482
  %3484 = vmatprep.subr.mxu0 0.0
  %v3485 = vand.u32 %v248, 4294901760
  %v3486 = vsub.f32 %v248, %v3485
  %v3487 = vand.u32 %v3486, 4294901760
  %3488 = vmatpush1.msra.mxu0 %v3487
  %3489 = vmatprep.subr.mxu0 0.0
  %v3490 = vand.u32 %v249, 4294901760
  %v3491 = vsub.f32 %v249, %v3490
  %v3492 = vand.u32 %v3491, 4294901760
  %3493 = vmatpush1.msra.mxu0 %v3492
  %3494 = vmatprep.subr.mxu0 0.0
  %v3495 = vand.u32 %v250, 4294901760
  %v3496 = vsub.f32 %v250, %v3495
  %v3497 = vand.u32 %v3496, 4294901760
  %3498 = vmatpush1.msra.mxu0 %v3497
  %3499 = vmatprep.subr.mxu0 0.0
  %v3500 = vand.u32 %v251, 4294901760
  %v3501 = vsub.f32 %v251, %v3500
  %v3502 = vand.u32 %v3501, 4294901760
  %3503 = vmatpush1.msra.mxu0 %v3502
  %3504 = vmatprep.subr.mxu0 0.0
  %v3505 = vand.u32 %v252, 4294901760
  %v3506 = vsub.f32 %v252, %v3505
  %v3507 = vand.u32 %v3506, 4294901760
  %3508 = vmatpush1.msra.mxu0 %v3507
  %3509 = vmatprep.subr.mxu0 0.0
  %v3510 = vand.u32 %v253, 4294901760
  %v3511 = vsub.f32 %v253, %v3510
  %v3512 = vand.u32 %v3511, 4294901760
  %3513 = vmatpush1.msra.mxu0 %v3512
  %3514 = vmatprep.subr.mxu0 0.0
  %v3515 = vand.u32 %v254, 4294901760
  %v3516 = vsub.f32 %v254, %v3515
  %v3517 = vand.u32 %v3516, 4294901760
  %3518 = vmatpush1.msra.mxu0 %v3517
  %3519 = vmatprep.subr.mxu0 0.0
  %v3520 = vand.u32 %v255, 4294901760
  %v3521 = vsub.f32 %v255, %v3520
  %v3522 = vand.u32 %v3521, 4294901760
  %3523 = vmatpush1.msra.mxu0 %v3522
  %3524 = vmatprep.subr.mxu0 0.0
  %v3525 = vand.u32 %v256, 4294901760
  %v3526 = vsub.f32 %v256, %v3525
  %v3527 = vand.u32 %v3526, 4294901760
  %3528 = vmatpush1.msra.mxu0 %v3527
  %3529 = vmatprep.subr.mxu0 0.0
  %v3530 = vand.u32 %v257, 4294901760
  %v3531 = vsub.f32 %v257, %v3530
  %v3532 = vand.u32 %v3531, 4294901760
  %3533 = vmatpush1.msra.mxu0 %v3532
  %3534 = vmatprep.subr.mxu0 0.0
  %v3535 = vand.u32 %v258, 4294901760
  %v3536 = vsub.f32 %v258, %v3535
  %v3537 = vand.u32 %v3536, 4294901760
  %3538 = vmatpush1.msra.mxu0 %v3537
  %3539 = vmatprep.subr.mxu0 0.0
  %v3540 = vand.u32 %v259, 4294901760
  %v3541 = vsub.f32 %v259, %v3540
  %v3542 = vand.u32 %v3541, 4294901760
  %3543 = vmatpush1.msra.mxu0 %v3542
  %3544 = vmatprep.subr.mxu0 0.0
  %v3545 = vand.u32 %v260, 4294901760
  %v3546 = vsub.f32 %v260, %v3545
  %v3547 = vand.u32 %v3546, 4294901760
  %3548 = vmatpush1.msra.mxu0 %v3547
  %3549 = vmatprep.subr.mxu0 0.0
  %v3550 = vand.u32 %v261, 4294901760
  %v3551 = vsub.f32 %v261, %v3550
  %v3552 = vand.u32 %v3551, 4294901760
  %3553 = vmatpush1.msra.mxu0 %v3552
  %3554 = vmatprep.subr.mxu0 0.0
  %v3555 = vand.u32 %v262, 4294901760
  %v3556 = vsub.f32 %v262, %v3555
  %v3557 = vand.u32 %v3556, 4294901760
  %3558 = vmatpush1.msra.mxu0 %v3557
  %3559 = vmatprep.subr.mxu0 0.0
  %v3560 = vand.u32 %v263, 4294901760
  %v3561 = vsub.f32 %v263, %v3560
  %v3562 = vand.u32 %v3561, 4294901760
  %3563 = vmatpush1.msra.mxu0 %v3562
  %3564 = vmatprep.subr.mxu0 0.0
  %v3565 = vand.u32 %v264, 4294901760
  %v3566 = vsub.f32 %v264, %v3565
  %v3567 = vand.u32 %v3566, 4294901760
  %3568 = vmatpush1.msra.mxu0 %v3567
  %3569 = vmatprep.subr.mxu0 0.0
  %v3570 = vand.u32 %v265, 4294901760
  %v3571 = vsub.f32 %v265, %v3570
  %v3572 = vand.u32 %v3571, 4294901760
  %3573 = vmatpush1.msra.mxu0 %v3572
  %3574 = vmatprep.subr.mxu0 0.0
  %v3575 = vand.u32 %v266, 4294901760
  %v3576 = vsub.f32 %v266, %v3575
  %v3577 = vand.u32 %v3576, 4294901760
  %3578 = vmatpush1.msra.mxu0 %v3577
  %3579 = vmatprep.subr.mxu0 0.0
  %v3580 = vand.u32 %v267, 4294901760
  %v3581 = vsub.f32 %v267, %v3580
  %v3582 = vand.u32 %v3581, 4294901760
  %3583 = vmatpush1.msra.mxu0 %v3582
  %3584 = vmatprep.subr.mxu0 0.0
  %v3585 = vand.u32 %v268, 4294901760
  %v3586 = vsub.f32 %v268, %v3585
  %v3587 = vand.u32 %v3586, 4294901760
  %3588 = vmatpush1.msra.mxu0 %v3587
  %3589 = vmatprep.subr.mxu0 0.0
  %v3590 = vand.u32 %v269, 4294901760
  %v3591 = vsub.f32 %v269, %v3590
  %v3592 = vand.u32 %v3591, 4294901760
  %3593 = vmatpush1.msra.mxu0 %v3592
  %3594 = vmatprep.subr.mxu0 0.0
  %v3595 = vand.u32 %v270, 4294901760
  %v3596 = vsub.f32 %v270, %v3595
  %v3597 = vand.u32 %v3596, 4294901760
  %3598 = vmatpush1.msra.mxu0 %v3597
  %3599 = vmatprep.subr.mxu0 0.0
  %v3600 = vand.u32 %v271, 4294901760
  %v3601 = vsub.f32 %v271, %v3600
  %v3602 = vand.u32 %v3601, 4294901760
  %3603 = vmatpush1.msra.mxu0 %v3602
  %3604 = vmatprep.subr.mxu0 0.0
  %v3605 = vand.u32 %v272, 4294901760
  %v3606 = vsub.f32 %v272, %v3605
  %v3607 = vand.u32 %v3606, 4294901760
  %3608 = vmatpush1.msra.mxu0 %v3607
  %v3609 = vand.u32 %v144, 4294901760
  %3610 = vmatprep.mubr.f32.mxu0 %v3609
  %v3611 = vand.u32 %v143, 4294901760
  %3612 = vmatmul.mubr.f32.gmra.mrb[0].mxu0 %v3611
  %v3613 = vpop.f32.mrb[0].mxu0
  %v3614 = vadd.f32 %v3446, %v3613
  %v3615 = vpop.f32.mrb[0].mxu0
  %3616 = vdwg.mxu0
  %3617 = vmatprep.subr.mxu0 0.0
  %v3618 = vand.u32 %v241, 4294901760
  %3619 = vmatpush1.msra.mxu0 %v3618
  %3620 = vmatprep.subr.mxu0 0.0
  %v3621 = vand.u32 %v242, 4294901760
  %3622 = vmatpush1.msra.mxu0 %v3621
  %3623 = vmatprep.subr.mxu0 0.0
  %v3624 = vand.u32 %v243, 4294901760
  %3625 = vmatpush1.msra.mxu0 %v3624
  %3626 = vmatprep.subr.mxu0 0.0
  %v3627 = vand.u32 %v244, 4294901760
  %3628 = vmatpush1.msra.mxu0 %v3627
  %3629 = vmatprep.subr.mxu0 0.0
  %v3630 = vand.u32 %v245, 4294901760
  %3631 = vmatpush1.msra.mxu0 %v3630
  %3632 = vmatprep.subr.mxu0 0.0
  %v3633 = vand.u32 %v246, 4294901760
  %3634 = vmatpush1.msra.mxu0 %v3633
  %3635 = vmatprep.subr.mxu0 0.0
  %v3636 = vand.u32 %v247, 4294901760
  %3637 = vmatpush1.msra.mxu0 %v3636
  %3638 = vmatprep.subr.mxu0 0.0
  %v3639 = vand.u32 %v248, 4294901760
  %3640 = vmatpush1.msra.mxu0 %v3639
  %3641 = vmatprep.subr.mxu0 0.0
  %v3642 = vand.u32 %v249, 4294901760
  %3643 = vmatpush1.msra.mxu0 %v3642
  %3644 = vmatprep.subr.mxu0 0.0
  %v3645 = vand.u32 %v250, 4294901760
  %3646 = vmatpush1.msra.mxu0 %v3645
  %3647 = vmatprep.subr.mxu0 0.0
  %v3648 = vand.u32 %v251, 4294901760
  %3649 = vmatpush1.msra.mxu0 %v3648
  %3650 = vmatprep.subr.mxu0 0.0
  %v3651 = vand.u32 %v252, 4294901760
  %3652 = vmatpush1.msra.mxu0 %v3651
  %3653 = vmatprep.subr.mxu0 0.0
  %v3654 = vand.u32 %v253, 4294901760
  %3655 = vmatpush1.msra.mxu0 %v3654
  %3656 = vmatprep.subr.mxu0 0.0
  %v3657 = vand.u32 %v254, 4294901760
  %3658 = vmatpush1.msra.mxu0 %v3657
  %3659 = vmatprep.subr.mxu0 0.0
  %v3660 = vand.u32 %v255, 4294901760
  %3661 = vmatpush1.msra.mxu0 %v3660
  %3662 = vmatprep.subr.mxu0 0.0
  %v3663 = vand.u32 %v256, 4294901760
  %3664 = vmatpush1.msra.mxu0 %v3663
  %3665 = vmatprep.subr.mxu0 0.0
  %v3666 = vand.u32 %v257, 4294901760
  %3667 = vmatpush1.msra.mxu0 %v3666
  %3668 = vmatprep.subr.mxu0 0.0
  %v3669 = vand.u32 %v258, 4294901760
  %3670 = vmatpush1.msra.mxu0 %v3669
  %3671 = vmatprep.subr.mxu0 0.0
  %v3672 = vand.u32 %v259, 4294901760
  %3673 = vmatpush1.msra.mxu0 %v3672
  %3674 = vmatprep.subr.mxu0 0.0
  %v3675 = vand.u32 %v260, 4294901760
  %3676 = vmatpush1.msra.mxu0 %v3675
  %3677 = vmatprep.subr.mxu0 0.0
  %v3678 = vand.u32 %v261, 4294901760
  %3679 = vmatpush1.msra.mxu0 %v3678
  %3680 = vmatprep.subr.mxu0 0.0
  %v3681 = vand.u32 %v262, 4294901760
  %3682 = vmatpush1.msra.mxu0 %v3681
  %3683 = vmatprep.subr.mxu0 0.0
  %v3684 = vand.u32 %v263, 4294901760
  %3685 = vmatpush1.msra.mxu0 %v3684
  %3686 = vmatprep.subr.mxu0 0.0
  %v3687 = vand.u32 %v264, 4294901760
  %3688 = vmatpush1.msra.mxu0 %v3687
  %3689 = vmatprep.subr.mxu0 0.0
  %v3690 = vand.u32 %v265, 4294901760
  %3691 = vmatpush1.msra.mxu0 %v3690
  %3692 = vmatprep.subr.mxu0 0.0
  %v3693 = vand.u32 %v266, 4294901760
  %3694 = vmatpush1.msra.mxu0 %v3693
  %3695 = vmatprep.subr.mxu0 0.0
  %v3696 = vand.u32 %v267, 4294901760
  %3697 = vmatpush1.msra.mxu0 %v3696
  %3698 = vmatprep.subr.mxu0 0.0
  %v3699 = vand.u32 %v268, 4294901760
  %3700 = vmatpush1.msra.mxu0 %v3699
  %3701 = vmatprep.subr.mxu0 0.0
  %v3702 = vand.u32 %v269, 4294901760
  %3703 = vmatpush1.msra.mxu0 %v3702
  %3704 = vmatprep.subr.mxu0 0.0
  %v3705 = vand.u32 %v270, 4294901760
  %3706 = vmatpush1.msra.mxu0 %v3705
  %3707 = vmatprep.subr.mxu0 0.0
  %v3708 = vand.u32 %v271, 4294901760
  %3709 = vmatpush1.msra.mxu0 %v3708
  %3710 = vmatprep.subr.mxu0 0.0
  %v3711 = vand.u32 %v272, 4294901760
  %3712 = vmatpush1.msra.mxu0 %v3711
  %v3713 = vand.u32 %v144, 4294901760
  %3714 = vmatprep.mubr.f32.mxu0 %v3713
  %v3715 = vand.u32 %v143, 4294901760
  %3716 = vmatmul.mubr.f32.gmra.mrb[0].mxu0 %v3715
  %v3717 = vpop.f32.mrb[0].mxu0
  %v3718 = vadd.f32 %v3614, %v3717
  %v3719 = vpop.f32.mrb[0].mxu0
  %3720 = vdwg.mxu0
  %v3725 = vrot.slane %v141, 1
  %v3726 = vrot.slane %v142, 1
  %v3727 = vrot.slane %v143, 1
  %v3728 = vrot.slane %v144, 1
  %3733 = vmatprep.subr.mxu0 0.0
  %3734 = vmatpush1.msra.mxu0 %v13
  %3735 = vmatprep.subr.mxu0 0.0
  %3736 = vmatpush1.msra.mxu0 %v14
  %3737 = vmatprep.subr.mxu0 0.0
  %3738 = vmatpush1.msra.mxu0 %v15
  %3739 = vmatprep.subr.mxu0 0.0
  %3740 = vmatpush1.msra.mxu0 %v16
  %3741 = vmatprep.subr.mxu0 0.0
  %3742 = vmatpush1.msra.mxu0 %v17
  %3743 = vmatprep.subr.mxu0 0.0
  %3744 = vmatpush1.msra.mxu0 %v18
  %3745 = vmatprep.subr.mxu0 0.0
  %3746 = vmatpush1.msra.mxu0 %v19
  %3747 = vmatprep.subr.mxu0 0.0
  %3748 = vmatpush1.msra.mxu0 %v20
  %3749 = vmatprep.subr.mxu0 0.0
  %3750 = vmatpush1.msra.mxu0 %v21
  %3751 = vmatprep.subr.mxu0 0.0
  %3752 = vmatpush1.msra.mxu0 %v22
  %3753 = vmatprep.subr.mxu0 0.0
  %3754 = vmatpush1.msra.mxu0 %v23
  %3755 = vmatprep.subr.mxu0 0.0
  %3756 = vmatpush1.msra.mxu0 %v24
  %3757 = vmatprep.subr.mxu0 0.0
  %3758 = vmatpush1.msra.mxu0 %v25
  %3759 = vmatprep.subr.mxu0 0.0
  %3760 = vmatpush1.msra.mxu0 %v26
  %3761 = vmatprep.subr.mxu0 0.0
  %3762 = vmatpush1.msra.mxu0 %v27
  %3763 = vmatprep.subr.mxu0 0.0
  %3764 = vmatpush1.msra.mxu0 %v28
  %3765 = vmatprep.subr.mxu0 0.0
  %3766 = vmatpush1.msra.mxu0 %v29
  %3767 = vmatprep.subr.mxu0 0.0
  %3768 = vmatpush1.msra.mxu0 %v30
  %3769 = vmatprep.subr.mxu0 0.0
  %3770 = vmatpush1.msra.mxu0 %v31
  %3771 = vmatprep.subr.mxu0 0.0
  %3772 = vmatpush1.msra.mxu0 %v32
  %3773 = vmatprep.subr.mxu0 0.0
  %3774 = vmatpush1.msra.mxu0 %v33
  %3775 = vmatprep.subr.mxu0 0.0
  %3776 = vmatpush1.msra.mxu0 %v34
  %3777 = vmatprep.subr.mxu0 0.0
  %3778 = vmatpush1.msra.mxu0 %v35
  %3779 = vmatprep.subr.mxu0 0.0
  %3780 = vmatpush1.msra.mxu0 %v36
  %3781 = vmatprep.subr.mxu0 0.0
  %3782 = vmatpush1.msra.mxu0 %v37
  %3783 = vmatprep.subr.mxu0 0.0
  %3784 = vmatpush1.msra.mxu0 %v38
  %3785 = vmatprep.subr.mxu0 0.0
  %3786 = vmatpush1.msra.mxu0 %v39
  %3787 = vmatprep.subr.mxu0 0.0
  %3788 = vmatpush1.msra.mxu0 %v40
  %3789 = vmatprep.subr.mxu0 0.0
  %3790 = vmatpush1.msra.mxu0 %v41
  %3791 = vmatprep.subr.mxu0 0.0
  %3792 = vmatpush1.msra.mxu0 %v42
  %3793 = vmatprep.subr.mxu0 0.0
  %3794 = vmatpush1.msra.mxu0 %v43
  %3795 = vmatprep.subr.mxu0 0.0
  %3796 = vmatpush1.msra.mxu0 %v44
  %3797 = vmatprep.mubr.f32.mxu0 %v3726
  %3798 = vmatmul.mubr.f32.gmra.mrb[0].mxu0 %v3725
  %v3799 = vpop.f32.mrb[0].mxu0
  %v3800 = vadd.f32 0.0, %v3799
  %v3801 = vpop.f32.mrb[0].mxu0
  %3802 = vdwg.mxu0
  %3803 = vmatprep.subr.mxu0 0.0
  %3804 = vmatpush1.msra.mxu0 %v45
  %3805 = vmatprep.subr.mxu0 0.0
  %3806 = vmatpush1.msra.mxu0 %v46
  %3807 = vmatprep.subr.mxu0 0.0
  %3808 = vmatpush1.msra.mxu0 %v47
  %3809 = vmatprep.subr.mxu0 0.0
  %3810 = vmatpush1.msra.mxu0 %v48
  %3811 = vmatprep.subr.mxu0 0.0
  %3812 = vmatpush1.msra.mxu0 %v49
  %3813 = vmatprep.subr.mxu0 0.0
  %3814 = vmatpush1.msra.mxu0 %v50
  %3815 = vmatprep.subr.mxu0 0.0
  %3816 = vmatpush1.msra.mxu0 %v51
  %3817 = vmatprep.subr.mxu0 0.0
  %3818 = vmatpush1.msra.mxu0 %v52
  %3819 = vmatprep.subr.mxu0 0.0
  %3820 = vmatpush1.msra.mxu0 %v53
  %3821 = vmatprep.subr.mxu0 0.0
  %3822 = vmatpush1.msra.mxu0 %v54
  %3823 = vmatprep.subr.mxu0 0.0
  %3824 = vmatpush1.msra.mxu0 %v55
  %3825 = vmatprep.subr.mxu0 0.0
  %3826 = vmatpush1.msra.mxu0 %v56
  %3827 = vmatprep.subr.mxu0 0.0
  %3828 = vmatpush1.msra.mxu0 %v57
  %3829 = vmatprep.subr.mxu0 0.0
  %3830 = vmatpush1.msra.mxu0 %v58
  %3831 = vmatprep.subr.mxu0 0.0
  %3832 = vmatpush1.msra.mxu0 %v59
  %3833 = vmatprep.subr.mxu0 0.0
  %3834 = vmatpush1.msra.mxu0 %v60
  %3835 = vmatprep.subr.mxu0 0.0
  %3836 = vmatpush1.msra.mxu0 %v61
  %3837 = vmatprep.subr.mxu0 0.0
  %3838 = vmatpush1.msra.mxu0 %v62
  %3839 = vmatprep.subr.mxu0 0.0
  %3840 = vmatpush1.msra.mxu0 %v63
  %3841 = vmatprep.subr.mxu0 0.0
  %3842 = vmatpush1.msra.mxu0 %v64
  %3843 = vmatprep.subr.mxu0 0.0
  %3844 = vmatpush1.msra.mxu0 %v65
  %3845 = vmatprep.subr.mxu0 0.0
  %3846 = vmatpush1.msra.mxu0 %v66
  %3847 = vmatprep.subr.mxu0 0.0
  %3848 = vmatpush1.msra.mxu0 %v67
  %3849 = vmatprep.subr.mxu0 0.0
  %3850 = vmatpush1.msra.mxu0 %v68
  %3851 = vmatprep.subr.mxu0 0.0
  %3852 = vmatpush1.msra.mxu0 %v69
  %3853 = vmatprep.subr.mxu0 0.0
  %3854 = vmatpush1.msra.mxu0 %v70
  %3855 = vmatprep.subr.mxu0 0.0
  %3856 = vmatpush1.msra.mxu0 %v71
  %3857 = vmatprep.subr.mxu0 0.0
  %3858 = vmatpush1.msra.mxu0 %v72
  %3859 = vmatprep.subr.mxu0 0.0
  %3860 = vmatpush1.msra.mxu0 %v73
  %3861 = vmatprep.subr.mxu0 0.0
  %3862 = vmatpush1.msra.mxu0 %v74
  %3863 = vmatprep.subr.mxu0 0.0
  %3864 = vmatpush1.msra.mxu0 %v75
  %3865 = vmatprep.subr.mxu0 0.0
  %3866 = vmatpush1.msra.mxu0 %v76
  %3867 = vmatprep.mubr.f32.mxu0 %v3728
  %3868 = vmatmul.mubr.f32.gmra.mrb[0].mxu0 %v3727
  %v3869 = vpop.f32.mrb[0].mxu0
  %v3870 = vadd.f32 %v3800, %v3869
  %v3871 = vpop.f32.mrb[0].mxu0
  %3872 = vdwg.mxu0
  %3873 = vmatprep.subr.mxu0 0.0
  %3874 = vmatpush1.msra.mxu0 %v77
  %3875 = vmatprep.subr.mxu0 0.0
  %3876 = vmatpush1.msra.mxu0 %v78
  %3877 = vmatprep.subr.mxu0 0.0
  %3878 = vmatpush1.msra.mxu0 %v79
  %3879 = vmatprep.subr.mxu0 0.0
  %3880 = vmatpush1.msra.mxu0 %v80
  %3881 = vmatprep.subr.mxu0 0.0
  %3882 = vmatpush1.msra.mxu0 %v81
  %3883 = vmatprep.subr.mxu0 0.0
  %3884 = vmatpush1.msra.mxu0 %v82
  %3885 = vmatprep.subr.mxu0 0.0
  %3886 = vmatpush1.msra.mxu0 %v83
  %3887 = vmatprep.subr.mxu0 0.0
  %3888 = vmatpush1.msra.mxu0 %v84
  %3889 = vmatprep.subr.mxu0 0.0
  %3890 = vmatpush1.msra.mxu0 %v85
  %3891 = vmatprep.subr.mxu0 0.0
  %3892 = vmatpush1.msra.mxu0 %v86
  %3893 = vmatprep.subr.mxu0 0.0
  %3894 = vmatpush1.msra.mxu0 %v87
  %3895 = vmatprep.subr.mxu0 0.0
  %3896 = vmatpush1.msra.mxu0 %v88
  %3897 = vmatprep.subr.mxu0 0.0
  %3898 = vmatpush1.msra.mxu0 %v89
  %3899 = vmatprep.subr.mxu0 0.0
  %3900 = vmatpush1.msra.mxu0 %v90
  %3901 = vmatprep.subr.mxu0 0.0
  %3902 = vmatpush1.msra.mxu0 %v91
  %3903 = vmatprep.subr.mxu0 0.0
  %3904 = vmatpush1.msra.mxu0 %v92
  %3905 = vmatprep.subr.mxu0 0.0
  %3906 = vmatpush1.msra.mxu0 %v93
  %3907 = vmatprep.subr.mxu0 0.0
  %3908 = vmatpush1.msra.mxu0 %v94
  %3909 = vmatprep.subr.mxu0 0.0
  %3910 = vmatpush1.msra.mxu0 %v95
  %3911 = vmatprep.subr.mxu0 0.0
  %3912 = vmatpush1.msra.mxu0 %v96
  %3913 = vmatprep.subr.mxu0 0.0
  %3914 = vmatpush1.msra.mxu0 %v97
  %3915 = vmatprep.subr.mxu0 0.0
  %3916 = vmatpush1.msra.mxu0 %v98
  %3917 = vmatprep.subr.mxu0 0.0
  %3918 = vmatpush1.msra.mxu0 %v99
  %3919 = vmatprep.subr.mxu0 0.0
  %3920 = vmatpush1.msra.mxu0 %v100
  %3921 = vmatprep.subr.mxu0 0.0
  %3922 = vmatpush1.msra.mxu0 %v101
  %3923 = vmatprep.subr.mxu0 0.0
  %3924 = vmatpush1.msra.mxu0 %v102
  %3925 = vmatprep.subr.mxu0 0.0
  %3926 = vmatpush1.msra.mxu0 %v103
  %3927 = vmatprep.subr.mxu0 0.0
  %3928 = vmatpush1.msra.mxu0 %v104
  %3929 = vmatprep.subr.mxu0 0.0
  %3930 = vmatpush1.msra.mxu0 %v105
  %3931 = vmatprep.subr.mxu0 0.0
  %3932 = vmatpush1.msra.mxu0 %v106
  %3933 = vmatprep.subr.mxu0 0.0
  %3934 = vmatpush1.msra.mxu0 %v107
  %3935 = vmatprep.subr.mxu0 0.0
  %3936 = vmatpush1.msra.mxu0 %v108
  %3937 = vmatprep.mubr.f32.mxu0 %v3726
  %3938 = vmatmul.mubr.f32.gmra.mrb[0].mxu0 %v3725
  %v3939 = vpop.f32.mrb[0].mxu0
  %v3940 = vadd.f32 0.0, %v3939
  %v3941 = vpop.f32.mrb[0].mxu0
  %3942 = vdwg.mxu0
  %3943 = vmatprep.subr.mxu0 0.0
  %3944 = vmatpush1.msra.mxu0 %v109
  %3945 = vmatprep.subr.mxu0 0.0
  %3946 = vmatpush1.msra.mxu0 %v110
  %3947 = vmatprep.subr.mxu0 0.0
  %3948 = vmatpush1.msra.mxu0 %v111
  %3949 = vmatprep.subr.mxu0 0.0
  %3950 = vmatpush1.msra.mxu0 %v112
  %3951 = vmatprep.subr.mxu0 0.0
  %3952 = vmatpush1.msra.mxu0 %v113
  %3953 = vmatprep.subr.mxu0 0.0
  %3954 = vmatpush1.msra.mxu0 %v114
  %3955 = vmatprep.subr.mxu0 0.0
  %3956 = vmatpush1.msra.mxu0 %v115
  %3957 = vmatprep.subr.mxu0 0.0
  %3958 = vmatpush1.msra.mxu0 %v116
  %3959 = vmatprep.subr.mxu0 0.0
  %3960 = vmatpush1.msra.mxu0 %v117
  %3961 = vmatprep.subr.mxu0 0.0
  %3962 = vmatpush1.msra.mxu0 %v118
  %3963 = vmatprep.subr.mxu0 0.0
  %3964 = vmatpush1.msra.mxu0 %v119
  %3965 = vmatprep.subr.mxu0 0.0
  %3966 = vmatpush1.msra.mxu0 %v120
  %3967 = vmatprep.subr.mxu0 0.0
  %3968 = vmatpush1.msra.mxu0 %v121
  %3969 = vmatprep.subr.mxu0 0.0
  %3970 = vmatpush1.msra.mxu0 %v122
  %3971 = vmatprep.subr.mxu0 0.0
  %3972 = vmatpush1.msra.mxu0 %v123
  %3973 = vmatprep.subr.mxu0 0.0
  %3974 = vmatpush1.msra.mxu0 %v124
  %3975 = vmatprep.subr.mxu0 0.0
  %3976 = vmatpush1.msra.mxu0 %v125
  %3977 = vmatprep.subr.mxu0 0.0
  %3978 = vmatpush1.msra.mxu0 %v126
  %3979 = vmatprep.subr.mxu0 0.0
  %3980 = vmatpush1.msra.mxu0 %v127
  %3981 = vmatprep.subr.mxu0 0.0
  %3982 = vmatpush1.msra.mxu0 %v128
  %3983 = vmatprep.subr.mxu0 0.0
  %3984 = vmatpush1.msra.mxu0 %v129
  %3985 = vmatprep.subr.mxu0 0.0
  %3986 = vmatpush1.msra.mxu0 %v130
  %3987 = vmatprep.subr.mxu0 0.0
  %3988 = vmatpush1.msra.mxu0 %v131
  %3989 = vmatprep.subr.mxu0 0.0
  %3990 = vmatpush1.msra.mxu0 %v132
  %3991 = vmatprep.subr.mxu0 0.0
  %3992 = vmatpush1.msra.mxu0 %v133
  %3993 = vmatprep.subr.mxu0 0.0
  %3994 = vmatpush1.msra.mxu0 %v134
  %3995 = vmatprep.subr.mxu0 0.0
  %3996 = vmatpush1.msra.mxu0 %v135
  %3997 = vmatprep.subr.mxu0 0.0
  %3998 = vmatpush1.msra.mxu0 %v136
  %3999 = vmatprep.subr.mxu0 0.0
  %4000 = vmatpush1.msra.mxu0 %v137
  %4001 = vmatprep.subr.mxu0 0.0
  %4002 = vmatpush1.msra.mxu0 %v138
  %4003 = vmatprep.subr.mxu0 0.0
  %4004 = vmatpush1.msra.mxu0 %v139
  %4005 = vmatprep.subr.mxu0 0.0
  %4006 = vmatpush1.msra.mxu0 %v140
  %4007 = vmatprep.mubr.f32.mxu0 %v3728
  %4008 = vmatmul.mubr.f32.gmra.mrb[0].mxu0 %v3727
  %v4009 = vpop.f32.mrb[0].mxu0
  %v4010 = vadd.f32 %v3940, %v4009
  %v4011 = vpop.f32.mrb[0].mxu0
  %4012 = vdwg.mxu0
  %v4013 = vmul.f32 %v3870, 2.0
  %v4014 = vmul.f32 %v4010, 2.0
  %v4015 = vsub.f32 %v1994, %v4013
  %v4016 = vsub.f32 %v3718, %v4014
  %4017 = vset.pattern.permute.xlu0 0
  %4018 = vperm.xlu0 %4017, %v141
  %v4019 = vpop.permute.xlu0 %4018
  %v4020 = vrot.slane %v4019, 4
  %v4022 = vadd.f32 %v4015, %v4020
  %v4023 = vadd.f32 %v4016, %v4020
  %v4024 = vrsqrt.pop %v4022
  %v4025 = vrsqrt.pop %v4023
  %v4026 = vmul.f32 %v4022, %v4024
  %v4027 = vmul.f32 %v4023, %v4025
  %vm4028 = vcmask 516096
  %v4029 = vsel %vm4028, %v4026, 0.0
  %4030 = vadd.xlane.f32.xlu0 %v4029
  %v4031 = vpop.xlane.xlu0 %4030
  %v4032 = vsel %vm4028, %v4027, 0.0
  %4033 = vadd.xlane.f32.xlu0 %v4032
  %v4034 = vpop.xlane.xlu0 %4033
  %v4037 = vrot.slane %v4034, 7
  %vm4038 = vcmask 1041409
  %v4039 = vsel %vm4038, %v4037, %v4031
  %vm4041 = vcmask 1024
  %4042 = vst.msk [vmem:[%s3] sm:$0x3] %vm4041, %v4039
  %vm4043 = vcmask 523264
  %v4045 = vsel %vm4043, %v4024, 0
  %v4048 = vsel %vm4043, %v13, 0
  %v4051 = vsel %vm4043, %v14, 0
  %v4054 = vsel %vm4043, %v15, 0
  %v4057 = vsel %vm4043, %v16, 0
  %v4060 = vsel %vm4043, %v17, 0
  %v4063 = vsel %vm4043, %v18, 0
  %v4066 = vsel %vm4043, %v19, 0
  %v4069 = vsel %vm4043, %v20, 0
  %v4072 = vsel %vm4043, %v21, 0
  %v4075 = vsel %vm4043, %v22, 0
  %v4078 = vsel %vm4043, %v23, 0
  %v4081 = vsel %vm4043, %v24, 0
  %v4084 = vsel %vm4043, %v25, 0
  %v4087 = vsel %vm4043, %v26, 0
  %v4090 = vsel %vm4043, %v27, 0
  %v4093 = vsel %vm4043, %v28, 0
  %v4096 = vsel %vm4043, %v29, 0
  %v4099 = vsel %vm4043, %v30, 0
  %v4102 = vsel %vm4043, %v31, 0
  %v4105 = vsel %vm4043, %v32, 0
  %v4108 = vsel %vm4043, %v33, 0
  %v4111 = vsel %vm4043, %v34, 0
  %v4114 = vsel %vm4043, %v35, 0
  %v4117 = vsel %vm4043, %v36, 0
  %v4120 = vsel %vm4043, %v37, 0
  %v4123 = vsel %vm4043, %v38, 0
  %v4126 = vsel %vm4043, %v39, 0
  %v4129 = vsel %vm4043, %v40, 0
  %v4132 = vsel %vm4043, %v41, 0
  %v4135 = vsel %vm4043, %v42, 0
  %v4138 = vsel %vm4043, %v43, 0
  %v4141 = vsel %vm4043, %v44, 0
  %v4144 = vsel %vm4043, %v45, 0
  %v4147 = vsel %vm4043, %v46, 0
  %v4150 = vsel %vm4043, %v47, 0
  %v4153 = vsel %vm4043, %v48, 0
  %v4156 = vsel %vm4043, %v49, 0
  %v4159 = vsel %vm4043, %v50, 0
  %v4162 = vsel %vm4043, %v51, 0
  %v4165 = vsel %vm4043, %v52, 0
  %v4168 = vsel %vm4043, %v53, 0
  %v4171 = vsel %vm4043, %v54, 0
  %v4174 = vsel %vm4043, %v55, 0
  %v4177 = vsel %vm4043, %v56, 0
  %v4180 = vsel %vm4043, %v57, 0
  %v4183 = vsel %vm4043, %v58, 0
  %v4186 = vsel %vm4043, %v59, 0
  %v4189 = vsel %vm4043, %v60, 0
  %v4192 = vsel %vm4043, %v61, 0
  %v4195 = vsel %vm4043, %v62, 0
  %v4198 = vsel %vm4043, %v63, 0
  %v4201 = vsel %vm4043, %v64, 0
  %v4204 = vsel %vm4043, %v65, 0
  %v4207 = vsel %vm4043, %v66, 0
  %v4210 = vsel %vm4043, %v67, 0
  %v4213 = vsel %vm4043, %v68, 0
  %v4216 = vsel %vm4043, %v69, 0
  %v4219 = vsel %vm4043, %v70, 0
  %v4222 = vsel %vm4043, %v71, 0
  %v4225 = vsel %vm4043, %v72, 0
  %v4228 = vsel %vm4043, %v73, 0
  %v4231 = vsel %vm4043, %v74, 0
  %v4234 = vsel %vm4043, %v75, 0
  %v4237 = vsel %vm4043, %v76, 0
  %4239 = vmatprep.subr.mxu0 0.0
  %4240 = vmatpush1.xpose.msra.mxu0 %v4048
  %4241 = vmatprep.subr.mxu0 0.0
  %4242 = vmatpush1.xpose.msra.mxu0 %v4051
  %4243 = vmatprep.subr.mxu0 0.0
  %4244 = vmatpush1.xpose.msra.mxu0 %v4054
  %4245 = vmatprep.subr.mxu0 0.0
  %4246 = vmatpush1.xpose.msra.mxu0 %v4057
  %4247 = vmatprep.subr.mxu0 0.0
  %4248 = vmatpush1.xpose.msra.mxu0 %v4060
  %4249 = vmatprep.subr.mxu0 0.0
  %4250 = vmatpush1.xpose.msra.mxu0 %v4063
  %4251 = vmatprep.subr.mxu0 0.0
  %4252 = vmatpush1.xpose.msra.mxu0 %v4066
  %4253 = vmatprep.subr.mxu0 0.0
  %4254 = vmatpush1.xpose.msra.mxu0 %v4069
  %4255 = vmatprep.subr.mxu0 0.0
  %4256 = vmatpush1.xpose.msra.mxu0 %v4072
  %4257 = vmatprep.subr.mxu0 0.0
  %4258 = vmatpush1.xpose.msra.mxu0 %v4075
  %4259 = vmatprep.subr.mxu0 0.0
  %4260 = vmatpush1.xpose.msra.mxu0 %v4078
  %4261 = vmatprep.subr.mxu0 0.0
  %4262 = vmatpush1.xpose.msra.mxu0 %v4081
  %4263 = vmatprep.subr.mxu0 0.0
  %4264 = vmatpush1.xpose.msra.mxu0 %v4084
  %4265 = vmatprep.subr.mxu0 0.0
  %4266 = vmatpush1.xpose.msra.mxu0 %v4087
  %4267 = vmatprep.subr.mxu0 0.0
  %4268 = vmatpush1.xpose.msra.mxu0 %v4090
  %4269 = vmatprep.subr.mxu0 0.0
  %4270 = vmatpush1.xpose.msra.mxu0 %v4093
  %4271 = vmatprep.subr.mxu0 0.0
  %4272 = vmatpush1.xpose.msra.mxu0 %v4096
  %4273 = vmatprep.subr.mxu0 0.0
  %4274 = vmatpush1.xpose.msra.mxu0 %v4099
  %4275 = vmatprep.subr.mxu0 0.0
  %4276 = vmatpush1.xpose.msra.mxu0 %v4102
  %4277 = vmatprep.subr.mxu0 0.0
  %4278 = vmatpush1.xpose.msra.mxu0 %v4105
  %4279 = vmatprep.subr.mxu0 0.0
  %4280 = vmatpush1.xpose.msra.mxu0 %v4108
  %4281 = vmatprep.subr.mxu0 0.0
  %4282 = vmatpush1.xpose.msra.mxu0 %v4111
  %4283 = vmatprep.subr.mxu0 0.0
  %4284 = vmatpush1.xpose.msra.mxu0 %v4114
  %4285 = vmatprep.subr.mxu0 0.0
  %4286 = vmatpush1.xpose.msra.mxu0 %v4117
  %4287 = vmatprep.subr.mxu0 0.0
  %4288 = vmatpush1.xpose.msra.mxu0 %v4120
  %4289 = vmatprep.subr.mxu0 0.0
  %4290 = vmatpush1.xpose.msra.mxu0 %v4123
  %4291 = vmatprep.subr.mxu0 0.0
  %4292 = vmatpush1.xpose.msra.mxu0 %v4126
  %4293 = vmatprep.subr.mxu0 0.0
  %4294 = vmatpush1.xpose.msra.mxu0 %v4129
  %4295 = vmatprep.subr.mxu0 0.0
  %4296 = vmatpush1.xpose.msra.mxu0 %v4132
  %4297 = vmatprep.subr.mxu0 0.0
  %4298 = vmatpush1.xpose.msra.mxu0 %v4135
  %4299 = vmatprep.subr.mxu0 0.0
  %4300 = vmatpush1.xpose.msra.mxu0 %v4138
  %4301 = vmatprep.subr.mxu0 0.0
  %4302 = vmatpush1.xpose.msra.mxu0 %v4141
  %4303 = vmatprep.mubr.f32.mxu0 0.0
  %4304 = vmatmul.mubr.f32.gmra.mrb[0].mxu0 %v4045
  %v4305 = vpop.f32.mrb[0].mxu0
  %v4306 = vadd.f32 0.0, %v4305
  %v4307 = vpop.f32.mrb[0].mxu0
  %v4308 = vadd.f32 0.0, %v4307
  %4309 = vdwg.mxu0
  %4310 = vmatprep.subr.mxu0 0.0
  %4311 = vmatpush1.xpose.msra.mxu0 %v4144
  %4312 = vmatprep.subr.mxu0 0.0
  %4313 = vmatpush1.xpose.msra.mxu0 %v4147
  %4314 = vmatprep.subr.mxu0 0.0
  %4315 = vmatpush1.xpose.msra.mxu0 %v4150
  %4316 = vmatprep.subr.mxu0 0.0
  %4317 = vmatpush1.xpose.msra.mxu0 %v4153
  %4318 = vmatprep.subr.mxu0 0.0
  %4319 = vmatpush1.xpose.msra.mxu0 %v4156
  %4320 = vmatprep.subr.mxu0 0.0
  %4321 = vmatpush1.xpose.msra.mxu0 %v4159
  %4322 = vmatprep.subr.mxu0 0.0
  %4323 = vmatpush1.xpose.msra.mxu0 %v4162
  %4324 = vmatprep.subr.mxu0 0.0
  %4325 = vmatpush1.xpose.msra.mxu0 %v4165
  %4326 = vmatprep.subr.mxu0 0.0
  %4327 = vmatpush1.xpose.msra.mxu0 %v4168
  %4328 = vmatprep.subr.mxu0 0.0
  %4329 = vmatpush1.xpose.msra.mxu0 %v4171
  %4330 = vmatprep.subr.mxu0 0.0
  %4331 = vmatpush1.xpose.msra.mxu0 %v4174
  %4332 = vmatprep.subr.mxu0 0.0
  %4333 = vmatpush1.xpose.msra.mxu0 %v4177
  %4334 = vmatprep.subr.mxu0 0.0
  %4335 = vmatpush1.xpose.msra.mxu0 %v4180
  %4336 = vmatprep.subr.mxu0 0.0
  %4337 = vmatpush1.xpose.msra.mxu0 %v4183
  %4338 = vmatprep.subr.mxu0 0.0
  %4339 = vmatpush1.xpose.msra.mxu0 %v4186
  %4340 = vmatprep.subr.mxu0 0.0
  %4341 = vmatpush1.xpose.msra.mxu0 %v4189
  %4342 = vmatprep.subr.mxu0 0.0
  %4343 = vmatpush1.xpose.msra.mxu0 %v4192
  %4344 = vmatprep.subr.mxu0 0.0
  %4345 = vmatpush1.xpose.msra.mxu0 %v4195
  %4346 = vmatprep.subr.mxu0 0.0
  %4347 = vmatpush1.xpose.msra.mxu0 %v4198
  %4348 = vmatprep.subr.mxu0 0.0
  %4349 = vmatpush1.xpose.msra.mxu0 %v4201
  %4350 = vmatprep.subr.mxu0 0.0
  %4351 = vmatpush1.xpose.msra.mxu0 %v4204
  %4352 = vmatprep.subr.mxu0 0.0
  %4353 = vmatpush1.xpose.msra.mxu0 %v4207
  %4354 = vmatprep.subr.mxu0 0.0
  %4355 = vmatpush1.xpose.msra.mxu0 %v4210
  %4356 = vmatprep.subr.mxu0 0.0
  %4357 = vmatpush1.xpose.msra.mxu0 %v4213
  %4358 = vmatprep.subr.mxu0 0.0
  %4359 = vmatpush1.xpose.msra.mxu0 %v4216
  %4360 = vmatprep.subr.mxu0 0.0
  %4361 = vmatpush1.xpose.msra.mxu0 %v4219
  %4362 = vmatprep.subr.mxu0 0.0
  %4363 = vmatpush1.xpose.msra.mxu0 %v4222
  %4364 = vmatprep.subr.mxu0 0.0
  %4365 = vmatpush1.xpose.msra.mxu0 %v4225
  %4366 = vmatprep.subr.mxu0 0.0
  %4367 = vmatpush1.xpose.msra.mxu0 %v4228
  %4368 = vmatprep.subr.mxu0 0.0
  %4369 = vmatpush1.xpose.msra.mxu0 %v4231
  %4370 = vmatprep.subr.mxu0 0.0
  %4371 = vmatpush1.xpose.msra.mxu0 %v4234
  %4372 = vmatprep.subr.mxu0 0.0
  %4373 = vmatpush1.xpose.msra.mxu0 %v4237
  %4374 = vmatprep.mubr.f32.mxu0 0.0
  %4375 = vmatmul.mubr.f32.gmra.mrb[0].mxu0 %v4045
  %v4376 = vpop.f32.mrb[0].mxu0
  %v4377 = vadd.f32 0.0, %v4376
  %v4378 = vpop.f32.mrb[0].mxu0
  %v4379 = vadd.f32 0.0, %v4378
  %4380 = vdwg.mxu0
  %v4382 = vsel %vm4043, %v4025, 0
  %v4385 = vsel %vm4043, %v77, 0
  %v4388 = vsel %vm4043, %v78, 0
  %v4391 = vsel %vm4043, %v79, 0
  %v4394 = vsel %vm4043, %v80, 0
  %v4397 = vsel %vm4043, %v81, 0
  %v4400 = vsel %vm4043, %v82, 0
  %v4403 = vsel %vm4043, %v83, 0
  %v4406 = vsel %vm4043, %v84, 0
  %v4409 = vsel %vm4043, %v85, 0
  %v4412 = vsel %vm4043, %v86, 0
  %v4415 = vsel %vm4043, %v87, 0
  %v4418 = vsel %vm4043, %v88, 0
  %v4421 = vsel %vm4043, %v89, 0
  %v4424 = vsel %vm4043, %v90, 0
  %v4427 = vsel %vm4043, %v91, 0
  %v4430 = vsel %vm4043, %v92, 0
  %v4433 = vsel %vm4043, %v93, 0
  %v4436 = vsel %vm4043, %v94, 0
  %v4439 = vsel %vm4043, %v95, 0
  %v4442 = vsel %vm4043, %v96, 0
  %v4445 = vsel %vm4043, %v97, 0
  %v4448 = vsel %vm4043, %v98, 0
  %v4451 = vsel %vm4043, %v99, 0
  %v4454 = vsel %vm4043, %v100, 0
  %v4457 = vsel %vm4043, %v101, 0
  %v4460 = vsel %vm4043, %v102, 0
  %v4463 = vsel %vm4043, %v103, 0
  %v4466 = vsel %vm4043, %v104, 0
  %v4469 = vsel %vm4043, %v105, 0
  %v4472 = vsel %vm4043, %v106, 0
  %v4475 = vsel %vm4043, %v107, 0
  %v4478 = vsel %vm4043, %v108, 0
  %v4481 = vsel %vm4043, %v109, 0
  %v4484 = vsel %vm4043, %v110, 0
  %v4487 = vsel %vm4043, %v111, 0
  %v4490 = vsel %vm4043, %v112, 0
  %v4493 = vsel %vm4043, %v113, 0
  %v4496 = vsel %vm4043, %v114, 0
  %v4499 = vsel %vm4043, %v115, 0
  %v4502 = vsel %vm4043, %v116, 0
  %v4505 = vsel %vm4043, %v117, 0
  %v4508 = vsel %vm4043, %v118, 0
  %v4511 = vsel %vm4043, %v119, 0
  %v4514 = vsel %vm4043, %v120, 0
  %v4517 = vsel %vm4043, %v121, 0
  %v4520 = vsel %vm4043, %v122, 0
  %v4523 = vsel %vm4043, %v123, 0
  %v4526 = vsel %vm4043, %v124, 0
  %v4529 = vsel %vm4043, %v125, 0
  %v4532 = vsel %vm4043, %v126, 0
  %v4535 = vsel %vm4043, %v127, 0
  %v4538 = vsel %vm4043, %v128, 0
  %v4541 = vsel %vm4043, %v129, 0
  %v4544 = vsel %vm4043, %v130, 0
  %v4547 = vsel %vm4043, %v131, 0
  %v4550 = vsel %vm4043, %v132, 0
  %v4553 = vsel %vm4043, %v133, 0
  %v4556 = vsel %vm4043, %v134, 0
  %v4559 = vsel %vm4043, %v135, 0
  %v4562 = vsel %vm4043, %v136, 0
  %v4565 = vsel %vm4043, %v137, 0
  %v4568 = vsel %vm4043, %v138, 0
  %v4571 = vsel %vm4043, %v139, 0
  %v4574 = vsel %vm4043, %v140, 0
  %4576 = vmatprep.subr.mxu0 0.0
  %4577 = vmatpush1.xpose.msra.mxu0 %v4385
  %4578 = vmatprep.subr.mxu0 0.0
  %4579 = vmatpush1.xpose.msra.mxu0 %v4388
  %4580 = vmatprep.subr.mxu0 0.0
  %4581 = vmatpush1.xpose.msra.mxu0 %v4391
  %4582 = vmatprep.subr.mxu0 0.0
  %4583 = vmatpush1.xpose.msra.mxu0 %v4394
  %4584 = vmatprep.subr.mxu0 0.0
  %4585 = vmatpush1.xpose.msra.mxu0 %v4397
  %4586 = vmatprep.subr.mxu0 0.0
  %4587 = vmatpush1.xpose.msra.mxu0 %v4400
  %4588 = vmatprep.subr.mxu0 0.0
  %4589 = vmatpush1.xpose.msra.mxu0 %v4403
  %4590 = vmatprep.subr.mxu0 0.0
  %4591 = vmatpush1.xpose.msra.mxu0 %v4406
  %4592 = vmatprep.subr.mxu0 0.0
  %4593 = vmatpush1.xpose.msra.mxu0 %v4409
  %4594 = vmatprep.subr.mxu0 0.0
  %4595 = vmatpush1.xpose.msra.mxu0 %v4412
  %4596 = vmatprep.subr.mxu0 0.0
  %4597 = vmatpush1.xpose.msra.mxu0 %v4415
  %4598 = vmatprep.subr.mxu0 0.0
  %4599 = vmatpush1.xpose.msra.mxu0 %v4418
  %4600 = vmatprep.subr.mxu0 0.0
  %4601 = vmatpush1.xpose.msra.mxu0 %v4421
  %4602 = vmatprep.subr.mxu0 0.0
  %4603 = vmatpush1.xpose.msra.mxu0 %v4424
  %4604 = vmatprep.subr.mxu0 0.0
  %4605 = vmatpush1.xpose.msra.mxu0 %v4427
  %4606 = vmatprep.subr.mxu0 0.0
  %4607 = vmatpush1.xpose.msra.mxu0 %v4430
  %4608 = vmatprep.subr.mxu0 0.0
  %4609 = vmatpush1.xpose.msra.mxu0 %v4433
  %4610 = vmatprep.subr.mxu0 0.0
  %4611 = vmatpush1.xpose.msra.mxu0 %v4436
  %4612 = vmatprep.subr.mxu0 0.0
  %4613 = vmatpush1.xpose.msra.mxu0 %v4439
  %4614 = vmatprep.subr.mxu0 0.0
  %4615 = vmatpush1.xpose.msra.mxu0 %v4442
  %4616 = vmatprep.subr.mxu0 0.0
  %4617 = vmatpush1.xpose.msra.mxu0 %v4445
  %4618 = vmatprep.subr.mxu0 0.0
  %4619 = vmatpush1.xpose.msra.mxu0 %v4448
  %4620 = vmatprep.subr.mxu0 0.0
  %4621 = vmatpush1.xpose.msra.mxu0 %v4451
  %4622 = vmatprep.subr.mxu0 0.0
  %4623 = vmatpush1.xpose.msra.mxu0 %v4454
  %4624 = vmatprep.subr.mxu0 0.0
  %4625 = vmatpush1.xpose.msra.mxu0 %v4457
  %4626 = vmatprep.subr.mxu0 0.0
  %4627 = vmatpush1.xpose.msra.mxu0 %v4460
  %4628 = vmatprep.subr.mxu0 0.0
  %4629 = vmatpush1.xpose.msra.mxu0 %v4463
  %4630 = vmatprep.subr.mxu0 0.0
  %4631 = vmatpush1.xpose.msra.mxu0 %v4466
  %4632 = vmatprep.subr.mxu0 0.0
  %4633 = vmatpush1.xpose.msra.mxu0 %v4469
  %4634 = vmatprep.subr.mxu0 0.0
  %4635 = vmatpush1.xpose.msra.mxu0 %v4472
  %4636 = vmatprep.subr.mxu0 0.0
  %4637 = vmatpush1.xpose.msra.mxu0 %v4475
  %4638 = vmatprep.subr.mxu0 0.0
  %4639 = vmatpush1.xpose.msra.mxu0 %v4478
  %4640 = vmatprep.mubr.f32.mxu0 0.0
  %4641 = vmatmul.mubr.f32.gmra.mrb[0].mxu0 %v4382
  %v4642 = vpop.f32.mrb[0].mxu0
  %v4643 = vadd.f32 0.0, %v4642
  %v4644 = vpop.f32.mrb[0].mxu0
  %v4645 = vadd.f32 0.0, %v4644
  %4646 = vdwg.mxu0
  %4647 = vmatprep.subr.mxu0 0.0
  %4648 = vmatpush1.xpose.msra.mxu0 %v4481
  %4649 = vmatprep.subr.mxu0 0.0
  %4650 = vmatpush1.xpose.msra.mxu0 %v4484
  %4651 = vmatprep.subr.mxu0 0.0
  %4652 = vmatpush1.xpose.msra.mxu0 %v4487
  %4653 = vmatprep.subr.mxu0 0.0
  %4654 = vmatpush1.xpose.msra.mxu0 %v4490
  %4655 = vmatprep.subr.mxu0 0.0
  %4656 = vmatpush1.xpose.msra.mxu0 %v4493
  %4657 = vmatprep.subr.mxu0 0.0
  %4658 = vmatpush1.xpose.msra.mxu0 %v4496
  %4659 = vmatprep.subr.mxu0 0.0
  %4660 = vmatpush1.xpose.msra.mxu0 %v4499
  %4661 = vmatprep.subr.mxu0 0.0
  %4662 = vmatpush1.xpose.msra.mxu0 %v4502
  %4663 = vmatprep.subr.mxu0 0.0
  %4664 = vmatpush1.xpose.msra.mxu0 %v4505
  %4665 = vmatprep.subr.mxu0 0.0
  %4666 = vmatpush1.xpose.msra.mxu0 %v4508
  %4667 = vmatprep.subr.mxu0 0.0
  %4668 = vmatpush1.xpose.msra.mxu0 %v4511
  %4669 = vmatprep.subr.mxu0 0.0
  %4670 = vmatpush1.xpose.msra.mxu0 %v4514
  %4671 = vmatprep.subr.mxu0 0.0
  %4672 = vmatpush1.xpose.msra.mxu0 %v4517
  %4673 = vmatprep.subr.mxu0 0.0
  %4674 = vmatpush1.xpose.msra.mxu0 %v4520
  %4675 = vmatprep.subr.mxu0 0.0
  %4676 = vmatpush1.xpose.msra.mxu0 %v4523
  %4677 = vmatprep.subr.mxu0 0.0
  %4678 = vmatpush1.xpose.msra.mxu0 %v4526
  %4679 = vmatprep.subr.mxu0 0.0
  %4680 = vmatpush1.xpose.msra.mxu0 %v4529
  %4681 = vmatprep.subr.mxu0 0.0
  %4682 = vmatpush1.xpose.msra.mxu0 %v4532
  %4683 = vmatprep.subr.mxu0 0.0
  %4684 = vmatpush1.xpose.msra.mxu0 %v4535
  %4685 = vmatprep.subr.mxu0 0.0
  %4686 = vmatpush1.xpose.msra.mxu0 %v4538
  %4687 = vmatprep.subr.mxu0 0.0
  %4688 = vmatpush1.xpose.msra.mxu0 %v4541
  %4689 = vmatprep.subr.mxu0 0.0
  %4690 = vmatpush1.xpose.msra.mxu0 %v4544
  %4691 = vmatprep.subr.mxu0 0.0
  %4692 = vmatpush1.xpose.msra.mxu0 %v4547
  %4693 = vmatprep.subr.mxu0 0.0
  %4694 = vmatpush1.xpose.msra.mxu0 %v4550
  %4695 = vmatprep.subr.mxu0 0.0
  %4696 = vmatpush1.xpose.msra.mxu0 %v4553
  %4697 = vmatprep.subr.mxu0 0.0
  %4698 = vmatpush1.xpose.msra.mxu0 %v4556
  %4699 = vmatprep.subr.mxu0 0.0
  %4700 = vmatpush1.xpose.msra.mxu0 %v4559
  %4701 = vmatprep.subr.mxu0 0.0
  %4702 = vmatpush1.xpose.msra.mxu0 %v4562
  %4703 = vmatprep.subr.mxu0 0.0
  %4704 = vmatpush1.xpose.msra.mxu0 %v4565
  %4705 = vmatprep.subr.mxu0 0.0
  %4706 = vmatpush1.xpose.msra.mxu0 %v4568
  %4707 = vmatprep.subr.mxu0 0.0
  %4708 = vmatpush1.xpose.msra.mxu0 %v4571
  %4709 = vmatprep.subr.mxu0 0.0
  %4710 = vmatpush1.xpose.msra.mxu0 %v4574
  %4711 = vmatprep.mubr.f32.mxu0 0.0
  %4712 = vmatmul.mubr.f32.gmra.mrb[0].mxu0 %v4382
  %v4713 = vpop.f32.mrb[0].mxu0
  %v4714 = vadd.f32 0.0, %v4713
  %v4715 = vpop.f32.mrb[0].mxu0
  %v4716 = vadd.f32 0.0, %v4715
  %4717 = vdwg.mxu0
  %v4718 = vsel %vm4028, %v4024, 0.0
  %4719 = vadd.xlane.f32.xlu0 %v4718
  %v4720 = vpop.xlane.xlu0 %4719
  %v4721 = vsel %vm4028, %v4025, 0.0
  %4722 = vadd.xlane.f32.xlu0 %v4721
  %v4723 = vpop.xlane.xlu0 %4722
  %v4726 = vrot.slane %v4720, 5
  %v4727 = vrot.slane %v4723, 5
  %v4730 = vmul.f32 %v141, %v4726
  %v4731 = vmul.f32 %v142, %v4726
  %v4732 = vmul.f32 %v143, %v4726
  %v4733 = vmul.f32 %v144, %v4726
  %v4734 = vmul.f32 %v141, %v4727
  %v4735 = vmul.f32 %v142, %v4727
  %v4736 = vmul.f32 %v143, %v4727
  %v4737 = vmul.f32 %v144, %v4727
  %v4746 = vrot.slane %v4730, 3
  %v4747 = vrot.slane %v4731, 3
  %v4748 = vrot.slane %v4732, 3
  %v4749 = vrot.slane %v4733, 3
  %v4750 = vrot.slane %v4734, 3
  %v4751 = vrot.slane %v4735, 3
  %v4752 = vrot.slane %v4736, 3
  %v4753 = vrot.slane %v4737, 3
  %v4762 = vsub.f32 %v4306, %v4746
  %v4763 = vsub.f32 %v4308, %v4747
  %v4764 = vsub.f32 %v4377, %v4748
  %v4765 = vsub.f32 %v4379, %v4749
  %v4766 = vsub.f32 %v4643, %v4750
  %v4767 = vsub.f32 %v4645, %v4751
  %v4768 = vsub.f32 %v4714, %v4752
  %v4769 = vsub.f32 %v4716, %v4753
  %v4778 = vrot.slane %v4762, 6
  %v4779 = vrot.slane %v4763, 6
  %v4780 = vrot.slane %v4764, 6
  %v4781 = vrot.slane %v4765, 6
  %v4782 = vrot.slane %v4766, 6
  %v4783 = vrot.slane %v4767, 6
  %v4784 = vrot.slane %v4768, 6
  %v4785 = vrot.slane %v4769, 6
  %v4794 = vmul.f32 %v141, %v4778
  %v4795 = vmul.f32 %v142, %v4779
  %v4796 = vmul.f32 %v143, %v4780
  %v4797 = vmul.f32 %v144, %v4781
  %v4798 = vmul.f32 %v141, %v4782
  %v4799 = vmul.f32 %v142, %v4783
  %v4800 = vmul.f32 %v143, %v4784
  %v4801 = vmul.f32 %v144, %v4785
  %v4810 = vcombine.low %v4794, %v4795
  %v4811 = vcombine.low %v4796, %v4797
  %v4813 = vunpack.c.l.s4 1983009808
  %v4814 = vunpack.c.0.s8 %v4813
  %v4815 = vlaneseq
  %v4816 = vshrl.u32 %v4815, 7
  %v4817 = vsub.s32 %v4814, %v4816
  %v4818 = vrot.slane %v4810, %v4817
  %v4820 = vunpack.c.l.s4 1983009808
  %v4821 = vunpack.c.0.s8 %v4820
  %v4822 = vlaneseq
  %v4823 = vshrl.u32 %v4822, 7
  %v4824 = vsub.s32 %v4821, %v4823
  %v4825 = vrot.slane %v4811, %v4824
  %v4826 = vcombine.high %v4818, %v4825
  %v4827 = vcombine.low %v4798, %v4799
  %v4828 = vcombine.low %v4800, %v4801
  %v4830 = vunpack.c.l.s4 1983009808
  %v4831 = vunpack.c.0.s8 %v4830
  %v4832 = vlaneseq
  %v4833 = vshrl.u32 %v4832, 7
  %v4834 = vsub.s32 %v4831, %v4833
  %v4835 = vrot.slane %v4827, %v4834
  %v4837 = vunpack.c.l.s4 1983009808
  %v4838 = vunpack.c.0.s8 %v4837
  %v4839 = vlaneseq
  %v4840 = vshrl.u32 %v4839, 7
  %v4841 = vsub.s32 %v4838, %v4840
  %v4842 = vrot.slane %v4828, %v4841
  %v4843 = vcombine.high %v4835, %v4842
  %vm4844 = vcmask 1044484
  %v4845 = vsel %vm4844, %v4826, %v4826
  %vm4846 = vcmask 1046534
  %v4847 = vsel %vm4846, %v4826, %v4845
  %v4848 = vrot.slane %v4843, 7
  %v4849 = vsel %vm4038, %v4848, %v4847
  %vm4850 = vcmask 1043459
  %v4851 = vsel %vm4850, %v4848, %v4849
  %vm4852 = vcmask 1045509
  %v4853 = vsel %vm4852, %v4848, %v4851
  %vm4854 = vcmask 1047559
  %v4855 = vsel %vm4854, %v4848, %v4853
  %4857 = vst [vmem:[%s2] sm:$0xff] %v4855
  // Predicated region
  $region10: #{gnap_forward.1} parent=0 // pred_check
    _
  $region11: #{gnap_forward.1} parent=0 // pred_check_branch
    %4859 = sbr.rel (0) target = $region13
  $region12: #{gnap_forward.1} parent=0 // pred_region
    _
  $region13: #{gnap_forward.1} parent=0 // pred_fallthru
    _
  // Predicated region
  $region14: #{gnap_forward.1} parent=0 // pred_check
    _
  $region15: #{gnap_forward.1} parent=0 // pred_check_branch
    %4861 = sbr.rel (0) target = $region17
  $region16: #{gnap_forward.1} parent=0 // pred_region
    _
  $region17: #{gnap_forward.1} parent=0 // pred_fallthru
    _
  // Predicated region
  $region18: #{gnap_forward.1} parent=0 // pred_check
    _
  $region19: #{gnap_forward.1} parent=0 // pred_check_branch
    %4863 = sbr.rel (0) target = $region21
  $region20: #{gnap_forward.1} parent=0 // pred_region
    _
  $region21: #{gnap_forward.1} parent=0 // pred_fallthru
    _
  // Predicated region
  $region22: #{gnap_forward.1} parent=0 // pred_check
    _
  $region23: #{gnap_forward.1} parent=0 // pred_check_branch
    %4865 = sbr.rel (0) target = $region25
  $region24: #{gnap_forward.1} parent=0 // pred_region
    _
  $region25: #{gnap_forward.1} parent=0 // pred_fallthru
    _

</llo_original>
